<compile_context>
chip_gen: v6e
topology: v6e:2x2x1
jax: 0.10.0
libtpu: 0.0.40
codegen_flags: <defaults>
</compile_context>

<pallas_src>
import functools

import jax
import jax.numpy as jnp
from jax import lax
from jax.experimental import pallas as pl
from jax.experimental.pallas import tpu as pltpu

_VMEM_LIMIT = 48 * 1024 * 1024   # safe on v5e/v6e (128 MiB physical) and v7x (64 MiB physical)
_BN_EPS = 1e-5


def _round_up(x, m):
    return ((x + m - 1) // m) * m


# ---------- pass 1: Conv1d (K tap-major MXU dots) + bias + ReLU + BN partial stats ----------


def _conv_relu_stats_kernel(x_ref, w_ref, b_ref, y_ref, stats_ref, *, t_out):
    """Grid: (B, n_cout_tiles, n_time_tiles) — every axis "parallel" (no carried state).

    x_ref     : (1, K, TT, Cinp)  bf16  stride/dilation pre-applied, tap-major input tile
    w_ref     : (K, Cinp, COT)    bf16  (BN-folded) conv weight slab for this Cout tile
    b_ref     : (1, COT)          f32   (BN-folded) conv bias
    y_ref     : (1, TT, COT)      bf16  post-ReLU, pre-BN activation tile
    stats_ref : (1, 1, 8, COT)    f32   row 0: sum over valid rows, row 1: sum of squares
    """
    t = pl.program_id(2)
    k_taps = w_ref.shape[0]
    tt = y_ref.shape[1]

    # First tap initializes the accumulator (no zeros + add).
    acc = jnp.dot(x_ref[0, 0], w_ref[0], preferred_element_type=jnp.float32)
    for k in range(1, k_taps):                                   # K <= 5, unrolled
        acc = acc + jnp.dot(x_ref[0, k], w_ref[k], preferred_element_type=jnp.float32)

    y = jnp.maximum(acc + b_ref[...], 0.0)                       # (TT, COT) f32
    y_ref[...] = y[None].astype(y_ref.dtype)

    # BatchNorm partial sums on the MXU.  Tile rows beyond the true T_out are masked out.
    # The two (8, TT) x (TT, COT) dots land sum in row 0 and sum-of-squares in row 1, so a
    # single unmasked (8, COT) store writes both (rows 2..7 are zero).
    row = lax.broadcasted_iota(jnp.int32, (8, tt), 0)
    col = lax.broadcasted_iota(jnp.int32, (8, tt), 1)
    valid = (col + t * tt) < t_out
    m_sum = jnp.where(valid & (row == 0), 1.0, 0.0).astype(jnp.float32)
    m_sq = jnp.where(valid & (row == 1), 1.0, 0.0).astype(jnp.float32)
    stats = (jnp.dot(m_sum, y, preferred_element_type=jnp.float32)
             + jnp.dot(m_sq, y * y, preferred_element_type=jnp.float32))   # (8, COT)
    stats_ref[...] = stats[None, None]


def _conv_relu_stats(x_taps, w_kcio, bias_p, *, t_out, tt, cot):
    b, k, t_pad, cinp = x_taps.shape
    coutp = w_kcio.shape[2]
    n_t = t_pad // tt
    n_co = coutp // cot

    flops = 2 * b * t_pad * k * cinp * coutp + 4 * b * t_pad * 8 * coutp
    bytes_accessed = (b * k * t_pad * cinp * 2 * n_co + k * cinp * coutp * 2 + coutp * 4
                      + b * t_pad * coutp * 2 + b * n_t * 8 * coutp * 4)

    return pl.pallas_call(
        functools.partial(_conv_relu_stats_kernel, t_out=t_out),
        out_shape=(
            jax.ShapeDtypeStruct((b, t_pad, coutp), jnp.bfloat16),       # pre-BN activations
            jax.ShapeDtypeStruct((b, n_t, 8, coutp), jnp.float32),        # per-(b,t) partials
        ),
        grid_spec=pltpu.PrefetchScalarGridSpec(
            num_scalar_prefetch=0,
            grid=(b, n_co, n_t),
            in_specs=[
                pl.BlockSpec((1, k, tt, cinp), lambda bi, co, ti: (bi, 0, ti, 0)),
                pl.BlockSpec((k, cinp, cot), lambda bi, co, ti: (0, 0, co)),
                pl.BlockSpec((1, cot), lambda bi, co, ti: (0, co)),
            ],
            out_specs=[
                pl.BlockSpec((1, tt, cot), lambda bi, co, ti: (bi, ti, co)),
                pl.BlockSpec((1, 1, 8, cot), lambda bi, co, ti: (bi, ti, 0, co)),
            ],
        ),
        compiler_params=pltpu.CompilerParams(
            dimension_semantics=("parallel", "parallel", "parallel"),
            vmem_limit_bytes=_VMEM_LIMIT,
        ),
        cost_estimate=pl.CostEstimate(flops=flops, transcendentals=0,
                                      bytes_accessed=bytes_accessed),
    )(x_taps, w_kcio, bias_p)


# ---------- pass 2: folded BatchNorm affine (bf16 in / bf16 out), final frame layer only ----


def _bn_affine_kernel(y_ref, scale_ref, shift_ref, o_ref):
    # y_ref/o_ref: (1, TT, Cp) bf16; scale/shift: (1, Cp) f32 — one folded FMA.
    o_ref[...] = (y_ref[...].astype(jnp.float32) * scale_ref[...]
                  + shift_ref[...]).astype(o_ref.dtype)


def _bn_affine(y, scale, shift, tt):
    b, t_pad, cp = y.shape
    n_t = t_pad // tt
    return pl.pallas_call(
        _bn_affine_kernel,
        out_shape=jax.ShapeDtypeStruct((b, t_pad, cp), jnp.bfloat16),
        grid_spec=pltpu.PrefetchScalarGridSpec(
            num_scalar_prefetch=0,
            grid=(b, n_t),
            in_specs=[
                pl.BlockSpec((1, tt, cp), lambda bi, ti: (bi, ti, 0)),
                pl.BlockSpec((1, cp), lambda bi, ti: (0, 0)),
                pl.BlockSpec((1, cp), lambda bi, ti: (0, 0)),
            ],
            out_specs=pl.BlockSpec((1, tt, cp), lambda bi, ti: (bi, ti, 0)),
        ),
        compiler_params=pltpu.CompilerParams(
            dimension_semantics=("parallel", "parallel"),
            vmem_limit_bytes=_VMEM_LIMIT,
        ),
        cost_estimate=pl.CostEstimate(flops=2 * b * t_pad * cp, transcendentals=0,
                                      bytes_accessed=2 * b * t_pad * cp * 2 + 2 * cp * 4),
    )(y, scale.reshape(1, cp), shift.reshape(1, cp))


# ---------- wrappers: one SimmableTimeDelayLayer, and the frame1..frame5 stack ----------


def _prep_taps(x_p, k, stride, dilation, t_pad):
    """(B, Lp, Cinp) -> (B, K, T_pad, Cinp) with stride/dilation pre-applied so every
    in-kernel load is a whole, sublane-aligned streaming block (no in-kernel rotates and
    no strided sublane slices)."""
    b, lp, cinp = x_p.shape
    l_need = (t_pad - 1) * stride + (k - 1) * dilation + 1
    if lp < l_need:
        x_p = jnp.pad(x_p, ((0, 0), (0, l_need - lp), (0, 0)))
    taps = [lax.slice(x_p, (0, kk * dilation, 0),
                      (b, kk * dilation + (t_pad - 1) * stride + 1, cinp),
                      (1, stride, 1))
            for kk in range(k)]
    return jnp.stack(taps, axis=1)


def _tdnn_conv_relu_layer(x_p, l_true, cin_true, params, scale_in, shift_in, *,
                          context_size, stride, dilation, eps=_BN_EPS):
    """One SimmableTimeDelayLayer with the *previous* layer's BN affine folded into this
    layer's conv.  Returns the channel-padded pre-BN (post-ReLU) bf16 activation plus this
    layer's BN scale/shift (to be folded into the next layer, or applied explicitly)."""
    weight, bias = params["weight"], params["bias"]
    gamma, beta = params["gamma"], params["beta"]
    b, _, cinp = x_p.shape
    cout, cin_w, k = weight.shape
    assert cin_w == cin_true and k == context_size

    coutp = _round_up(cout, 128)
    t_out = (l_true - dilation * (k - 1) - 1) // stride + 1
    assert t_out >= 1
    cot = 256 if coutp % 256 == 0 else 128                  # Cout tile (spill fix)
    tt = min(512 if cot == 128 else 256, _round_up(t_out, 16))
    t_pad = _round_up(t_out, tt)

    # Fold previous BN: W'[o,i,k] = W[o,i,k]*scale_in[i]; b'[o] = b[o] + sum W[o,i,k]*shift_in[i]
    w_pad = jnp.pad(weight, ((0, coutp - cout), (0, cinp - cin_true), (0, 0)))
    w_fold = w_pad * scale_in[None, :, None]
    b_fold = jnp.pad(bias, (0, coutp - cout)) + jnp.einsum('oik,i->o', w_pad, shift_in)
    w_kcio = jnp.transpose(w_fold, (2, 1, 0)).astype(jnp.bfloat16)     # (K, Cinp, Coutp)
    bias_p = b_fold.astype(jnp.float32).reshape(1, coutp)

    x_taps = _prep_taps(x_p, k, stride, dilation, t_pad)               # (B, K, T_pad, Cinp)
    y, stats = _conv_relu_stats(x_taps, w_kcio, bias_p, t_out=t_out, tt=tt, cot=cot)

    # This layer's BatchNorm1d (training-mode, biased variance) as a per-channel affine.
    # TODO(synk): E[x^2]-E[x]^2 in f32 can lose precision for very long utterances; a
    #             two-pass / Welford formulation would be more robust.
    n = float(b * t_out)
    psum = jnp.sum(stats[:, :, 0, :], axis=(0, 1))
    psumsq = jnp.sum(stats[:, :, 1, :], axis=(0, 1))
    mean = psum / n
    var = jnp.maximum(psumsq / n - mean * mean, 0.0)
    inv = lax.rsqrt(var + eps)
    gamma_p = jnp.pad(gamma, (0, coutp - cout)).astype(jnp.float32)
    beta_p = jnp.pad(beta, (0, coutp - cout)).astype(jnp.float32)
    scale = gamma_p * inv
    shift = beta_p - mean * scale
    return y, t_out, cout, scale, shift, tt


def _tdnn_frames_forward(x, frame_params, frame_cfg, eps=_BN_EPS):
    """frame1..frame5 of SlimmableTDNN (width_mult = max).  Activations stay channel-padded
    bf16 between layers, BN affines are folded forward, only the last layer runs the explicit
    Pallas affine pass and the single slice/cast back to (B, T, Cout) f32."""
    b, l, c0 = x.shape
    c0p = _round_up(c0, 128)
    h = jnp.pad(x, ((0, 0), (0, 0), (0, c0p - c0))).astype(jnp.bfloat16)
    l_true, cin_true = l, c0
    scale = jnp.ones((c0p,), jnp.float32)
    shift = jnp.zeros((c0p,), jnp.float32)
    tt = 16
    for p, (k, s, d) in zip(frame_params, frame_cfg):
        h, l_true, cin_true, scale, shift, tt = _tdnn_conv_relu_layer(
            h, l_true, cin_true, p, scale, shift,
            context_size=k, stride=s, dilation=d, eps=eps)
    h = _bn_affine(h, scale, shift, tt)          # explicit affine only for the last layer
    return h[:, :l_true, :cin_true].astype(jnp.float32)


# ---------- segment heads / classifier (tiny GEMMs, left to XLA per review) ----------


def _linear_relu_bn(h, p, eps=_BN_EPS):
    # SlimmableLinear + ReLU + BatchNorm1d on (B, F); Pallas launch overhead dominates here.
    z = jnp.maximum(h @ p["weight"].T + p["bias"], 0.0)
    mean = jnp.mean(z, axis=0)
    var = jnp.maximum(jnp.mean(z * z, axis=0) - mean * mean, 0.0)
    return (z - mean) * lax.rsqrt(var + eps) * p["gamma"] + p["beta"]


def slimmable_tdnn_forward(x, params, *, frame_cfg):
    h = _tdnn_frames_forward(x, params["frames"], frame_cfg)
    # TODO(synk): StatisticPooling / get_activation implementations are not in the provided
    #             spec; standard mean||std-over-time pooling is used as the STAP stand-in
    #             (dropout_p=0.0 -> dropout is the identity).
    mu = jnp.mean(h, axis=1)
    sd = jnp.sqrt(jnp.maximum(jnp.var(h, axis=1), 0.0) + 1e-8)
    pooled = jnp.concatenate([mu, sd], axis=-1)
    emb_a = _linear_relu_bn(pooled, params["seg6"])              # segment6
    emb_b = _linear_relu_bn(emb_a, params["seg7"])               # segment7
    logits = emb_b @ params["cls_w"].T + params["cls_b"]         # classifier
    # Module returns (logits, embedding_b); h is returned here only for self-checks.
    return logits, emb_b, h


# ---------- parameter init ----------


def _init_conv_layer(key, cin, cout, k):
    kw, kb, kg, kbe = jax.random.split(key, 4)
    bound = 1.0 / float(cin * k) ** 0.5
    return dict(
        weight=jax.random.uniform(kw, (cout, cin, k), minval=-bound, maxval=bound,
                                  dtype=jnp.float32),
        bias=jax.random.uniform(kb, (cout,), minval=-bound, maxval=bound, dtype=jnp.float32),
        gamma=1.0 + 0.05 * jax.random.normal(kg, (cout,), dtype=jnp.float32),
        beta=0.05 * jax.random.normal(kbe, (cout,), dtype=jnp.float32),
    )


def _init_linear_layer(key, cin, cout):
    kw, kb, kg, kbe = jax.random.split(key, 4)
    bound = 1.0 / float(cin) ** 0.5
    return dict(
        weight=jax.random.uniform(kw, (cout, cin), minval=-bound, maxval=bound,
                                  dtype=jnp.float32),
        bias=jax.random.uniform(kb, (cout,), minval=-bound, maxval=bound, dtype=jnp.float32),
        gamma=1.0 + 0.05 * jax.random.normal(kg, (cout,), dtype=jnp.float32),
        beta=0.05 * jax.random.normal(kbe, (cout,), dtype=jnp.float32),
    )


if __name__ == "__main__":
    # Small shapes consistent with SlimmableTDNN at width_mult = 1.0:
    # input_dim=16, channels=[32,32,32,32,64] (stand-in for [512,512,512,512,1536]),
    # frame (K, stride, dilation) = (5,1,1),(3,1,2),(3,1,3),(1,1,1),(1,1,1), STAP encoder,
    # segment hidden = 32 (stand-in for 512), embedding_size = 16, num_classes = 10.
    B, L = 2, 32
    input_dim = 16
    channels = [32, 32, 32, 32, 64]
    frame_cfg = ((5, 1, 1), (3, 1, 2), (3, 1, 3), (1, 1, 1), (1, 1, 1))
    seg_hidden = 32
    embedding_size = 16
    num_classes = 10

    key = jax.random.PRNGKey(0)
    keys = jax.random.split(key, 12)
    x = jax.random.normal(keys[0], (B, L, input_dim), dtype=jnp.float32)

    cins = [input_dim] + channels[:-1]
    params = dict(
        frames=[_init_conv_layer(keys[1 + i], cin, cout, k)
                for i, ((k, s, d), cin, cout) in enumerate(zip(frame_cfg, cins, channels))],
        seg6=_init_linear_layer(keys[6], 2 * channels[-1], seg_hidden),
        seg7=_init_linear_layer(keys[7], seg_hidden, embedding_size),
    )
    kcw, kcb = jax.random.split(keys[8])
    cbound = 1.0 / float(embedding_size) ** 0.5
    params["cls_w"] = jax.random.uniform(kcw, (num_classes, embedding_size),
                                         minval=-cbound, maxval=cbound, dtype=jnp.float32)
    params["cls_b"] = jax.random.uniform(kcb, (num_classes,),
                                         minval=-cbound, maxval=cbound, dtype=jnp.float32)

    fwd = jax.jit(functools.partial(slimmable_tdnn_forward, frame_cfg=frame_cfg))
    logits, emb_b, h = jax.block_until_ready(fwd(x, params))

    # Shape / sanity checks.
    T = L
    for (k, s, d) in frame_cfg:
        T = (T - d * (k - 1) - 1) // s + 1
    assert h.shape == (B, T, channels[-1]), h.shape
    assert emb_b.shape == (B, embedding_size), emb_b.shape
    assert logits.shape == (B, num_classes), logits.shape
    assert bool(jnp.isfinite(h).all()) and bool(jnp.isfinite(emb_b).all())
    assert bool(jnp.isfinite(logits).all())

    # BatchNorm self-check on the final frame layer: training-mode BN over (B, T) implies the
    # returned activations have per-channel mean ~= beta and (biased) std ~= |gamma|.
    g5 = params["frames"][-1]["gamma"]
    b5 = params["frames"][-1]["beta"]
    ch_mean = jnp.mean(h, axis=(0, 1))
    ch_std = jnp.std(h, axis=(0, 1))
    assert bool(jnp.max(jnp.abs(ch_mean - b5)) < 5e-2)
    assert bool(jnp.max(jnp.abs(ch_std - jnp.abs(g5))) < 5e-2)

    print("KERNEL_OK")
</pallas_src>

<mosaic_0001>
module attributes {stable_mosaic.version = 11 : i64} {
  func.func @_conv_relu_stats_kernel(%arg0: i32, %arg1: i32, %arg2: i32, %arg3: memref<1x5x32x128xbf16, #tpu.memory_space<vmem>>, %arg4: memref<5x128x128xbf16, #tpu.memory_space<vmem>>, %arg5: memref<1x128xf32, #tpu.memory_space<vmem>>, %arg6: memref<1x32x128xbf16, #tpu.memory_space<vmem>>, %arg7: memref<1x1x8x128xf32, #tpu.memory_space<vmem>>) attributes {dimension_semantics = [#tpu.dimension_semantics<parallel>, #tpu.dimension_semantics<parallel>, #tpu.dimension_semantics<parallel>], iteration_bounds = array<i64: 2, 1, 1>, scalar_prefetch = 0 : i64, scratch_operands = 0 : i64, tpu.core_type = #tpu.core_type<tc>, window_params = [{transform_indices = @transform_0, window_bounds = array<i64: 1, 5, 32, 128>}, {transform_indices = @transform_1, window_bounds = array<i64: 5, 128, 128>}, {transform_indices = @transform_2, window_bounds = array<i64: 1, 128>}, {transform_indices = @transform_3, window_bounds = array<i64: 1, 32, 128>}, {transform_indices = @transform_4, window_bounds = array<i64: 1, 1, 8, 128>}]} {
    %c0 = arith.constant 0 : index
    %c0_0 = arith.constant 0 : index
    %c0_1 = arith.constant 0 : index
    %c0_2 = arith.constant 0 : index
    %0 = vector.load %arg3[%c0, %c0_0, %c0_1, %c0_2] : memref<1x5x32x128xbf16, #tpu.memory_space<vmem>>, vector<1x1x32x128xbf16>
    %1 = vector.shape_cast %0 : vector<1x1x32x128xbf16> to vector<32x128xbf16>
    %c0_3 = arith.constant 0 : index
    %c0_4 = arith.constant 0 : index
    %c0_5 = arith.constant 0 : index
    %2 = vector.load %arg4[%c0_3, %c0_4, %c0_5] : memref<5x128x128xbf16, #tpu.memory_space<vmem>>, vector<1x128x128xbf16>
    %3 = vector.shape_cast %2 : vector<1x128x128xbf16> to vector<128x128xbf16>
    %cst = arith.constant dense<0.000000e+00> : vector<32x128xf32>
    %4 = tpu.matmul %1, %3, %cst {dimension_numbers = #tpu.dot_dimension_numbers<[1], [0], [0], [1], [0, 0, 1, 1], [], []>} : vector<32x128xbf16>, vector<128x128xbf16>, vector<32x128xf32> -> vector<32x128xf32>
    %c0_6 = arith.constant 0 : index
    %c1 = arith.constant 1 : index
    %c0_7 = arith.constant 0 : index
    %c0_8 = arith.constant 0 : index
    %5 = vector.load %arg3[%c0_6, %c1, %c0_7, %c0_8] : memref<1x5x32x128xbf16, #tpu.memory_space<vmem>>, vector<1x1x32x128xbf16>
    %6 = vector.shape_cast %5 : vector<1x1x32x128xbf16> to vector<32x128xbf16>
    %c1_9 = arith.constant 1 : index
    %c0_10 = arith.constant 0 : index
    %c0_11 = arith.constant 0 : index
    %7 = vector.load %arg4[%c1_9, %c0_10, %c0_11] : memref<5x128x128xbf16, #tpu.memory_space<vmem>>, vector<1x128x128xbf16>
    %8 = vector.shape_cast %7 : vector<1x128x128xbf16> to vector<128x128xbf16>
    %cst_12 = arith.constant dense<0.000000e+00> : vector<32x128xf32>
    %9 = tpu.matmul %6, %8, %cst_12 {dimension_numbers = #tpu.dot_dimension_numbers<[1], [0], [0], [1], [0, 0, 1, 1], [], []>} : vector<32x128xbf16>, vector<128x128xbf16>, vector<32x128xf32> -> vector<32x128xf32>
    %10 = arith.addf %4, %9 : vector<32x128xf32>
    %c0_13 = arith.constant 0 : index
    %c2 = arith.constant 2 : index
    %c0_14 = arith.constant 0 : index
    %c0_15 = arith.constant 0 : index
    %11 = vector.load %arg3[%c0_13, %c2, %c0_14, %c0_15] : memref<1x5x32x128xbf16, #tpu.memory_space<vmem>>, vector<1x1x32x128xbf16>
    %12 = vector.shape_cast %11 : vector<1x1x32x128xbf16> to vector<32x128xbf16>
    %c2_16 = arith.constant 2 : index
    %c0_17 = arith.constant 0 : index
    %c0_18 = arith.constant 0 : index
    %13 = vector.load %arg4[%c2_16, %c0_17, %c0_18] : memref<5x128x128xbf16, #tpu.memory_space<vmem>>, vector<1x128x128xbf16>
    %14 = vector.shape_cast %13 : vector<1x128x128xbf16> to vector<128x128xbf16>
    %cst_19 = arith.constant dense<0.000000e+00> : vector<32x128xf32>
    %15 = tpu.matmul %12, %14, %cst_19 {dimension_numbers = #tpu.dot_dimension_numbers<[1], [0], [0], [1], [0, 0, 1, 1], [], []>} : vector<32x128xbf16>, vector<128x128xbf16>, vector<32x128xf32> -> vector<32x128xf32>
    %16 = arith.addf %10, %15 : vector<32x128xf32>
    %c0_20 = arith.constant 0 : index
    %c3 = arith.constant 3 : index
    %c0_21 = arith.constant 0 : index
    %c0_22 = arith.constant 0 : index
    %17 = vector.load %arg3[%c0_20, %c3, %c0_21, %c0_22] : memref<1x5x32x128xbf16, #tpu.memory_space<vmem>>, vector<1x1x32x128xbf16>
    %18 = vector.shape_cast %17 : vector<1x1x32x128xbf16> to vector<32x128xbf16>
    %c3_23 = arith.constant 3 : index
    %c0_24 = arith.constant 0 : index
    %c0_25 = arith.constant 0 : index
    %19 = vector.load %arg4[%c3_23, %c0_24, %c0_25] : memref<5x128x128xbf16, #tpu.memory_space<vmem>>, vector<1x128x128xbf16>
    %20 = vector.shape_cast %19 : vector<1x128x128xbf16> to vector<128x128xbf16>
    %cst_26 = arith.constant dense<0.000000e+00> : vector<32x128xf32>
    %21 = tpu.matmul %18, %20, %cst_26 {dimension_numbers = #tpu.dot_dimension_numbers<[1], [0], [0], [1], [0, 0, 1, 1], [], []>} : vector<32x128xbf16>, vector<128x128xbf16>, vector<32x128xf32> -> vector<32x128xf32>
    %22 = arith.addf %16, %21 : vector<32x128xf32>
    %c0_27 = arith.constant 0 : index
    %c4 = arith.constant 4 : index
    %c0_28 = arith.constant 0 : index
    %c0_29 = arith.constant 0 : index
    %23 = vector.load %arg3[%c0_27, %c4, %c0_28, %c0_29] : memref<1x5x32x128xbf16, #tpu.memory_space<vmem>>, vector<1x1x32x128xbf16>
    %24 = vector.shape_cast %23 : vector<1x1x32x128xbf16> to vector<32x128xbf16>
    %c4_30 = arith.constant 4 : index
    %c0_31 = arith.constant 0 : index
    %c0_32 = arith.constant 0 : index
    %25 = vector.load %arg4[%c4_30, %c0_31, %c0_32] : memref<5x128x128xbf16, #tpu.memory_space<vmem>>, vector<1x128x128xbf16>
    %26 = vector.shape_cast %25 : vector<1x128x128xbf16> to vector<128x128xbf16>
    %cst_33 = arith.constant dense<0.000000e+00> : vector<32x128xf32>
    %27 = tpu.matmul %24, %26, %cst_33 {dimension_numbers = #tpu.dot_dimension_numbers<[1], [0], [0], [1], [0, 0, 1, 1], [], []>} : vector<32x128xbf16>, vector<128x128xbf16>, vector<32x128xf32> -> vector<32x128xf32>
    %28 = arith.addf %22, %27 : vector<32x128xf32>
    %c0_34 = arith.constant 0 : index
    %c0_35 = arith.constant 0 : index
    %29 = vector.load %arg5[%c0_34, %c0_35] : memref<1x128xf32, #tpu.memory_space<vmem>>, vector<1x128xf32>
    %30 = vector.broadcast %29 : vector<1x128xf32> to vector<32x128xf32>
    %31 = arith.addf %28, %30 : vector<32x128xf32>
    %cst_36 = arith.constant 0.000000e+00 : f32
    %32 = vector.broadcast %cst_36 : f32 to vector<32x128xf32>
    %33 = arith.maximumf %31, %32 : vector<32x128xf32>
    %34 = vector.shape_cast %33 : vector<32x128xf32> to vector<1x32x128xf32>
    %35 = arith.truncf %34 : vector<1x32x128xf32> to vector<1x32x128xbf16>
    %c0_37 = arith.constant 0 : index
    %c0_38 = arith.constant 0 : index
    %c0_39 = arith.constant 0 : index
    %36 = vector.load %arg6[%c0_37, %c0_38, %c0_39] : memref<1x32x128xbf16, #tpu.memory_space<vmem>>, vector<1x32x128xbf16>
    tpu.vector_store %arg6[%c0_37, %c0_38, %c0_39], %35 {strides = array<i32>} : memref<1x32x128xbf16, #tpu.memory_space<vmem>>, vector<1x32x128xbf16>,
    %37 = tpu.iota {dimensions = array<i32: 0>} : vector<8x32xi32>
    %38 = tpu.iota {dimensions = array<i32: 1>} : vector<8x32xi32>
    %c32_i32 = arith.constant 32 : i32
    %39 = arith.muli %arg2, %c32_i32 : i32
    %40 = vector.broadcast %39 : i32 to vector<8x32xi32>
    %41 = arith.addi %38, %40 : vector<8x32xi32>
    %c28_i32 = arith.constant 28 : i32
    %42 = vector.broadcast %c28_i32 : i32 to vector<8x32xi32>
    %43 = arith.cmpi slt, %41, %42 : vector<8x32xi32>
    %c0_i32 = arith.constant 0 : i32
    %44 = vector.broadcast %c0_i32 : i32 to vector<8x32xi32>
    %45 = arith.cmpi eq, %37, %44 : vector<8x32xi32>
    %46 = arith.andi %43, %45 : vector<8x32xi1>
    %cst_40 = arith.constant 1.000000e+00 : f32
    %cst_41 = arith.constant 0.000000e+00 : f32
    %47 = vector.broadcast %cst_40 : f32 to vector<8x32xf32>
    %48 = vector.broadcast %cst_41 : f32 to vector<8x32xf32>
    %49 = arith.select %46, %47, %48 : vector<8x32xi1>, vector<8x32xf32>
    %c1_i32 = arith.constant 1 : i32
    %50 = vector.broadcast %c1_i32 : i32 to vector<8x32xi32>
    %51 = arith.cmpi eq, %37, %50 : vector<8x32xi32>
    %52 = arith.andi %43, %51 : vector<8x32xi1>
    %cst_42 = arith.constant 1.000000e+00 : f32
    %cst_43 = arith.constant 0.000000e+00 : f32
    %53 = vector.broadcast %cst_42 : f32 to vector<8x32xf32>
    %54 = vector.broadcast %cst_43 : f32 to vector<8x32xf32>
    %55 = arith.select %52, %53, %54 : vector<8x32xi1>, vector<8x32xf32>
    %cst_44 = arith.constant dense<0.000000e+00> : vector<8x128xf32>
    %56 = tpu.matmul %49, %33, %cst_44 {dimension_numbers = #tpu.dot_dimension_numbers<[1], [0], [0], [1], [0, 0, 1, 1], [], []>} : vector<8x32xf32>, vector<32x128xf32>, vector<8x128xf32> -> vector<8x128xf32>
    %57 = arith.mulf %33, %33 : vector<32x128xf32>
    %cst_45 = arith.constant dense<0.000000e+00> : vector<8x128xf32>
    %58 = tpu.matmul %55, %57, %cst_45 {dimension_numbers = #tpu.dot_dimension_numbers<[1], [0], [0], [1], [0, 0, 1, 1], [], []>} : vector<8x32xf32>, vector<32x128xf32>, vector<8x128xf32> -> vector<8x128xf32>
    %59 = arith.addf %56, %58 : vector<8x128xf32>
    %60 = vector.shape_cast %59 : vector<8x128xf32> to vector<1x1x8x128xf32>
    %c0_46 = arith.constant 0 : index
    %c0_47 = arith.constant 0 : index
    %c0_48 = arith.constant 0 : index
    %c0_49 = arith.constant 0 : index
    %61 = vector.load %arg7[%c0_46, %c0_47, %c0_48, %c0_49] : memref<1x1x8x128xf32, #tpu.memory_space<vmem>>, vector<1x1x8x128xf32>
    tpu.vector_store %arg7[%c0_46, %c0_47, %c0_48, %c0_49], %60 {strides = array<i32>} : memref<1x1x8x128xf32, #tpu.memory_space<vmem>>, vector<1x1x8x128xf32>,
    return
  }
  func.func @transform_0(%arg0: i32, %arg1: i32, %arg2: i32) -> (i32, i32, i32, i32) {
    %c0_i32 = arith.constant 0 : i32
    %c0_i32_0 = arith.constant 0 : i32
    %c0_i32_1 = arith.constant 0 : i32
    return %arg0, %c0_i32, %arg2, %c0_i32_0 : i32, i32, i32, i32
  }
  func.func @transform_1(%arg0: i32, %arg1: i32, %arg2: i32) -> (i32, i32, i32) {
    %c0_i32 = arith.constant 0 : i32
    %c0_i32_0 = arith.constant 0 : i32
    %c0_i32_1 = arith.constant 0 : i32
    return %c0_i32, %c0_i32_0, %arg1 : i32, i32, i32
  }
  func.func @transform_2(%arg0: i32, %arg1: i32, %arg2: i32) -> (i32, i32) {
    %c0_i32 = arith.constant 0 : i32
    %c0_i32_0 = arith.constant 0 : i32
    return %c0_i32, %arg1 : i32, i32
  }
  func.func @transform_3(%arg0: i32, %arg1: i32, %arg2: i32) -> (i32, i32, i32) {
    %c0_i32 = arith.constant 0 : i32
    return %arg0, %arg2, %arg1 : i32, i32, i32
  }
  func.func @transform_4(%arg0: i32, %arg1: i32, %arg2: i32) -> (i32, i32, i32, i32) {
    %c0_i32 = arith.constant 0 : i32
    %c0_i32_0 = arith.constant 0 : i32
    return %arg0, %arg2, %c0_i32, %arg1 : i32, i32, i32, i32
  }
}

module attributes {stable_mosaic.version = 11 : i64} {
  func.func @_conv_relu_stats_kernel(%arg0: i32, %arg1: i32, %arg2: i32, %arg3: memref<1x3x32x128xbf16, #tpu.memory_space<vmem>>, %arg4: memref<3x128x128xbf16, #tpu.memory_space<vmem>>, %arg5: memref<1x128xf32, #tpu.memory_space<vmem>>, %arg6: memref<1x32x128xbf16, #tpu.memory_space<vmem>>, %arg7: memref<1x1x8x128xf32, #tpu.memory_space<vmem>>) attributes {dimension_semantics = [#tpu.dimension_semantics<parallel>, #tpu.dimension_semantics<parallel>, #tpu.dimension_semantics<parallel>], iteration_bounds = array<i64: 2, 1, 1>, scalar_prefetch = 0 : i64, scratch_operands = 0 : i64, tpu.core_type = #tpu.core_type<tc>, window_params = [{transform_indices = @transform_0, window_bounds = array<i64: 1, 3, 32, 128>}, {transform_indices = @transform_1, window_bounds = array<i64: 3, 128, 128>}, {transform_indices = @transform_2, window_bounds = array<i64: 1, 128>}, {transform_indices = @transform_3, window_bounds = array<i64: 1, 32, 128>}, {transform_indices = @transform_4, window_bounds = array<i64: 1, 1, 8, 128>}]} {
    %c0 = arith.constant 0 : index
    %c0_0 = arith.constant 0 : index
    %c0_1 = arith.constant 0 : index
    %c0_2 = arith.constant 0 : index
    %0 = vector.load %arg3[%c0, %c0_0, %c0_1, %c0_2] : memref<1x3x32x128xbf16, #tpu.memory_space<vmem>>, vector<1x1x32x128xbf16>
    %1 = vector.shape_cast %0 : vector<1x1x32x128xbf16> to vector<32x128xbf16>
    %c0_3 = arith.constant 0 : index
    %c0_4 = arith.constant 0 : index
    %c0_5 = arith.constant 0 : index
    %2 = vector.load %arg4[%c0_3, %c0_4, %c0_5] : memref<3x128x128xbf16, #tpu.memory_space<vmem>>, vector<1x128x128xbf16>
    %3 = vector.shape_cast %2 : vector<1x128x128xbf16> to vector<128x128xbf16>
    %cst = arith.constant dense<0.000000e+00> : vector<32x128xf32>
    %4 = tpu.matmul %1, %3, %cst {dimension_numbers = #tpu.dot_dimension_numbers<[1], [0], [0], [1], [0, 0, 1, 1], [], []>} : vector<32x128xbf16>, vector<128x128xbf16>, vector<32x128xf32> -> vector<32x128xf32>
    %c0_6 = arith.constant 0 : index
    %c1 = arith.constant 1 : index
    %c0_7 = arith.constant 0 : index
    %c0_8 = arith.constant 0 : index
    %5 = vector.load %arg3[%c0_6, %c1, %c0_7, %c0_8] : memref<1x3x32x128xbf16, #tpu.memory_space<vmem>>, vector<1x1x32x128xbf16>
    %6 = vector.shape_cast %5 : vector<1x1x32x128xbf16> to vector<32x128xbf16>
    %c1_9 = arith.constant 1 : index
    %c0_10 = arith.constant 0 : index
    %c0_11 = arith.constant 0 : index
    %7 = vector.load %arg4[%c1_9, %c0_10, %c0_11] : memref<3x128x128xbf16, #tpu.memory_space<vmem>>, vector<1x128x128xbf16>
    %8 = vector.shape_cast %7 : vector<1x128x128xbf16> to vector<128x128xbf16>
    %cst_12 = arith.constant dense<0.000000e+00> : vector<32x128xf32>
    %9 = tpu.matmul %6, %8, %cst_12 {dimension_numbers = #tpu.dot_dimension_numbers<[1], [0], [0], [1], [0, 0, 1, 1], [], []>} : vector<32x128xbf16>, vector<128x128xbf16>, vector<32x128xf32> -> vector<32x128xf32>
    %10 = arith.addf %4, %9 : vector<32x128xf32>
    %c0_13 = arith.constant 0 : index
    %c2 = arith.constant 2 : index
    %c0_14 = arith.constant 0 : index
    %c0_15 = arith.constant 0 : index
    %11 = vector.load %arg3[%c0_13, %c2, %c0_14, %c0_15] : memref<1x3x32x128xbf16, #tpu.memory_space<vmem>>, vector<1x1x32x128xbf16>
    %12 = vector.shape_cast %11 : vector<1x1x32x128xbf16> to vector<32x128xbf16>
    %c2_16 = arith.constant 2 : index
    %c0_17 = arith.constant 0 : index
    %c0_18 = arith.constant 0 : index
    %13 = vector.load %arg4[%c2_16, %c0_17, %c0_18] : memref<3x128x128xbf16, #tpu.memory_space<vmem>>, vector<1x128x128xbf16>
    %14 = vector.shape_cast %13 : vector<1x128x128xbf16> to vector<128x128xbf16>
    %cst_19 = arith.constant dense<0.000000e+00> : vector<32x128xf32>
    %15 = tpu.matmul %12, %14, %cst_19 {dimension_numbers = #tpu.dot_dimension_numbers<[1], [0], [0], [1], [0, 0, 1, 1], [], []>} : vector<32x128xbf16>, vector<128x128xbf16>, vector<32x128xf32> -> vector<32x128xf32>
    %16 = arith.addf %10, %15 : vector<32x128xf32>
    %c0_20 = arith.constant 0 : index
    %c0_21 = arith.constant 0 : index
    %17 = vector.load %arg5[%c0_20, %c0_21] : memref<1x128xf32, #tpu.memory_space<vmem>>, vector<1x128xf32>
    %18 = vector.broadcast %17 : vector<1x128xf32> to vector<32x128xf32>
    %19 = arith.addf %16, %18 : vector<32x128xf32>
    %cst_22 = arith.constant 0.000000e+00 : f32
    %20 = vector.broadcast %cst_22 : f32 to vector<32x128xf32>
    %21 = arith.maximumf %19, %20 : vector<32x128xf32>
    %22 = vector.shape_cast %21 : vector<32x128xf32> to vector<1x32x128xf32>
    %23 = arith.truncf %22 : vector<1x32x128xf32> to vector<1x32x128xbf16>
    %c0_23 = arith.constant 0 : index
    %c0_24 = arith.constant 0 : index
    %c0_25 = arith.constant 0 : index
    %24 = vector.load %arg6[%c0_23, %c0_24, %c0_25] : memref<1x32x128xbf16, #tpu.memory_space<vmem>>, vector<1x32x128xbf16>
    tpu.vector_store %arg6[%c0_23, %c0_24, %c0_25], %23 {strides = array<i32>} : memref<1x32x128xbf16, #tpu.memory_space<vmem>>, vector<1x32x128xbf16>,
    %25 = tpu.iota {dimensions = array<i32: 0>} : vector<8x32xi32>
    %26 = tpu.iota {dimensions = array<i32: 1>} : vector<8x32xi32>
    %c32_i32 = arith.constant 32 : i32
    %27 = arith.muli %arg2, %c32_i32 : i32
    %28 = vector.broadcast %27 : i32 to vector<8x32xi32>
    %29 = arith.addi %26, %28 : vector<8x32xi32>
    %c24_i32 = arith.constant 24 : i32
    %30 = vector.broadcast %c24_i32 : i32 to vector<8x32xi32>
    %31 = arith.cmpi slt, %29, %30 : vector<8x32xi32>
    %c0_i32 = arith.constant 0 : i32
    %32 = vector.broadcast %c0_i32 : i32 to vector<8x32xi32>
    %33 = arith.cmpi eq, %25, %32 : vector<8x32xi32>
    %34 = arith.andi %31, %33 : vector<8x32xi1>
    %cst_26 = arith.constant 1.000000e+00 : f32
    %cst_27 = arith.constant 0.000000e+00 : f32
    %35 = vector.broadcast %cst_26 : f32 to vector<8x32xf32>
    %36 = vector.broadcast %cst_27 : f32 to vector<8x32xf32>
    %37 = arith.select %34, %35, %36 : vector<8x32xi1>, vector<8x32xf32>
    %c1_i32 = arith.constant 1 : i32
    %38 = vector.broadcast %c1_i32 : i32 to vector<8x32xi32>
    %39 = arith.cmpi eq, %25, %38 : vector<8x32xi32>
    %40 = arith.andi %31, %39 : vector<8x32xi1>
    %cst_28 = arith.constant 1.000000e+00 : f32
    %cst_29 = arith.constant 0.000000e+00 : f32
    %41 = vector.broadcast %cst_28 : f32 to vector<8x32xf32>
    %42 = vector.broadcast %cst_29 : f32 to vector<8x32xf32>
    %43 = arith.select %40, %41, %42 : vector<8x32xi1>, vector<8x32xf32>
    %cst_30 = arith.constant dense<0.000000e+00> : vector<8x128xf32>
    %44 = tpu.matmul %37, %21, %cst_30 {dimension_numbers = #tpu.dot_dimension_numbers<[1], [0], [0], [1], [0, 0, 1, 1], [], []>} : vector<8x32xf32>, vector<32x128xf32>, vector<8x128xf32> -> vector<8x128xf32>
    %45 = arith.mulf %21, %21 : vector<32x128xf32>
    %cst_31 = arith.constant dense<0.000000e+00> : vector<8x128xf32>
    %46 = tpu.matmul %43, %45, %cst_31 {dimension_numbers = #tpu.dot_dimension_numbers<[1], [0], [0], [1], [0, 0, 1, 1], [], []>} : vector<8x32xf32>, vector<32x128xf32>, vector<8x128xf32> -> vector<8x128xf32>
    %47 = arith.addf %44, %46 : vector<8x128xf32>
    %48 = vector.shape_cast %47 : vector<8x128xf32> to vector<1x1x8x128xf32>
    %c0_32 = arith.constant 0 : index
    %c0_33 = arith.constant 0 : index
    %c0_34 = arith.constant 0 : index
    %c0_35 = arith.constant 0 : index
    %49 = vector.load %arg7[%c0_32, %c0_33, %c0_34, %c0_35] : memref<1x1x8x128xf32, #tpu.memory_space<vmem>>, vector<1x1x8x128xf32>
    tpu.vector_store %arg7[%c0_32, %c0_33, %c0_34, %c0_35], %48 {strides = array<i32>} : memref<1x1x8x128xf32, #tpu.memory_space<vmem>>, vector<1x1x8x128xf32>,
    return
  }
  func.func @transform_0(%arg0: i32, %arg1: i32, %arg2: i32) -> (i32, i32, i32, i32) {
    %c0_i32 = arith.constant 0 : i32
    %c0_i32_0 = arith.constant 0 : i32
    %c0_i32_1 = arith.constant 0 : i32
    return %arg0, %c0_i32, %arg2, %c0_i32_0 : i32, i32, i32, i32
  }
  func.func @transform_1(%arg0: i32, %arg1: i32, %arg2: i32) -> (i32, i32, i32) {
    %c0_i32 = arith.constant 0 : i32
    %c0_i32_0 = arith.constant 0 : i32
    %c0_i32_1 = arith.constant 0 : i32
    return %c0_i32, %c0_i32_0, %arg1 : i32, i32, i32
  }
  func.func @transform_2(%arg0: i32, %arg1: i32, %arg2: i32) -> (i32, i32) {
    %c0_i32 = arith.constant 0 : i32
    %c0_i32_0 = arith.constant 0 : i32
    return %c0_i32, %arg1 : i32, i32
  }
  func.func @transform_3(%arg0: i32, %arg1: i32, %arg2: i32) -> (i32, i32, i32) {
    %c0_i32 = arith.constant 0 : i32
    return %arg0, %arg2, %arg1 : i32, i32, i32
  }
  func.func @transform_4(%arg0: i32, %arg1: i32, %arg2: i32) -> (i32, i32, i32, i32) {
    %c0_i32 = arith.constant 0 : i32
    %c0_i32_0 = arith.constant 0 : i32
    return %arg0, %arg2, %c0_i32, %arg1 : i32, i32, i32, i32
  }
}

module attributes {stable_mosaic.version = 11 : i64} {
  func.func @_conv_relu_stats_kernel(%arg0: i32, %arg1: i32, %arg2: i32, %arg3: memref<1x3x32x128xbf16, #tpu.memory_space<vmem>>, %arg4: memref<3x128x128xbf16, #tpu.memory_space<vmem>>, %arg5: memref<1x128xf32, #tpu.memory_space<vmem>>, %arg6: memref<1x32x128xbf16, #tpu.memory_space<vmem>>, %arg7: memref<1x1x8x128xf32, #tpu.memory_space<vmem>>) attributes {dimension_semantics = [#tpu.dimension_semantics<parallel>, #tpu.dimension_semantics<parallel>, #tpu.dimension_semantics<parallel>], iteration_bounds = array<i64: 2, 1, 1>, scalar_prefetch = 0 : i64, scratch_operands = 0 : i64, tpu.core_type = #tpu.core_type<tc>, window_params = [{transform_indices = @transform_0, window_bounds = array<i64: 1, 3, 32, 128>}, {transform_indices = @transform_1, window_bounds = array<i64: 3, 128, 128>}, {transform_indices = @transform_2, window_bounds = array<i64: 1, 128>}, {transform_indices = @transform_3, window_bounds = array<i64: 1, 32, 128>}, {transform_indices = @transform_4, window_bounds = array<i64: 1, 1, 8, 128>}]} {
    %c0 = arith.constant 0 : index
    %c0_0 = arith.constant 0 : index
    %c0_1 = arith.constant 0 : index
    %c0_2 = arith.constant 0 : index
    %0 = vector.load %arg3[%c0, %c0_0, %c0_1, %c0_2] : memref<1x3x32x128xbf16, #tpu.memory_space<vmem>>, vector<1x1x32x128xbf16>
    %1 = vector.shape_cast %0 : vector<1x1x32x128xbf16> to vector<32x128xbf16>
    %c0_3 = arith.constant 0 : index
    %c0_4 = arith.constant 0 : index
    %c0_5 = arith.constant 0 : index
    %2 = vector.load %arg4[%c0_3, %c0_4, %c0_5] : memref<3x128x128xbf16, #tpu.memory_space<vmem>>, vector<1x128x128xbf16>
    %3 = vector.shape_cast %2 : vector<1x128x128xbf16> to vector<128x128xbf16>
    %cst = arith.constant dense<0.000000e+00> : vector<32x128xf32>
    %4 = tpu.matmul %1, %3, %cst {dimension_numbers = #tpu.dot_dimension_numbers<[1], [0], [0], [1], [0, 0, 1, 1], [], []>} : vector<32x128xbf16>, vector<128x128xbf16>, vector<32x128xf32> -> vector<32x128xf32>
    %c0_6 = arith.constant 0 : index
    %c1 = arith.constant 1 : index
    %c0_7 = arith.constant 0 : index
    %c0_8 = arith.constant 0 : index
    %5 = vector.load %arg3[%c0_6, %c1, %c0_7, %c0_8] : memref<1x3x32x128xbf16, #tpu.memory_space<vmem>>, vector<1x1x32x128xbf16>
    %6 = vector.shape_cast %5 : vector<1x1x32x128xbf16> to vector<32x128xbf16>
    %c1_9 = arith.constant 1 : index
    %c0_10 = arith.constant 0 : index
    %c0_11 = arith.constant 0 : index
    %7 = vector.load %arg4[%c1_9, %c0_10, %c0_11] : memref<3x128x128xbf16, #tpu.memory_space<vmem>>, vector<1x128x128xbf16>
    %8 = vector.shape_cast %7 : vector<1x128x128xbf16> to vector<128x128xbf16>
    %cst_12 = arith.constant dense<0.000000e+00> : vector<32x128xf32>
    %9 = tpu.matmul %6, %8, %cst_12 {dimension_numbers = #tpu.dot_dimension_numbers<[1], [0], [0], [1], [0, 0, 1, 1], [], []>} : vector<32x128xbf16>, vector<128x128xbf16>, vector<32x128xf32> -> vector<32x128xf32>
    %10 = arith.addf %4, %9 : vector<32x128xf32>
    %c0_13 = arith.constant 0 : index
    %c2 = arith.constant 2 : index
    %c0_14 = arith.constant 0 : index
    %c0_15 = arith.constant 0 : index
    %11 = vector.load %arg3[%c0_13, %c2, %c0_14, %c0_15] : memref<1x3x32x128xbf16, #tpu.memory_space<vmem>>, vector<1x1x32x128xbf16>
    %12 = vector.shape_cast %11 : vector<1x1x32x128xbf16> to vector<32x128xbf16>
    %c2_16 = arith.constant 2 : index
    %c0_17 = arith.constant 0 : index
    %c0_18 = arith.constant 0 : index
    %13 = vector.load %arg4[%c2_16, %c0_17, %c0_18] : memref<3x128x128xbf16, #tpu.memory_space<vmem>>, vector<1x128x128xbf16>
    %14 = vector.shape_cast %13 : vector<1x128x128xbf16> to vector<128x128xbf16>
    %cst_19 = arith.constant dense<0.000000e+00> : vector<32x128xf32>
    %15 = tpu.matmul %12, %14, %cst_19 {dimension_numbers = #tpu.dot_dimension_numbers<[1], [0], [0], [1], [0, 0, 1, 1], [], []>} : vector<32x128xbf16>, vector<128x128xbf16>, vector<32x128xf32> -> vector<32x128xf32>
    %16 = arith.addf %10, %15 : vector<32x128xf32>
    %c0_20 = arith.constant 0 : index
    %c0_21 = arith.constant 0 : index
    %17 = vector.load %arg5[%c0_20, %c0_21] : memref<1x128xf32, #tpu.memory_space<vmem>>, vector<1x128xf32>
    %18 = vector.broadcast %17 : vector<1x128xf32> to vector<32x128xf32>
    %19 = arith.addf %16, %18 : vector<32x128xf32>
    %cst_22 = arith.constant 0.000000e+00 : f32
    %20 = vector.broadcast %cst_22 : f32 to vector<32x128xf32>
    %21 = arith.maximumf %19, %20 : vector<32x128xf32>
    %22 = vector.shape_cast %21 : vector<32x128xf32> to vector<1x32x128xf32>
    %23 = arith.truncf %22 : vector<1x32x128xf32> to vector<1x32x128xbf16>
    %c0_23 = arith.constant 0 : index
    %c0_24 = arith.constant 0 : index
    %c0_25 = arith.constant 0 : index
    %24 = vector.load %arg6[%c0_23, %c0_24, %c0_25] : memref<1x32x128xbf16, #tpu.memory_space<vmem>>, vector<1x32x128xbf16>
    tpu.vector_store %arg6[%c0_23, %c0_24, %c0_25], %23 {strides = array<i32>} : memref<1x32x128xbf16, #tpu.memory_space<vmem>>, vector<1x32x128xbf16>,
    %25 = tpu.iota {dimensions = array<i32: 0>} : vector<8x32xi32>
    %26 = tpu.iota {dimensions = array<i32: 1>} : vector<8x32xi32>
    %c32_i32 = arith.constant 32 : i32
    %27 = arith.muli %arg2, %c32_i32 : i32
    %28 = vector.broadcast %27 : i32 to vector<8x32xi32>
    %29 = arith.addi %26, %28 : vector<8x32xi32>
    %c18_i32 = arith.constant 18 : i32
    %30 = vector.broadcast %c18_i32 : i32 to vector<8x32xi32>
    %31 = arith.cmpi slt, %29, %30 : vector<8x32xi32>
    %c0_i32 = arith.constant 0 : i32
    %32 = vector.broadcast %c0_i32 : i32 to vector<8x32xi32>
    %33 = arith.cmpi eq, %25, %32 : vector<8x32xi32>
    %34 = arith.andi %31, %33 : vector<8x32xi1>
    %cst_26 = arith.constant 1.000000e+00 : f32
    %cst_27 = arith.constant 0.000000e+00 : f32
    %35 = vector.broadcast %cst_26 : f32 to vector<8x32xf32>
    %36 = vector.broadcast %cst_27 : f32 to vector<8x32xf32>
    %37 = arith.select %34, %35, %36 : vector<8x32xi1>, vector<8x32xf32>
    %c1_i32 = arith.constant 1 : i32
    %38 = vector.broadcast %c1_i32 : i32 to vector<8x32xi32>
    %39 = arith.cmpi eq, %25, %38 : vector<8x32xi32>
    %40 = arith.andi %31, %39 : vector<8x32xi1>
    %cst_28 = arith.constant 1.000000e+00 : f32
    %cst_29 = arith.constant 0.000000e+00 : f32
    %41 = vector.broadcast %cst_28 : f32 to vector<8x32xf32>
    %42 = vector.broadcast %cst_29 : f32 to vector<8x32xf32>
    %43 = arith.select %40, %41, %42 : vector<8x32xi1>, vector<8x32xf32>
    %cst_30 = arith.constant dense<0.000000e+00> : vector<8x128xf32>
    %44 = tpu.matmul %37, %21, %cst_30 {dimension_numbers = #tpu.dot_dimension_numbers<[1], [0], [0], [1], [0, 0, 1, 1], [], []>} : vector<8x32xf32>, vector<32x128xf32>, vector<8x128xf32> -> vector<8x128xf32>
    %45 = arith.mulf %21, %21 : vector<32x128xf32>
    %cst_31 = arith.constant dense<0.000000e+00> : vector<8x128xf32>
    %46 = tpu.matmul %43, %45, %cst_31 {dimension_numbers = #tpu.dot_dimension_numbers<[1], [0], [0], [1], [0, 0, 1, 1], [], []>} : vector<8x32xf32>, vector<32x128xf32>, vector<8x128xf32> -> vector<8x128xf32>
    %47 = arith.addf %44, %46 : vector<8x128xf32>
    %48 = vector.shape_cast %47 : vector<8x128xf32> to vector<1x1x8x128xf32>
    %c0_32 = arith.constant 0 : index
    %c0_33 = arith.constant 0 : index
    %c0_34 = arith.constant 0 : index
    %c0_35 = arith.constant 0 : index
    %49 = vector.load %arg7[%c0_32, %c0_33, %c0_34, %c0_35] : memref<1x1x8x128xf32, #tpu.memory_space<vmem>>, vector<1x1x8x128xf32>
    tpu.vector_store %arg7[%c0_32, %c0_33, %c0_34, %c0_35], %48 {strides = array<i32>} : memref<1x1x8x128xf32, #tpu.memory_space<vmem>>, vector<1x1x8x128xf32>,
    return
  }
  func.func @transform_0(%arg0: i32, %arg1: i32, %arg2: i32) -> (i32, i32, i32, i32) {
    %c0_i32 = arith.constant 0 : i32
    %c0_i32_0 = arith.constant 0 : i32
    %c0_i32_1 = arith.constant 0 : i32
    return %arg0, %c0_i32, %arg2, %c0_i32_0 : i32, i32, i32, i32
  }
  func.func @transform_1(%arg0: i32, %arg1: i32, %arg2: i32) -> (i32, i32, i32) {
    %c0_i32 = arith.constant 0 : i32
    %c0_i32_0 = arith.constant 0 : i32
    %c0_i32_1 = arith.constant 0 : i32
    return %c0_i32, %c0_i32_0, %arg1 : i32, i32, i32
  }
  func.func @transform_2(%arg0: i32, %arg1: i32, %arg2: i32) -> (i32, i32) {
    %c0_i32 = arith.constant 0 : i32
    %c0_i32_0 = arith.constant 0 : i32
    return %c0_i32, %arg1 : i32, i32
  }
  func.func @transform_3(%arg0: i32, %arg1: i32, %arg2: i32) -> (i32, i32, i32) {
    %c0_i32 = arith.constant 0 : i32
    return %arg0, %arg2, %arg1 : i32, i32, i32
  }
  func.func @transform_4(%arg0: i32, %arg1: i32, %arg2: i32) -> (i32, i32, i32, i32) {
    %c0_i32 = arith.constant 0 : i32
    %c0_i32_0 = arith.constant 0 : i32
    return %arg0, %arg2, %c0_i32, %arg1 : i32, i32, i32, i32
  }
}

module attributes {stable_mosaic.version = 11 : i64} {
  func.func @_conv_relu_stats_kernel(%arg0: i32, %arg1: i32, %arg2: i32, %arg3: memref<1x1x32x128xbf16, #tpu.memory_space<vmem>>, %arg4: memref<1x128x128xbf16, #tpu.memory_space<vmem>>, %arg5: memref<1x128xf32, #tpu.memory_space<vmem>>, %arg6: memref<1x32x128xbf16, #tpu.memory_space<vmem>>, %arg7: memref<1x1x8x128xf32, #tpu.memory_space<vmem>>) attributes {dimension_semantics = [#tpu.dimension_semantics<parallel>, #tpu.dimension_semantics<parallel>, #tpu.dimension_semantics<parallel>], iteration_bounds = array<i64: 2, 1, 1>, scalar_prefetch = 0 : i64, scratch_operands = 0 : i64, tpu.core_type = #tpu.core_type<tc>, window_params = [{transform_indices = @transform_0, window_bounds = array<i64: 1, 1, 32, 128>}, {transform_indices = @transform_1, window_bounds = array<i64: 1, 128, 128>}, {transform_indices = @transform_2, window_bounds = array<i64: 1, 128>}, {transform_indices = @transform_3, window_bounds = array<i64: 1, 32, 128>}, {transform_indices = @transform_4, window_bounds = array<i64: 1, 1, 8, 128>}]} {
    %c0 = arith.constant 0 : index
    %c0_0 = arith.constant 0 : index
    %c0_1 = arith.constant 0 : index
    %c0_2 = arith.constant 0 : index
    %0 = vector.load %arg3[%c0, %c0_0, %c0_1, %c0_2] : memref<1x1x32x128xbf16, #tpu.memory_space<vmem>>, vector<1x1x32x128xbf16>
    %1 = vector.shape_cast %0 : vector<1x1x32x128xbf16> to vector<32x128xbf16>
    %c0_3 = arith.constant 0 : index
    %c0_4 = arith.constant 0 : index
    %c0_5 = arith.constant 0 : index
    %2 = vector.load %arg4[%c0_3, %c0_4, %c0_5] : memref<1x128x128xbf16, #tpu.memory_space<vmem>>, vector<1x128x128xbf16>
    %3 = vector.shape_cast %2 : vector<1x128x128xbf16> to vector<128x128xbf16>
    %cst = arith.constant dense<0.000000e+00> : vector<32x128xf32>
    %4 = tpu.matmul %1, %3, %cst {dimension_numbers = #tpu.dot_dimension_numbers<[1], [0], [0], [1], [0, 0, 1, 1], [], []>} : vector<32x128xbf16>, vector<128x128xbf16>, vector<32x128xf32> -> vector<32x128xf32>
    %c0_6 = arith.constant 0 : index
    %c0_7 = arith.constant 0 : index
    %5 = vector.load %arg5[%c0_6, %c0_7] : memref<1x128xf32, #tpu.memory_space<vmem>>, vector<1x128xf32>
    %6 = vector.broadcast %5 : vector<1x128xf32> to vector<32x128xf32>
    %7 = arith.addf %4, %6 : vector<32x128xf32>
    %cst_8 = arith.constant 0.000000e+00 : f32
    %8 = vector.broadcast %cst_8 : f32 to vector<32x128xf32>
    %9 = arith.maximumf %7, %8 : vector<32x128xf32>
    %10 = vector.shape_cast %9 : vector<32x128xf32> to vector<1x32x128xf32>
    %11 = arith.truncf %10 : vector<1x32x128xf32> to vector<1x32x128xbf16>
    %c0_9 = arith.constant 0 : index
    %c0_10 = arith.constant 0 : index
    %c0_11 = arith.constant 0 : index
    %12 = vector.load %arg6[%c0_9, %c0_10, %c0_11] : memref<1x32x128xbf16, #tpu.memory_space<vmem>>, vector<1x32x128xbf16>
    tpu.vector_store %arg6[%c0_9, %c0_10, %c0_11], %11 {strides = array<i32>} : memref<1x32x128xbf16, #tpu.memory_space<vmem>>, vector<1x32x128xbf16>,
    %13 = tpu.iota {dimensions = array<i32: 0>} : vector<8x32xi32>
    %14 = tpu.iota {dimensions = array<i32: 1>} : vector<8x32xi32>
    %c32_i32 = arith.constant 32 : i32
    %15 = arith.muli %arg2, %c32_i32 : i32
    %16 = vector.broadcast %15 : i32 to vector<8x32xi32>
    %17 = arith.addi %14, %16 : vector<8x32xi32>
    %c18_i32 = arith.constant 18 : i32
    %18 = vector.broadcast %c18_i32 : i32 to vector<8x32xi32>
    %19 = arith.cmpi slt, %17, %18 : vector<8x32xi32>
    %c0_i32 = arith.constant 0 : i32
    %20 = vector.broadcast %c0_i32 : i32 to vector<8x32xi32>
    %21 = arith.cmpi eq, %13, %20 : vector<8x32xi32>
    %22 = arith.andi %19, %21 : vector<8x32xi1>
    %cst_12 = arith.constant 1.000000e+00 : f32
    %cst_13 = arith.constant 0.000000e+00 : f32
    %23 = vector.broadcast %cst_12 : f32 to vector<8x32xf32>
    %24 = vector.broadcast %cst_13 : f32 to vector<8x32xf32>
    %25 = arith.select %22, %23, %24 : vector<8x32xi1>, vector<8x32xf32>
    %c1_i32 = arith.constant 1 : i32
    %26 = vector.broadcast %c1_i32 : i32 to vector<8x32xi32>
    %27 = arith.cmpi eq, %13, %26 : vector<8x32xi32>
    %28 = arith.andi %19, %27 : vector<8x32xi1>
    %cst_14 = arith.constant 1.000000e+00 : f32
    %cst_15 = arith.constant 0.000000e+00 : f32
    %29 = vector.broadcast %cst_14 : f32 to vector<8x32xf32>
    %30 = vector.broadcast %cst_15 : f32 to vector<8x32xf32>
    %31 = arith.select %28, %29, %30 : vector<8x32xi1>, vector<8x32xf32>
    %cst_16 = arith.constant dense<0.000000e+00> : vector<8x128xf32>
    %32 = tpu.matmul %25, %9, %cst_16 {dimension_numbers = #tpu.dot_dimension_numbers<[1], [0], [0], [1], [0, 0, 1, 1], [], []>} : vector<8x32xf32>, vector<32x128xf32>, vector<8x128xf32> -> vector<8x128xf32>
    %33 = arith.mulf %9, %9 : vector<32x128xf32>
    %cst_17 = arith.constant dense<0.000000e+00> : vector<8x128xf32>
    %34 = tpu.matmul %31, %33, %cst_17 {dimension_numbers = #tpu.dot_dimension_numbers<[1], [0], [0], [1], [0, 0, 1, 1], [], []>} : vector<8x32xf32>, vector<32x128xf32>, vector<8x128xf32> -> vector<8x128xf32>
    %35 = arith.addf %32, %34 : vector<8x128xf32>
    %36 = vector.shape_cast %35 : vector<8x128xf32> to vector<1x1x8x128xf32>
    %c0_18 = arith.constant 0 : index
    %c0_19 = arith.constant 0 : index
    %c0_20 = arith.constant 0 : index
    %c0_21 = arith.constant 0 : index
    %37 = vector.load %arg7[%c0_18, %c0_19, %c0_20, %c0_21] : memref<1x1x8x128xf32, #tpu.memory_space<vmem>>, vector<1x1x8x128xf32>
    tpu.vector_store %arg7[%c0_18, %c0_19, %c0_20, %c0_21], %36 {strides = array<i32>} : memref<1x1x8x128xf32, #tpu.memory_space<vmem>>, vector<1x1x8x128xf32>,
    return
  }
  func.func @transform_0(%arg0: i32, %arg1: i32, %arg2: i32) -> (i32, i32, i32, i32) {
    %c0_i32 = arith.constant 0 : i32
    %c0_i32_0 = arith.constant 0 : i32
    %c0_i32_1 = arith.constant 0 : i32
    return %arg0, %c0_i32, %arg2, %c0_i32_0 : i32, i32, i32, i32
  }
  func.func @transform_1(%arg0: i32, %arg1: i32, %arg2: i32) -> (i32, i32, i32) {
    %c0_i32 = arith.constant 0 : i32
    %c0_i32_0 = arith.constant 0 : i32
    %c0_i32_1 = arith.constant 0 : i32
    return %c0_i32, %c0_i32_0, %arg1 : i32, i32, i32
  }
  func.func @transform_2(%arg0: i32, %arg1: i32, %arg2: i32) -> (i32, i32) {
    %c0_i32 = arith.constant 0 : i32
    %c0_i32_0 = arith.constant 0 : i32
    return %c0_i32, %arg1 : i32, i32
  }
  func.func @transform_3(%arg0: i32, %arg1: i32, %arg2: i32) -> (i32, i32, i32) {
    %c0_i32 = arith.constant 0 : i32
    return %arg0, %arg2, %arg1 : i32, i32, i32
  }
  func.func @transform_4(%arg0: i32, %arg1: i32, %arg2: i32) -> (i32, i32, i32, i32) {
    %c0_i32 = arith.constant 0 : i32
    %c0_i32_0 = arith.constant 0 : i32
    return %arg0, %arg2, %c0_i32, %arg1 : i32, i32, i32, i32
  }
}

module attributes {stable_mosaic.version = 11 : i64} {
  func.func @_bn_affine_kernel(%arg0: i32, %arg1: i32, %arg2: memref<1x32x128xbf16, #tpu.memory_space<vmem>>, %arg3: memref<1x128xf32, #tpu.memory_space<vmem>>, %arg4: memref<1x128xf32, #tpu.memory_space<vmem>>, %arg5: memref<1x32x128xbf16, #tpu.memory_space<vmem>>) attributes {dimension_semantics = [#tpu.dimension_semantics<parallel>, #tpu.dimension_semantics<parallel>], iteration_bounds = array<i64: 2, 1>, scalar_prefetch = 0 : i64, scratch_operands = 0 : i64, tpu.core_type = #tpu.core_type<tc>, window_params = [{transform_indices = @transform_0, window_bounds = array<i64: 1, 32, 128>}, {pipeline_mode = #tpu.pipeline_mode<synchronous>, transform_indices = @transform_1, window_bounds = array<i64: 1, 128>}, {pipeline_mode = #tpu.pipeline_mode<synchronous>, transform_indices = @transform_2, window_bounds = array<i64: 1, 128>}, {transform_indices = @transform_3, window_bounds = array<i64: 1, 32, 128>}]} {
    %c0 = arith.constant 0 : index
    %c0_0 = arith.constant 0 : index
    %c0_1 = arith.constant 0 : index
    %0 = vector.load %arg2[%c0, %c0_0, %c0_1] : memref<1x32x128xbf16, #tpu.memory_space<vmem>>, vector<1x32x128xbf16>
    %1 = arith.extf %0 : vector<1x32x128xbf16> to vector<1x32x128xf32>
    %c0_2 = arith.constant 0 : index
    %c0_3 = arith.constant 0 : index
    %2 = vector.load %arg3[%c0_2, %c0_3] : memref<1x128xf32, #tpu.memory_space<vmem>>, vector<1x128xf32>
    %3 = vector.shape_cast %2 : vector<1x128xf32> to vector<1x1x128xf32>
    %4 = vector.broadcast %3 : vector<1x1x128xf32> to vector<1x32x128xf32>
    %5 = arith.mulf %1, %4 : vector<1x32x128xf32>
    %c0_4 = arith.constant 0 : index
    %c0_5 = arith.constant 0 : index
    %6 = vector.load %arg4[%c0_4, %c0_5] : memref<1x128xf32, #tpu.memory_space<vmem>>, vector<1x128xf32>
    %7 = vector.shape_cast %6 : vector<1x128xf32> to vector<1x1x128xf32>
    %8 = vector.broadcast %7 : vector<1x1x128xf32> to vector<1x32x128xf32>
    %9 = arith.addf %5, %8 : vector<1x32x128xf32>
    %10 = arith.truncf %9 : vector<1x32x128xf32> to vector<1x32x128xbf16>
    %c0_6 = arith.constant 0 : index
    %c0_7 = arith.constant 0 : index
    %c0_8 = arith.constant 0 : index
    %11 = vector.load %arg5[%c0_6, %c0_7, %c0_8] : memref<1x32x128xbf16, #tpu.memory_space<vmem>>, vector<1x32x128xbf16>
    tpu.vector_store %arg5[%c0_6, %c0_7, %c0_8], %10 {strides = array<i32>} : memref<1x32x128xbf16, #tpu.memory_space<vmem>>, vector<1x32x128xbf16>,
    return
  }
  func.func @transform_0(%arg0: i32, %arg1: i32) -> (i32, i32, i32) {
    %c0_i32 = arith.constant 0 : i32
    %c0_i32_0 = arith.constant 0 : i32
    return %arg0, %arg1, %c0_i32 : i32, i32, i32
  }
  func.func @transform_1(%arg0: i32, %arg1: i32) -> (i32, i32) {
    %c0_i32 = arith.constant 0 : i32
    %c0_i32_0 = arith.constant 0 : i32
    %c0_i32_1 = arith.constant 0 : i32
    return %c0_i32, %c0_i32_0 : i32, i32
  }
  func.func @transform_2(%arg0: i32, %arg1: i32) -> (i32, i32) {
    %c0_i32 = arith.constant 0 : i32
    %c0_i32_0 = arith.constant 0 : i32
    %c0_i32_1 = arith.constant 0 : i32
    return %c0_i32, %c0_i32_0 : i32, i32
  }
  func.func @transform_3(%arg0: i32, %arg1: i32) -> (i32, i32, i32) {
    %c0_i32 = arith.constant 0 : i32
    %c0_i32_0 = arith.constant 0 : i32
    return %arg0, %arg1, %c0_i32 : i32, i32, i32
  }
}

</mosaic_0001>

<llo_original>
// kernel: slimmable_tdnn_forward.8
$region0: #{slimmable_tdnn_forward.8}
  #allocation0 [shape = 'u32[]', space=smem, size = 0x4, offset = 0x4, fixed_abs, tag = 'smem constant byte address 0x4 - core index']
  #allocation1 [shape = 'u32[144,128]{1,0:T(1,128)}', space=vmem, size = 0x12000, scoped, tag = 'internal scratch']
  %s0 = inlined_call_operand.vmem [shape: bf16[2,3,32,128], index: 0, kind: input, shape index: {}]
  %s1 = inlined_call_operand.vmem [shape: bf16[3,128,128], index: 1, kind: input, shape index: {}]
  %s2 = inlined_call_operand.vmem [shape: f32[1,128], index: 2, kind: input, shape index: {}]
  %s3 = inlined_call_operand.vmem [shape: bf16[2,32,128], index: 3, kind: output, shape index: {0}]
  %s4 = inlined_call_operand.vmem [shape: f32[2,1,8,128], index: 4, kind: output, shape index: {1}]
  %5 = xla_tuple %s3, %s4
  %s6 = sld [smem:[#allocation0]]
  $region53: #{slimmable_tdnn_forward.8} parent=0
    _
  %s8 = ssub.s32 1, %s6
  %s9 = scalar_select 0, %s8, %s6
  loop: start=0, step=1, limit=4
  $region2: #{slimmable_tdnn_forward.8} parent=0 // loop_pre_header
    _
  $region3: #{slimmable_tdnn_forward.8} parent=0 // loop_header
    %s11 = sphi 0, %s15
    %p12 = scmp.ge.s32.totalorder %s11, 4
    %s18 = sphi 0, %s37
    %s19 = sphi 0, %s33
    %s20 = sphi 0, %s29
    %s21 = sphi 0, %s18
    %s22 = sphi 0, %s19
    %s23 = sphi 0, %s20
    %s24 = sphi 0, %s21
    %s25 = sphi 0, %s22
    %s26 = sphi 0, %s23
    %s42 = sphi 0, %s44
    %s45 = sphi 0, %s42
    %s46 = sphi 0, %s45
    %s62 = sphi 0, %s46
    %s68 = sphi 0, %s70
    %s71 = sphi 0, %s68
    %s72 = sphi 0, %s71
    %s88 = sphi 0, %s72
    %s94 = sphi 0, %s96
    %s97 = sphi 0, %s94
    %s98 = sphi 0, %s97
    %s114 = sphi 0, %s98
    %s124 = sphi 0, %s126
    %s127 = sphi 0, %s124
    %s128 = sphi 0, %s127
    %s144 = sphi 0, %s128
    %s154 = sphi 0, %s156
    %s157 = sphi 0, %s154
    %s158 = sphi 0, %s157
    %s174 = sphi 0, %s158
  $region4: #{slimmable_tdnn_forward.8} parent=0 // loop_header_branch
    %14 = sbr.rel (%p12) target = $region8
  $region5: #{slimmable_tdnn_forward.8} parent=0 // loop_body
    %s16 = ssub.s32 %s11, 1
    %s17 = ssub.s32 %s11, 2
    %s27 = sadd.s32 1, %s20
    %p28 = scmp.ge.s32.totalorder %s27, 1
    %s29 = scalar_select %p28, 0, %s27
    %s30 = sadd.s32 1, %s19
    %s31 = scalar_select %p28, %s30, %s19
    %p32 = scmp.ge.s32.totalorder %s31, 1
    %s33 = scalar_select %p32, 0, %s31
    %s34 = sadd.s32 1, %s18
    %s35 = scalar_select %p32, %s34, %s18
    %p36 = scmp.ge.s32.totalorder %s35, 2
    %s37 = scalar_select %p36, 0, %s35
    %s38 = ssub.s32 %s18, %s37
    %s39 = ssub.s32 %s20, %s29
    %s40 = sor.u32 %s38, %s39
    %p41 = scmp.eq.s32.totalorder %s40, 0
    %s43 = sadd.s32 %s42, 1
    %s44 = scalar_select %p41, %s42, %s43
    %p47 = pneg %p41
    %p48 = scmp.eq.s32.totalorder %s11, 1
    %p49 = por %p47, %p48
    %p50 = scmp.ne.s32.totalorder %s42, %s45
    %p51 = scmp.eq.s32.totalorder %s11, 0
    %p52 = por %p50, %p51
    %p53 = scmp.ne.s32.totalorder %s42, %s45
    %p54 = scmp.eq.s32.totalorder %s16, 1
    %p55 = por %p53, %p54
    %p56 = scmp.ne.s32.totalorder %s45, %s46
    %p57 = scmp.eq.s32.totalorder %s16, 0
    %p58 = por %p56, %p57
    %p59 = scmp.ne.s32.totalorder %s45, %s46
    %p60 = scmp.eq.s32.totalorder %s17, 1
    %p61 = por %p59, %p60
    %p63 = scmp.ne.s32.totalorder %s46, %s62
    %p64 = scmp.eq.s32.totalorder %s17, 0
    %p65 = por %p63, %p64
    %s66 = ssub.s32 %s19, %s33
    %p67 = scmp.eq.s32.totalorder %s66, 0
    %s69 = sadd.s32 %s68, 1
    %s70 = scalar_select %p67, %s68, %s69
    %p73 = pneg %p67
    %p74 = scmp.eq.s32.totalorder %s11, 1
    %p75 = por %p73, %p74
    %p76 = scmp.ne.s32.totalorder %s68, %s71
    %p77 = scmp.eq.s32.totalorder %s11, 0
    %p78 = por %p76, %p77
    %p79 = scmp.ne.s32.totalorder %s68, %s71
    %p80 = scmp.eq.s32.totalorder %s16, 1
    %p81 = por %p79, %p80
    %p82 = scmp.ne.s32.totalorder %s71, %s72
    %p83 = scmp.eq.s32.totalorder %s16, 0
    %p84 = por %p82, %p83
    %p85 = scmp.ne.s32.totalorder %s71, %s72
    %p86 = scmp.eq.s32.totalorder %s17, 1
    %p87 = por %p85, %p86
    %p89 = scmp.ne.s32.totalorder %s72, %s88
    %p90 = scmp.eq.s32.totalorder %s17, 0
    %p91 = por %p89, %p90
    %s92 = ssub.s32 %s19, %s33
    %p93 = scmp.eq.s32.totalorder %s92, 0
    %s95 = sadd.s32 %s94, 1
    %s96 = scalar_select %p93, %s94, %s95
    %p99 = pneg %p93
    %p100 = scmp.eq.s32.totalorder %s11, 1
    %p101 = por %p99, %p100
    %p102 = scmp.ne.s32.totalorder %s94, %s97
    %p103 = scmp.eq.s32.totalorder %s11, 0
    %p104 = por %p102, %p103
    %p105 = scmp.ne.s32.totalorder %s94, %s97
    %p106 = scmp.eq.s32.totalorder %s16, 1
    %p107 = por %p105, %p106
    %p108 = scmp.ne.s32.totalorder %s97, %s98
    %p109 = scmp.eq.s32.totalorder %s16, 0
    %p110 = por %p108, %p109
    %p111 = scmp.ne.s32.totalorder %s97, %s98
    %p112 = scmp.eq.s32.totalorder %s17, 1
    %p113 = por %p111, %p112
    %p115 = scmp.ne.s32.totalorder %s98, %s114
    %p116 = scmp.eq.s32.totalorder %s17, 0
    %p117 = por %p115, %p116
    %s118 = ssub.s32 %s18, %s37
    %s119 = ssub.s32 %s20, %s29
    %s120 = sor.u32 %s118, %s119
    %s121 = ssub.s32 %s19, %s33
    %s122 = sor.u32 %s120, %s121
    %p123 = scmp.eq.s32.totalorder %s122, 0
    %s125 = sadd.s32 %s124, 1
    %s126 = scalar_select %p123, %s124, %s125
    %p129 = pneg %p123
    %p130 = scmp.eq.s32.totalorder %s11, 1
    %p131 = por %p129, %p130
    %p132 = scmp.ne.s32.totalorder %s124, %s127
    %p133 = scmp.eq.s32.totalorder %s11, 0
    %p134 = por %p132, %p133
    %p135 = scmp.ne.s32.totalorder %s124, %s127
    %p136 = scmp.eq.s32.totalorder %s16, 1
    %p137 = por %p135, %p136
    %p138 = scmp.ne.s32.totalorder %s127, %s128
    %p139 = scmp.eq.s32.totalorder %s16, 0
    %p140 = por %p138, %p139
    %p141 = scmp.ne.s32.totalorder %s127, %s128
    %p142 = scmp.eq.s32.totalorder %s17, 1
    %p143 = por %p141, %p142
    %p145 = scmp.ne.s32.totalorder %s128, %s144
    %p146 = scmp.eq.s32.totalorder %s17, 0
    %p147 = por %p145, %p146
    %s148 = ssub.s32 %s18, %s37
    %s149 = ssub.s32 %s20, %s29
    %s150 = sor.u32 %s148, %s149
    %s151 = ssub.s32 %s19, %s33
    %s152 = sor.u32 %s150, %s151
    %p153 = scmp.eq.s32.totalorder %s152, 0
    %s155 = sadd.s32 %s154, 1
    %s156 = scalar_select %p153, %s154, %s155
    %p159 = pneg %p153
    %p160 = scmp.eq.s32.totalorder %s11, 1
    %p161 = por %p159, %p160
    %p162 = scmp.ne.s32.totalorder %s154, %s157
    %p163 = scmp.eq.s32.totalorder %s11, 0
    %p164 = por %p162, %p163
    %p165 = scmp.ne.s32.totalorder %s154, %s157
    %p166 = scmp.eq.s32.totalorder %s16, 1
    %p167 = por %p165, %p166
    %p168 = scmp.ne.s32.totalorder %s157, %s158
    %p169 = scmp.eq.s32.totalorder %s16, 0
    %p170 = por %p168, %p169
    %p171 = scmp.ne.s32.totalorder %s157, %s158
    %p172 = scmp.eq.s32.totalorder %s17, 1
    %p173 = por %p171, %p172
    %p175 = scmp.ne.s32.totalorder %s158, %s174
    %p176 = scmp.eq.s32.totalorder %s17, 0
    %p177 = por %p175, %p176
    %p178 = scmp.le.s32.totalorder 1, %s11
    %p179 = scmp.lt.s32.totalorder %s11, 3
    %p180 = pnand %p178, %p179
    %p181 = pneg %p180
    // Predicated region
    $region9: #{slimmable_tdnn_forward.8} parent=5 // pred_check
      _
    $region10: #{slimmable_tdnn_forward.8} parent=5 // pred_check_branch
      %183 = sbr.rel (%p180) target = $region12
    $region11: #{slimmable_tdnn_forward.8} parent=5 // pred_region
      %s184 = ssub.s32 %s11, 1
      // Predicated region
      $region13: #{slimmable_tdnn_forward.8} parent=11 // pred_check
        %p185 = pneg %p84
      $region14: #{slimmable_tdnn_forward.8} parent=11 // pred_check_branch
        %187 = sbr.rel (%p185) target = $region16
      $region15: #{slimmable_tdnn_forward.8} parent=11 // pred_region
        %p188 = scmp.lt.s32.totalorder %s22, 0
        %s189 = scalar_select %p188, %s22, 0
        %s190 = smul.addr %s189, 4
        %s191 = scalar_lea.vmem %s1, %s190
      $region16: #{slimmable_tdnn_forward.8} parent=11 // pred_fallthru
        _
      // Predicated region
      $region17: #{slimmable_tdnn_forward.8} parent=11 // pred_check
        %p192 = pneg %p110
      $region18: #{slimmable_tdnn_forward.8} parent=11 // pred_check_branch
        %194 = sbr.rel (%p192) target = $region20
      $region19: #{slimmable_tdnn_forward.8} parent=11 // pred_region
        %p195 = scmp.lt.s32.totalorder %s22, 0
        %s196 = scalar_select %p195, %s22, 0
        %s197 = scalar_lea.vmem %s2, %s196
      $region20: #{slimmable_tdnn_forward.8} parent=11 // pred_fallthru
        _
    $region12: #{slimmable_tdnn_forward.8} parent=5 // pred_fallthru
      _
    %p198 = scmp.lt.s32.totalorder %s11, 2
    // Predicated region
    $region21: #{slimmable_tdnn_forward.8} parent=5 // pred_check
      %p199 = pneg %p198
    $region22: #{slimmable_tdnn_forward.8} parent=5 // pred_check_branch
      %201 = sbr.rel (%p199) target = $region24
    $region23: #{slimmable_tdnn_forward.8} parent=5 // pred_region
      // Predicated region
      $region25: #{slimmable_tdnn_forward.8} parent=23 // pred_check
        %p202 = pneg %p52
      $region26: #{slimmable_tdnn_forward.8} parent=23 // pred_check_branch
        %204 = sbr.rel (%p202) target = $region28
      $region27: #{slimmable_tdnn_forward.8} parent=23 // pred_region
        %s205 = smul.u32 4, %s20
        %p206 = scmp.lt.s32.totalorder %s18, 1
        %s207 = scalar_select %p206, %s18, 1
        %p208 = scmp.lt.s32.totalorder %s205, 3
        %s209 = scalar_select %p208, %s205, 3
        %s210 = smul.addr %s207, 12
        %s211 = sadd.s32 %s209, %s210
        %s212 = smul.addr %s211, 4
        %s213 = scalar_lea.vmem %s0, %s212
        %s214 = smul.u32 4, %s20
      $region28: #{slimmable_tdnn_forward.8} parent=23 // pred_fallthru
        _
    $region24: #{slimmable_tdnn_forward.8} parent=5 // pred_fallthru
      _
    %p215 = scmp.le.s32.totalorder 1, %s11
    %p216 = scmp.lt.s32.totalorder %s11, 3
    %p217 = pnand %p215, %p216
    %p218 = pneg %p217
    // Predicated region
    $region29: #{slimmable_tdnn_forward.8} parent=5 // pred_check
      _
    $region30: #{slimmable_tdnn_forward.8} parent=5 // pred_check_branch
      %220 = sbr.rel (%p217) target = $region32
    $region31: #{slimmable_tdnn_forward.8} parent=5 // pred_region
      %s221 = ssub.s32 %s11, 1
      %s222 = smul.u32 4, %s23
      %p223 = scmp.lt.s32.totalorder %s21, 1
      %s224 = scalar_select %p223, %s21, 1
      %p225 = scmp.lt.s32.totalorder %s222, 3
      %s226 = scalar_select %p225, %s222, 3
      %s227 = smul.addr %s224, 12
      %s228 = sadd.s32 %s226, %s227
      %s229 = smul.addr %s228, 4
      %s230 = scalar_lea.vmem %s0, %s229
      %p231 = pneg %p58
      %p232 = pneg %p55
      %p233 = scmp.lt.s32.totalorder %s22, 0
      %s234 = scalar_select %p233, %s22, 0
      %s235 = smul.addr %s234, 4
      %s236 = scalar_lea.vmem %s1, %s235
      %p237 = pneg %p84
      %p238 = pneg %p81
      %p239 = scmp.lt.s32.totalorder %s22, 0
      %s240 = scalar_select %p239, %s22, 0
      %s241 = scalar_lea.vmem %s2, %s240
      %p242 = pneg %p110
      %p243 = pneg %p107
      %p244 = pneg %p140
      %p245 = pneg %p137
      %s246 = smul.u32 4, %s23
      %p247 = scmp.lt.s32.totalorder %s21, 1
      %s248 = scalar_select %p247, %s21, 1
      %p249 = scmp.lt.s32.totalorder %s246, 3
      %s250 = scalar_select %p249, %s246, 3
      %p251 = scmp.lt.s32.totalorder %s22, 0
      %s252 = scalar_select %p251, %s22, 0
      %s253 = sadd.s32 %s252, %s250
      %s254 = smul.addr %s248, 4
      %s255 = sadd.s32 %s253, %s254
      %s256 = smul.addr %s255, 4
      %s257 = scalar_lea.vmem %s3, %s256
      %p258 = pneg %p170
      %p259 = pneg %p167
      %p260 = scmp.lt.s32.totalorder %s21, 1
      %s261 = scalar_select %p260, %s21, 1
      %p262 = scmp.lt.s32.totalorder %s23, 0
      %s263 = scalar_select %p262, %s23, 0
      %p264 = scmp.lt.s32.totalorder %s22, 0
      %s265 = scalar_select %p264, %s22, 0
      %s266 = sadd.s32 %s265, %s263
      %s267 = sadd.s32 %s266, %s261
      %s268 = smul.addr %s267, 8
      %s269 = scalar_lea.vmem %s4, %s268
      %s270 = smul.u32 4, %s23
      %p271 = scmp.lt.s32.totalorder %s21, 1
      %s272 = scalar_select %p271, %s21, 1
      %p273 = scmp.lt.s32.totalorder %s270, 3
      %s274 = scalar_select %p273, %s270, 3
      %s275 = smul.addr %s272, 12
      %s276 = sadd.s32 %s274, %s275
      %s277 = smul.addr %s276, 4
      %s278 = scalar_lea.vmem %s0, %s277
      %s279 = smul.u32 4, %s23
      %p280 = scmp.lt.s32.totalorder %s22, 0
      %s281 = scalar_select %p280, %s22, 0
      %s282 = smul.addr %s281, 4
      %s283 = scalar_lea.vmem %s1, %s282
      %p284 = scmp.lt.s32.totalorder %s22, 0
      %s285 = scalar_select %p284, %s22, 0
      %s286 = scalar_lea.vmem %s2, %s285
      %s287 = smul.u32 4, %s23
      %p288 = scmp.lt.s32.totalorder %s21, 1
      %s289 = scalar_select %p288, %s21, 1
      %p290 = scmp.lt.s32.totalorder %s287, 3
      %s291 = scalar_select %p290, %s287, 3
      %p292 = scmp.lt.s32.totalorder %s22, 0
      %s293 = scalar_select %p292, %s22, 0
      %s294 = sadd.s32 %s293, %s291
      %s295 = smul.addr %s289, 4
      %s296 = sadd.s32 %s294, %s295
      %s297 = smul.addr %s296, 4
      %s298 = scalar_lea.vmem %s3, %s297
      %s299 = smul.u32 4, %s23
      %p300 = scmp.lt.s32.totalorder %s21, 1
      %s301 = scalar_select %p300, %s21, 1
      %p302 = scmp.lt.s32.totalorder %s23, 0
      %s303 = scalar_select %p302, %s23, 0
      %p304 = scmp.lt.s32.totalorder %s22, 0
      %s305 = scalar_select %p304, %s22, 0
      %s306 = sadd.s32 %s305, %s303
      %s307 = sadd.s32 %s306, %s301
      %s308 = smul.addr %s307, 8
      %s309 = scalar_lea.vmem %s4, %s308
      %v311 = vld [vmem:[%s278] sm:$0xf]
      %v312 = vld [vmem:[%s278 + $0x4] sm:$0xf]
      %v313 = vld [vmem:[%s278 + $0x8] sm:$0xf]
      %v314 = vld [vmem:[%s278 + $0xc] sm:$0xf]
      %v315 = vld [vmem:[%s283] sm:$0xf]
      %v316 = vld [vmem:[%s283 + $0x4] sm:$0xf]
      %v317 = vld [vmem:[%s283 + $0x8] sm:$0xf]
      %v318 = vld [vmem:[%s283 + $0xc] sm:$0xf]
      %v319 = vld [vmem:[%s283 + $0x10] sm:$0xf]
      %v320 = vld [vmem:[%s283 + $0x14] sm:$0xf]
      %v321 = vld [vmem:[%s283 + $0x18] sm:$0xf]
      %v322 = vld [vmem:[%s283 + $0x1c] sm:$0xf]
      %v323 = vld [vmem:[%s283 + $0x20] sm:$0xf]
      %v324 = vld [vmem:[%s283 + $0x24] sm:$0xf]
      %v325 = vld [vmem:[%s283 + $0x28] sm:$0xf]
      %v326 = vld [vmem:[%s283 + $0x2c] sm:$0xf]
      %v327 = vld [vmem:[%s283 + $0x30] sm:$0xf]
      %v328 = vld [vmem:[%s283 + $0x34] sm:$0xf]
      %v329 = vld [vmem:[%s283 + $0x38] sm:$0xf]
      %v330 = vld [vmem:[%s283 + $0x3c] sm:$0xf]
      %s331 = scalar_lea.vmem %s278, 16
      %v332 = vld [vmem:[%s331] sm:$0xf]
      %v333 = vld [vmem:[%s331 + $0x4] sm:$0xf]
      %v334 = vld [vmem:[%s331 + $0x8] sm:$0xf]
      %v335 = vld [vmem:[%s331 + $0xc] sm:$0xf]
      %s336 = scalar_lea.vmem %s283, 64
      %v337 = vld [vmem:[%s336] sm:$0xf]
      %v338 = vld [vmem:[%s336 + $0x4] sm:$0xf]
      %v339 = vld [vmem:[%s336 + $0x8] sm:$0xf]
      %v340 = vld [vmem:[%s336 + $0xc] sm:$0xf]
      %v341 = vld [vmem:[%s336 + $0x10] sm:$0xf]
      %v342 = vld [vmem:[%s336 + $0x14] sm:$0xf]
      %v343 = vld [vmem:[%s336 + $0x18] sm:$0xf]
      %v344 = vld [vmem:[%s336 + $0x1c] sm:$0xf]
      %v345 = vld [vmem:[%s336 + $0x20] sm:$0xf]
      %v346 = vld [vmem:[%s336 + $0x24] sm:$0xf]
      %v347 = vld [vmem:[%s336 + $0x28] sm:$0xf]
      %v348 = vld [vmem:[%s336 + $0x2c] sm:$0xf]
      %v349 = vld [vmem:[%s336 + $0x30] sm:$0xf]
      %v350 = vld [vmem:[%s336 + $0x34] sm:$0xf]
      %v351 = vld [vmem:[%s336 + $0x38] sm:$0xf]
      %v352 = vld [vmem:[%s336 + $0x3c] sm:$0xf]
      %v357 = vunpack.c.l.b16 %v332
      %v358 = vunpack.c.l.b16 %v333
      %v359 = vunpack.c.l.b16 %v334
      %v360 = vunpack.c.l.b16 %v335
      %v361 = vpack.c.b16 %v358, %v357
      %v362 = vpack.c.b16 %v360, %v359
      %v381 = vunpack.c.l.b16 %v337
      %v382 = vunpack.c.l.b16 %v338
      %v383 = vunpack.c.l.b16 %v339
      %v384 = vunpack.c.l.b16 %v340
      %v385 = vunpack.c.l.b16 %v341
      %v386 = vunpack.c.l.b16 %v342
      %v387 = vunpack.c.l.b16 %v343
      %v388 = vunpack.c.l.b16 %v344
      %v389 = vunpack.c.l.b16 %v345
      %v390 = vunpack.c.l.b16 %v346
      %v391 = vunpack.c.l.b16 %v347
      %v392 = vunpack.c.l.b16 %v348
      %v393 = vunpack.c.l.b16 %v349
      %v394 = vunpack.c.l.b16 %v350
      %v395 = vunpack.c.l.b16 %v351
      %v396 = vunpack.c.l.b16 %v352
      %v397 = vpack.c.b16 %v382, %v381
      %v398 = vpack.c.b16 %v384, %v383
      %v399 = vpack.c.b16 %v386, %v385
      %v400 = vpack.c.b16 %v388, %v387
      %v401 = vpack.c.b16 %v390, %v389
      %v402 = vpack.c.b16 %v392, %v391
      %v403 = vpack.c.b16 %v394, %v393
      %v404 = vpack.c.b16 %v396, %v395
      %413 = vmatprep.subr.bf16.mxu0 0
      %414 = vmatpush1.bf16.msra.mxu0 %v404
      %415 = vmatprep.subr.bf16.mxu0 0
      %416 = vmatpush1.bf16.msra.mxu0 %v403
      %417 = vmatprep.subr.bf16.mxu0 0
      %418 = vmatpush1.bf16.msra.mxu0 %v402
      %419 = vmatprep.subr.bf16.mxu0 0
      %420 = vmatpush1.bf16.msra.mxu0 %v401
      %421 = vmatprep.subr.bf16.mxu0 0
      %422 = vmatpush1.bf16.msra.mxu0 %v400
      %423 = vmatprep.subr.bf16.mxu0 0
      %424 = vmatpush1.bf16.msra.mxu0 %v399
      %425 = vmatprep.subr.bf16.mxu0 0
      %426 = vmatpush1.bf16.msra.mxu0 %v398
      %427 = vmatprep.subr.bf16.mxu0 0
      %428 = vmatpush1.bf16.msra.mxu0 %v397
      %429 = vmatprep.subr.bf16.mxu0 0
      %430 = vmatpush2.bf16.msra.mxu0 0
      %431 = vmatprep.subr.bf16.mxu0 0
      %432 = vmatpush2.bf16.msra.mxu0 0
      %433 = vmatprep.subr.bf16.mxu0 0
      %434 = vmatpush2.bf16.msra.mxu0 0
      %435 = vmatprep.subr.bf16.mxu0 0
      %436 = vmatpush2.bf16.msra.mxu0 0
      %437 = vmatprep.subr.bf16.mxu0 0
      %438 = vmatpush2.bf16.msra.mxu0 0
      %439 = vmatprep.subr.bf16.mxu0 0
      %440 = vmatpush2.bf16.msra.mxu0 0
      %441 = vmatprep.subr.bf16.mxu0 0
      %442 = vmatpush2.bf16.msra.mxu0 0
      %443 = vmatprep.subr.bf16.mxu0 0
      %444 = vmatpush2.bf16.msra.mxu0 0
      %445 = vmatprep.mubr.bf16.mxu0 0
      %446 = vmatmul.mubr.bf16.gmra.mxu0 %v361
      %v447 = vpop.f32.mrf.mxu0
      %v448 = vadd.f32 0.0, %v447
      %v449 = vpop.f32.mrf.mxu0
      %v450 = vpop.f32.mrf.mxu0
      %v451 = vadd.f32 0.0, %v450
      %v452 = vpop.f32.mrf.mxu0
      %453 = vmatprep.mubr.bf16.mxu0 0
      %454 = vmatmul.mubr.bf16.gmra.mxu0 %v362
      %v455 = vpop.f32.mrf.mxu0
      %v456 = vadd.f32 0.0, %v455
      %v457 = vpop.f32.mrf.mxu0
      %v458 = vpop.f32.mrf.mxu0
      %v459 = vadd.f32 0.0, %v458
      %v460 = vpop.f32.mrf.mxu0
      %461 = vdwg.mxu0
      %v466 = vunpack.c.l.b16 %v311
      %v467 = vunpack.c.l.b16 %v312
      %v468 = vunpack.c.l.b16 %v313
      %v469 = vunpack.c.l.b16 %v314
      %v470 = vpack.c.b16 %v467, %v466
      %v471 = vpack.c.b16 %v469, %v468
      %v490 = vunpack.c.l.b16 %v315
      %v491 = vunpack.c.l.b16 %v316
      %v492 = vunpack.c.l.b16 %v317
      %v493 = vunpack.c.l.b16 %v318
      %v494 = vunpack.c.l.b16 %v319
      %v495 = vunpack.c.l.b16 %v320
      %v496 = vunpack.c.l.b16 %v321
      %v497 = vunpack.c.l.b16 %v322
      %v498 = vunpack.c.l.b16 %v323
      %v499 = vunpack.c.l.b16 %v324
      %v500 = vunpack.c.l.b16 %v325
      %v501 = vunpack.c.l.b16 %v326
      %v502 = vunpack.c.l.b16 %v327
      %v503 = vunpack.c.l.b16 %v328
      %v504 = vunpack.c.l.b16 %v329
      %v505 = vunpack.c.l.b16 %v330
      %v506 = vpack.c.b16 %v491, %v490
      %v507 = vpack.c.b16 %v493, %v492
      %v508 = vpack.c.b16 %v495, %v494
      %v509 = vpack.c.b16 %v497, %v496
      %v510 = vpack.c.b16 %v499, %v498
      %v511 = vpack.c.b16 %v501, %v500
      %v512 = vpack.c.b16 %v503, %v502
      %v513 = vpack.c.b16 %v505, %v504
      %522 = vmatprep.subr.bf16.mxu0 0
      %523 = vmatpush1.bf16.msra.mxu0 %v513
      %524 = vmatprep.subr.bf16.mxu0 0
      %525 = vmatpush1.bf16.msra.mxu0 %v512
      %526 = vmatprep.subr.bf16.mxu0 0
      %527 = vmatpush1.bf16.msra.mxu0 %v511
      %528 = vmatprep.subr.bf16.mxu0 0
      %529 = vmatpush1.bf16.msra.mxu0 %v510
      %530 = vmatprep.subr.bf16.mxu0 0
      %531 = vmatpush1.bf16.msra.mxu0 %v509
      %532 = vmatprep.subr.bf16.mxu0 0
      %533 = vmatpush1.bf16.msra.mxu0 %v508
      %534 = vmatprep.subr.bf16.mxu0 0
      %535 = vmatpush1.bf16.msra.mxu0 %v507
      %536 = vmatprep.subr.bf16.mxu0 0
      %537 = vmatpush1.bf16.msra.mxu0 %v506
      %538 = vmatprep.subr.bf16.mxu0 0
      %539 = vmatpush2.bf16.msra.mxu0 0
      %540 = vmatprep.subr.bf16.mxu0 0
      %541 = vmatpush2.bf16.msra.mxu0 0
      %542 = vmatprep.subr.bf16.mxu0 0
      %543 = vmatpush2.bf16.msra.mxu0 0
      %544 = vmatprep.subr.bf16.mxu0 0
      %545 = vmatpush2.bf16.msra.mxu0 0
      %546 = vmatprep.subr.bf16.mxu0 0
      %547 = vmatpush2.bf16.msra.mxu0 0
      %548 = vmatprep.subr.bf16.mxu0 0
      %549 = vmatpush2.bf16.msra.mxu0 0
      %550 = vmatprep.subr.bf16.mxu0 0
      %551 = vmatpush2.bf16.msra.mxu0 0
      %552 = vmatprep.subr.bf16.mxu0 0
      %553 = vmatpush2.bf16.msra.mxu0 0
      %554 = vmatprep.mubr.bf16.mxu0 0
      %555 = vmatmul.mubr.bf16.gmra.mxu0 %v470
      %v556 = vpop.f32.mrf.mxu0
      %v557 = vadd.f32 %v448, %v556
      %v558 = vpop.f32.mrf.mxu0
      %v559 = vpop.f32.mrf.mxu0
      %v560 = vadd.f32 %v451, %v559
      %v561 = vpop.f32.mrf.mxu0
      %562 = vmatprep.mubr.bf16.mxu0 0
      %563 = vmatmul.mubr.bf16.gmra.mxu0 %v471
      %v564 = vpop.f32.mrf.mxu0
      %v565 = vadd.f32 %v456, %v564
      %v566 = vpop.f32.mrf.mxu0
      %v567 = vpop.f32.mrf.mxu0
      %v568 = vadd.f32 %v459, %v567
      %v569 = vpop.f32.mrf.mxu0
      %570 = vdwg.mxu0
      %s571 = scalar_lea.vmem %s278, 32
      %v572 = vld [vmem:[%s571] sm:$0xf]
      %v573 = vld [vmem:[%s571 + $0x4] sm:$0xf]
      %v574 = vld [vmem:[%s571 + $0x8] sm:$0xf]
      %v575 = vld [vmem:[%s571 + $0xc] sm:$0xf]
      %s576 = scalar_lea.vmem %s283, 128
      %v577 = vld [vmem:[%s576] sm:$0xf]
      %v578 = vld [vmem:[%s576 + $0x4] sm:$0xf]
      %v579 = vld [vmem:[%s576 + $0x8] sm:$0xf]
      %v580 = vld [vmem:[%s576 + $0xc] sm:$0xf]
      %v581 = vld [vmem:[%s576 + $0x10] sm:$0xf]
      %v582 = vld [vmem:[%s576 + $0x14] sm:$0xf]
      %v583 = vld [vmem:[%s576 + $0x18] sm:$0xf]
      %v584 = vld [vmem:[%s576 + $0x1c] sm:$0xf]
      %v585 = vld [vmem:[%s576 + $0x20] sm:$0xf]
      %v586 = vld [vmem:[%s576 + $0x24] sm:$0xf]
      %v587 = vld [vmem:[%s576 + $0x28] sm:$0xf]
      %v588 = vld [vmem:[%s576 + $0x2c] sm:$0xf]
      %v589 = vld [vmem:[%s576 + $0x30] sm:$0xf]
      %v590 = vld [vmem:[%s576 + $0x34] sm:$0xf]
      %v591 = vld [vmem:[%s576 + $0x38] sm:$0xf]
      %v592 = vld [vmem:[%s576 + $0x3c] sm:$0xf]
      %v597 = vunpack.c.l.b16 %v572
      %v598 = vunpack.c.l.b16 %v573
      %v599 = vunpack.c.l.b16 %v574
      %v600 = vunpack.c.l.b16 %v575
      %v601 = vpack.c.b16 %v598, %v597
      %v602 = vpack.c.b16 %v600, %v599
      %v621 = vunpack.c.l.b16 %v577
      %v622 = vunpack.c.l.b16 %v578
      %v623 = vunpack.c.l.b16 %v579
      %v624 = vunpack.c.l.b16 %v580
      %v625 = vunpack.c.l.b16 %v581
      %v626 = vunpack.c.l.b16 %v582
      %v627 = vunpack.c.l.b16 %v583
      %v628 = vunpack.c.l.b16 %v584
      %v629 = vunpack.c.l.b16 %v585
      %v630 = vunpack.c.l.b16 %v586
      %v631 = vunpack.c.l.b16 %v587
      %v632 = vunpack.c.l.b16 %v588
      %v633 = vunpack.c.l.b16 %v589
      %v634 = vunpack.c.l.b16 %v590
      %v635 = vunpack.c.l.b16 %v591
      %v636 = vunpack.c.l.b16 %v592
      %v637 = vpack.c.b16 %v622, %v621
      %v638 = vpack.c.b16 %v624, %v623
      %v639 = vpack.c.b16 %v626, %v625
      %v640 = vpack.c.b16 %v628, %v627
      %v641 = vpack.c.b16 %v630, %v629
      %v642 = vpack.c.b16 %v632, %v631
      %v643 = vpack.c.b16 %v634, %v633
      %v644 = vpack.c.b16 %v636, %v635
      %653 = vmatprep.subr.bf16.mxu0 0
      %654 = vmatpush1.bf16.msra.mxu0 %v644
      %655 = vmatprep.subr.bf16.mxu0 0
      %656 = vmatpush1.bf16.msra.mxu0 %v643
      %657 = vmatprep.subr.bf16.mxu0 0
      %658 = vmatpush1.bf16.msra.mxu0 %v642
      %659 = vmatprep.subr.bf16.mxu0 0
      %660 = vmatpush1.bf16.msra.mxu0 %v641
      %661 = vmatprep.subr.bf16.mxu0 0
      %662 = vmatpush1.bf16.msra.mxu0 %v640
      %663 = vmatprep.subr.bf16.mxu0 0
      %664 = vmatpush1.bf16.msra.mxu0 %v639
      %665 = vmatprep.subr.bf16.mxu0 0
      %666 = vmatpush1.bf16.msra.mxu0 %v638
      %667 = vmatprep.subr.bf16.mxu0 0
      %668 = vmatpush1.bf16.msra.mxu0 %v637
      %669 = vmatprep.subr.bf16.mxu0 0
      %670 = vmatpush2.bf16.msra.mxu0 0
      %671 = vmatprep.subr.bf16.mxu0 0
      %672 = vmatpush2.bf16.msra.mxu0 0
      %673 = vmatprep.subr.bf16.mxu0 0
      %674 = vmatpush2.bf16.msra.mxu0 0
      %675 = vmatprep.subr.bf16.mxu0 0
      %676 = vmatpush2.bf16.msra.mxu0 0
      %677 = vmatprep.subr.bf16.mxu0 0
      %678 = vmatpush2.bf16.msra.mxu0 0
      %679 = vmatprep.subr.bf16.mxu0 0
      %680 = vmatpush2.bf16.msra.mxu0 0
      %681 = vmatprep.subr.bf16.mxu0 0
      %682 = vmatpush2.bf16.msra.mxu0 0
      %683 = vmatprep.subr.bf16.mxu0 0
      %684 = vmatpush2.bf16.msra.mxu0 0
      %685 = vmatprep.mubr.bf16.mxu0 0
      %686 = vmatmul.mubr.bf16.gmra.mxu0 %v601
      %v687 = vpop.f32.mrf.mxu0
      %v688 = vadd.f32 0.0, %v687
      %v689 = vpop.f32.mrf.mxu0
      %v690 = vpop.f32.mrf.mxu0
      %v691 = vadd.f32 0.0, %v690
      %v692 = vpop.f32.mrf.mxu0
      %693 = vmatprep.mubr.bf16.mxu0 0
      %694 = vmatmul.mubr.bf16.gmra.mxu0 %v602
      %v695 = vpop.f32.mrf.mxu0
      %v696 = vadd.f32 0.0, %v695
      %v697 = vpop.f32.mrf.mxu0
      %v698 = vpop.f32.mrf.mxu0
      %v699 = vadd.f32 0.0, %v698
      %v700 = vpop.f32.mrf.mxu0
      %701 = vdwg.mxu0
      %v702 = vadd.f32 %v557, %v688
      %v703 = vadd.f32 %v560, %v691
      %v704 = vadd.f32 %v565, %v696
      %v705 = vadd.f32 %v568, %v699
      %v706 = vld [vmem:[%s286] sm:$0x1]
      %v708 = vlaneseq
      %v709 = vshrl.u32 %v708, 7
      %v710 = vsub.s32 0, %v709
      %v711 = vrot.slane %v706, %v710
      %v713 = vadd.f32 %v702, %v711
      %v714 = vadd.f32 %v703, %v711
      %v715 = vadd.f32 %v704, %v711
      %v716 = vadd.f32 %v705, %v711
      %v717 = vmax.f32 %v713, 0.0
      %v718 = vmax.f32 %v714, 0.0
      %v719 = vmax.f32 %v715, 0.0
      %v720 = vmax.f32 %v716, 0.0
      %v721 = vpack.c.bf16 %v718, %v717
      %v722 = vpack.c.bf16 %v720, %v719
      %v725 = vunpack.c.l.b16 %v721
      %v726 = vunpack.c.h.b16 %v721
      %v727 = vunpack.c.l.b16 %v722
      %v728 = vunpack.c.h.b16 %v722
      %v729 = vpack.c.b16 %v725, %v725
      %v730 = vpack.c.b16 %v726, %v726
      %v731 = vpack.c.b16 %v727, %v727
      %v732 = vpack.c.b16 %v728, %v728
      %737 = vst [vmem:[%s298] sm:$0xf] %v729
      %738 = vst [vmem:[%s298 + $0x4] sm:$0xf] %v730
      %739 = vst [vmem:[%s298 + $0x8] sm:$0xf] %v731
      %740 = vst [vmem:[%s298 + $0xc] sm:$0xf] %v732
      %v741 = vlaneseq
      %v742 = vshrl.u32 %v741, 7
      %v743 = vlaneseq
      %v744 = vand.u32 %v743, 127
      %s745 = smul.u32 %s23, 32
      %v746 = vstv %s745
      %v747 = vadd.s32 %v744, %v746
      %vm748 = vcmp.lt.s32.totalorder %v747, 18
      %vm749 = vcmp.eq.s32.totalorder %v742, 0
      %vm750 = vmand %vm748, %vm749
      %v751 = vsel %vm750, 1.0, 0.0
      %vm752 = vcmp.eq.s32.totalorder %v742, 1
      %vm753 = vmand %vm748, %vm752
      %v754 = vsel %vm753, 1.0, 0.0
      %v755 = vmul.f32 %v717, %v717
      %v756 = vmul.f32 %v718, %v718
      %v757 = vmul.f32 %v719, %v719
      %v758 = vmul.f32 %v720, %v720
      %vm759 = vcmask 261120
      %v761 = vsel %vm759, %v754, 0
      %763 = vmatprep.subr.mxu0 0.0
      %764 = vmatpush1.msra.mxu0 0.0
      %765 = vmatprep.subr.mxu0 0.0
      %766 = vmatpush1.msra.mxu0 0.0
      %767 = vmatprep.subr.mxu0 0.0
      %768 = vmatpush1.msra.mxu0 0.0
      %769 = vmatprep.subr.mxu0 0.0
      %770 = vmatpush1.msra.mxu0 0.0
      %771 = vmatprep.subr.mxu0 0.0
      %772 = vmatpush1.msra.mxu0 0.0
      %773 = vmatprep.subr.mxu0 0.0
      %774 = vmatpush1.msra.mxu0 0.0
      %775 = vmatprep.subr.mxu0 0.0
      %776 = vmatpush1.msra.mxu0 0.0
      %777 = vmatprep.subr.mxu0 0.0
      %778 = vmatpush1.msra.mxu0 0.0
      %779 = vmatprep.subr.mxu0 0.0
      %780 = vmatpush1.msra.mxu0 0.0
      %781 = vmatprep.subr.mxu0 0.0
      %782 = vmatpush1.msra.mxu0 0.0
      %783 = vmatprep.subr.mxu0 0.0
      %784 = vmatpush1.msra.mxu0 0.0
      %785 = vmatprep.subr.mxu0 0.0
      %786 = vmatpush1.msra.mxu0 0.0
      %787 = vmatprep.subr.mxu0 0.0
      %788 = vmatpush1.msra.mxu0 %v758
      %789 = vmatprep.subr.mxu0 0.0
      %790 = vmatpush1.msra.mxu0 %v757
      %791 = vmatprep.subr.mxu0 0.0
      %792 = vmatpush1.msra.mxu0 %v756
      %793 = vmatprep.subr.mxu0 0.0
      %794 = vmatpush1.msra.mxu0 %v755
      %795 = vmatprep.subr.mxu0 0.0
      %796 = vmatpush2.msra.mxu0 0.0
      %797 = vmatprep.subr.mxu0 0.0
      %798 = vmatpush2.msra.mxu0 0.0
      %799 = vmatprep.subr.mxu0 0.0
      %800 = vmatpush2.msra.mxu0 0.0
      %801 = vmatprep.subr.mxu0 0.0
      %802 = vmatpush2.msra.mxu0 0.0
      %803 = vmatprep.subr.mxu0 0.0
      %804 = vmatpush2.msra.mxu0 0.0
      %805 = vmatprep.subr.mxu0 0.0
      %806 = vmatpush2.msra.mxu0 0.0
      %807 = vmatprep.subr.mxu0 0.0
      %808 = vmatpush2.msra.mxu0 0.0
      %809 = vmatprep.subr.mxu0 0.0
      %810 = vmatpush2.msra.mxu0 0.0
      %811 = vmatprep.subr.mxu0 0.0
      %812 = vmatpush2.msra.mxu0 0.0
      %813 = vmatprep.subr.mxu0 0.0
      %814 = vmatpush2.msra.mxu0 0.0
      %815 = vmatprep.subr.mxu0 0.0
      %816 = vmatpush2.msra.mxu0 0.0
      %817 = vmatprep.subr.mxu0 0.0
      %818 = vmatpush2.msra.mxu0 0.0
      %819 = vmatprep.subr.mxu0 0.0
      %820 = vmatpush2.msra.mxu0 0.0
      %821 = vmatprep.subr.mxu0 0.0
      %822 = vmatpush2.msra.mxu0 0.0
      %823 = vmatprep.subr.mxu0 0.0
      %824 = vmatpush2.msra.mxu0 0.0
      %825 = vmatprep.subr.mxu0 0.0
      %826 = vmatpush2.msra.mxu0 0.0
      %827 = vmatprep.mubr.f32.mxu0 0.0
      %828 = vmatmul.mubr.f32.gmra.mxu0 %v761
      %v829 = vpop.f32.mrf.mxu0
      %v830 = vadd.f32 0.0, %v829
      %v831 = vpop.f32.mrf.mxu0
      %832 = vdwg.mxu0
      %v834 = vsel %vm759, %v751, 0
      %836 = vmatprep.subr.mxu0 0.0
      %837 = vmatpush1.msra.mxu0 0.0
      %838 = vmatprep.subr.mxu0 0.0
      %839 = vmatpush1.msra.mxu0 0.0
      %840 = vmatprep.subr.mxu0 0.0
      %841 = vmatpush1.msra.mxu0 0.0
      %842 = vmatprep.subr.mxu0 0.0
      %843 = vmatpush1.msra.mxu0 0.0
      %844 = vmatprep.subr.mxu0 0.0
      %845 = vmatpush1.msra.mxu0 0.0
      %846 = vmatprep.subr.mxu0 0.0
      %847 = vmatpush1.msra.mxu0 0.0
      %848 = vmatprep.subr.mxu0 0.0
      %849 = vmatpush1.msra.mxu0 0.0
      %850 = vmatprep.subr.mxu0 0.0
      %851 = vmatpush1.msra.mxu0 0.0
      %852 = vmatprep.subr.mxu0 0.0
      %853 = vmatpush1.msra.mxu0 0.0
      %854 = vmatprep.subr.mxu0 0.0
      %855 = vmatpush1.msra.mxu0 0.0
      %856 = vmatprep.subr.mxu0 0.0
      %857 = vmatpush1.msra.mxu0 0.0
      %858 = vmatprep.subr.mxu0 0.0
      %859 = vmatpush1.msra.mxu0 0.0
      %860 = vmatprep.subr.mxu0 0.0
      %861 = vmatpush1.msra.mxu0 %v720
      %862 = vmatprep.subr.mxu0 0.0
      %863 = vmatpush1.msra.mxu0 %v719
      %864 = vmatprep.subr.mxu0 0.0
      %865 = vmatpush1.msra.mxu0 %v718
      %866 = vmatprep.subr.mxu0 0.0
      %867 = vmatpush1.msra.mxu0 %v717
      %868 = vmatprep.subr.mxu0 0.0
      %869 = vmatpush2.msra.mxu0 0.0
      %870 = vmatprep.subr.mxu0 0.0
      %871 = vmatpush2.msra.mxu0 0.0
      %872 = vmatprep.subr.mxu0 0.0
      %873 = vmatpush2.msra.mxu0 0.0
      %874 = vmatprep.subr.mxu0 0.0
      %875 = vmatpush2.msra.mxu0 0.0
      %876 = vmatprep.subr.mxu0 0.0
      %877 = vmatpush2.msra.mxu0 0.0
      %878 = vmatprep.subr.mxu0 0.0
      %879 = vmatpush2.msra.mxu0 0.0
      %880 = vmatprep.subr.mxu0 0.0
      %881 = vmatpush2.msra.mxu0 0.0
      %882 = vmatprep.subr.mxu0 0.0
      %883 = vmatpush2.msra.mxu0 0.0
      %884 = vmatprep.subr.mxu0 0.0
      %885 = vmatpush2.msra.mxu0 0.0
      %886 = vmatprep.subr.mxu0 0.0
      %887 = vmatpush2.msra.mxu0 0.0
      %888 = vmatprep.subr.mxu0 0.0
      %889 = vmatpush2.msra.mxu0 0.0
      %890 = vmatprep.subr.mxu0 0.0
      %891 = vmatpush2.msra.mxu0 0.0
      %892 = vmatprep.subr.mxu0 0.0
      %893 = vmatpush2.msra.mxu0 0.0
      %894 = vmatprep.subr.mxu0 0.0
      %895 = vmatpush2.msra.mxu0 0.0
      %896 = vmatprep.subr.mxu0 0.0
      %897 = vmatpush2.msra.mxu0 0.0
      %898 = vmatprep.subr.mxu0 0.0
      %899 = vmatpush2.msra.mxu0 0.0
      %900 = vmatprep.mubr.f32.mxu0 0.0
      %901 = vmatmul.mubr.f32.gmra.mxu0 %v834
      %v902 = vpop.f32.mrf.mxu0
      %v903 = vadd.f32 %v830, %v902
      %v904 = vpop.f32.mrf.mxu0
      %905 = vdwg.mxu0
      %906 = vst [vmem:[%s309] sm:$0xff] %v903
      %s907 = smul.u32 4, %s23
      %p908 = scmp.lt.s32.totalorder %s21, 1
      %s909 = scalar_select %p908, %s21, 1
      %p910 = scmp.lt.s32.totalorder %s907, 3
      %s911 = scalar_select %p910, %s907, 3
      %p912 = scmp.lt.s32.totalorder %s22, 0
      %s913 = scalar_select %p912, %s22, 0
      %s914 = sadd.s32 %s913, %s911
      %s915 = smul.addr %s909, 4
      %s916 = sadd.s32 %s914, %s915
      %s917 = smul.addr %s916, 4
      %s918 = scalar_lea.vmem %s3, %s917
      %p919 = scmp.lt.s32.totalorder %s21, 1
      %s920 = scalar_select %p919, %s21, 1
      %p921 = scmp.lt.s32.totalorder %s23, 0
      %s922 = scalar_select %p921, %s23, 0
      %p923 = scmp.lt.s32.totalorder %s22, 0
      %s924 = scalar_select %p923, %s22, 0
      %s925 = sadd.s32 %s924, %s922
      %s926 = sadd.s32 %s925, %s920
      %s927 = smul.addr %s926, 8
      %s928 = scalar_lea.vmem %s4, %s927
      // Predicated region
      $region33: #{slimmable_tdnn_forward.8} parent=31 // pred_check
        %p929 = pneg %p137
      $region34: #{slimmable_tdnn_forward.8} parent=31 // pred_check_branch
        %931 = sbr.rel (%p929) target = $region36
      $region35: #{slimmable_tdnn_forward.8} parent=31 // pred_region
        %s932 = smul.u32 4, %s23
      $region36: #{slimmable_tdnn_forward.8} parent=31 // pred_fallthru
        _
      // Predicated region
      $region37: #{slimmable_tdnn_forward.8} parent=31 // pred_check
        %p933 = pneg %p167
      $region38: #{slimmable_tdnn_forward.8} parent=31 // pred_check_branch
        %935 = sbr.rel (%p933) target = $region40
      $region39: #{slimmable_tdnn_forward.8} parent=31 // pred_region
        _
      $region40: #{slimmable_tdnn_forward.8} parent=31 // pred_fallthru
        _
    $region32: #{slimmable_tdnn_forward.8} parent=5 // pred_fallthru
      _
    %p936 = scmp.le.s32.totalorder 2, %s11
    // Predicated region
    $region41: #{slimmable_tdnn_forward.8} parent=5 // pred_check
      %p937 = pneg %p936
    $region42: #{slimmable_tdnn_forward.8} parent=5 // pred_check_branch
      %939 = sbr.rel (%p937) target = $region44
    $region43: #{slimmable_tdnn_forward.8} parent=5 // pred_region
      %s940 = ssub.s32 %s11, 2
      // Predicated region
      $region45: #{slimmable_tdnn_forward.8} parent=43 // pred_check
        %p941 = pneg %p143
      $region46: #{slimmable_tdnn_forward.8} parent=43 // pred_check_branch
        %943 = sbr.rel (%p941) target = $region48
      $region47: #{slimmable_tdnn_forward.8} parent=43 // pred_region
        %s944 = smul.u32 4, %s26
        %p945 = scmp.lt.s32.totalorder %s24, 1
        %s946 = scalar_select %p945, %s24, 1
        %p947 = scmp.lt.s32.totalorder %s944, 3
        %s948 = scalar_select %p947, %s944, 3
        %p949 = scmp.lt.s32.totalorder %s25, 0
        %s950 = scalar_select %p949, %s25, 0
        %s951 = sadd.s32 %s950, %s948
        %s952 = smul.addr %s946, 4
        %s953 = sadd.s32 %s951, %s952
        %s954 = smul.addr %s953, 4
        %s955 = scalar_lea.vmem %s3, %s954
      $region48: #{slimmable_tdnn_forward.8} parent=43 // pred_fallthru
        _
      // Predicated region
      $region49: #{slimmable_tdnn_forward.8} parent=43 // pred_check
        %p956 = pneg %p173
      $region50: #{slimmable_tdnn_forward.8} parent=43 // pred_check_branch
        %958 = sbr.rel (%p956) target = $region52
      $region51: #{slimmable_tdnn_forward.8} parent=43 // pred_region
        %p959 = scmp.lt.s32.totalorder %s24, 1
        %s960 = scalar_select %p959, %s24, 1
        %p961 = scmp.lt.s32.totalorder %s26, 0
        %s962 = scalar_select %p961, %s26, 0
        %p963 = scmp.lt.s32.totalorder %s25, 0
        %s964 = scalar_select %p963, %s25, 0
        %s965 = sadd.s32 %s964, %s962
        %s966 = sadd.s32 %s965, %s960
        %s967 = smul.addr %s966, 8
        %s968 = scalar_lea.vmem %s4, %s967
      $region52: #{slimmable_tdnn_forward.8} parent=43 // pred_fallthru
        _
    $region44: #{slimmable_tdnn_forward.8} parent=5 // pred_fallthru
      _
  $region6: #{slimmable_tdnn_forward.8} parent=0 // loop_footer
    %s15 = sadd.s32 1, %s11
  $region7: #{slimmable_tdnn_forward.8} parent=0 // loop_footer_branch
    %10 = sbr.rel target = $region3
  $region8: #{slimmable_tdnn_forward.8} parent=0 // loop_exit
    _

// kernel: slimmable_tdnn_forward.7
$region0: #{slimmable_tdnn_forward.7}
  #allocation0 [shape = 'u32[]', space=smem, size = 0x4, offset = 0x4, fixed_abs, tag = 'smem constant byte address 0x4 - core index']
  #allocation1 [shape = 'u32[144,128]{1,0:T(1,128)}', space=vmem, size = 0x12000, scoped, tag = 'internal scratch']
  %s0 = inlined_call_operand.vmem [shape: bf16[2,3,32,128], index: 0, kind: input, shape index: {}]
  %s1 = inlined_call_operand.vmem [shape: bf16[3,128,128], index: 1, kind: input, shape index: {}]
  %s2 = inlined_call_operand.vmem [shape: f32[1,128], index: 2, kind: input, shape index: {}]
  %s3 = inlined_call_operand.vmem [shape: bf16[2,32,128], index: 3, kind: output, shape index: {0}]
  %s4 = inlined_call_operand.vmem [shape: f32[2,1,8,128], index: 4, kind: output, shape index: {1}]
  %5 = xla_tuple %s3, %s4
  %s6 = sld [smem:[#allocation0]]
  $region53: #{slimmable_tdnn_forward.7} parent=0
    _
  %s8 = ssub.s32 1, %s6
  %s9 = scalar_select 0, %s8, %s6
  loop: start=0, step=1, limit=4
  $region2: #{slimmable_tdnn_forward.7} parent=0 // loop_pre_header
    _
  $region3: #{slimmable_tdnn_forward.7} parent=0 // loop_header
    %s11 = sphi 0, %s15
    %p12 = scmp.ge.s32.totalorder %s11, 4
    %s18 = sphi 0, %s37
    %s19 = sphi 0, %s33
    %s20 = sphi 0, %s29
    %s21 = sphi 0, %s18
    %s22 = sphi 0, %s19
    %s23 = sphi 0, %s20
    %s24 = sphi 0, %s21
    %s25 = sphi 0, %s22
    %s26 = sphi 0, %s23
    %s42 = sphi 0, %s44
    %s45 = sphi 0, %s42
    %s46 = sphi 0, %s45
    %s62 = sphi 0, %s46
    %s68 = sphi 0, %s70
    %s71 = sphi 0, %s68
    %s72 = sphi 0, %s71
    %s88 = sphi 0, %s72
    %s94 = sphi 0, %s96
    %s97 = sphi 0, %s94
    %s98 = sphi 0, %s97
    %s114 = sphi 0, %s98
    %s124 = sphi 0, %s126
    %s127 = sphi 0, %s124
    %s128 = sphi 0, %s127
    %s144 = sphi 0, %s128
    %s154 = sphi 0, %s156
    %s157 = sphi 0, %s154
    %s158 = sphi 0, %s157
    %s174 = sphi 0, %s158
  $region4: #{slimmable_tdnn_forward.7} parent=0 // loop_header_branch
    %14 = sbr.rel (%p12) target = $region8
  $region5: #{slimmable_tdnn_forward.7} parent=0 // loop_body
    %s16 = ssub.s32 %s11, 1
    %s17 = ssub.s32 %s11, 2
    %s27 = sadd.s32 1, %s20
    %p28 = scmp.ge.s32.totalorder %s27, 1
    %s29 = scalar_select %p28, 0, %s27
    %s30 = sadd.s32 1, %s19
    %s31 = scalar_select %p28, %s30, %s19
    %p32 = scmp.ge.s32.totalorder %s31, 1
    %s33 = scalar_select %p32, 0, %s31
    %s34 = sadd.s32 1, %s18
    %s35 = scalar_select %p32, %s34, %s18
    %p36 = scmp.ge.s32.totalorder %s35, 2
    %s37 = scalar_select %p36, 0, %s35
    %s38 = ssub.s32 %s18, %s37
    %s39 = ssub.s32 %s20, %s29
    %s40 = sor.u32 %s38, %s39
    %p41 = scmp.eq.s32.totalorder %s40, 0
    %s43 = sadd.s32 %s42, 1
    %s44 = scalar_select %p41, %s42, %s43
    %p47 = pneg %p41
    %p48 = scmp.eq.s32.totalorder %s11, 1
    %p49 = por %p47, %p48
    %p50 = scmp.ne.s32.totalorder %s42, %s45
    %p51 = scmp.eq.s32.totalorder %s11, 0
    %p52 = por %p50, %p51
    %p53 = scmp.ne.s32.totalorder %s42, %s45
    %p54 = scmp.eq.s32.totalorder %s16, 1
    %p55 = por %p53, %p54
    %p56 = scmp.ne.s32.totalorder %s45, %s46
    %p57 = scmp.eq.s32.totalorder %s16, 0
    %p58 = por %p56, %p57
    %p59 = scmp.ne.s32.totalorder %s45, %s46
    %p60 = scmp.eq.s32.totalorder %s17, 1
    %p61 = por %p59, %p60
    %p63 = scmp.ne.s32.totalorder %s46, %s62
    %p64 = scmp.eq.s32.totalorder %s17, 0
    %p65 = por %p63, %p64
    %s66 = ssub.s32 %s19, %s33
    %p67 = scmp.eq.s32.totalorder %s66, 0
    %s69 = sadd.s32 %s68, 1
    %s70 = scalar_select %p67, %s68, %s69
    %p73 = pneg %p67
    %p74 = scmp.eq.s32.totalorder %s11, 1
    %p75 = por %p73, %p74
    %p76 = scmp.ne.s32.totalorder %s68, %s71
    %p77 = scmp.eq.s32.totalorder %s11, 0
    %p78 = por %p76, %p77
    %p79 = scmp.ne.s32.totalorder %s68, %s71
    %p80 = scmp.eq.s32.totalorder %s16, 1
    %p81 = por %p79, %p80
    %p82 = scmp.ne.s32.totalorder %s71, %s72
    %p83 = scmp.eq.s32.totalorder %s16, 0
    %p84 = por %p82, %p83
    %p85 = scmp.ne.s32.totalorder %s71, %s72
    %p86 = scmp.eq.s32.totalorder %s17, 1
    %p87 = por %p85, %p86
    %p89 = scmp.ne.s32.totalorder %s72, %s88
    %p90 = scmp.eq.s32.totalorder %s17, 0
    %p91 = por %p89, %p90
    %s92 = ssub.s32 %s19, %s33
    %p93 = scmp.eq.s32.totalorder %s92, 0
    %s95 = sadd.s32 %s94, 1
    %s96 = scalar_select %p93, %s94, %s95
    %p99 = pneg %p93
    %p100 = scmp.eq.s32.totalorder %s11, 1
    %p101 = por %p99, %p100
    %p102 = scmp.ne.s32.totalorder %s94, %s97
    %p103 = scmp.eq.s32.totalorder %s11, 0
    %p104 = por %p102, %p103
    %p105 = scmp.ne.s32.totalorder %s94, %s97
    %p106 = scmp.eq.s32.totalorder %s16, 1
    %p107 = por %p105, %p106
    %p108 = scmp.ne.s32.totalorder %s97, %s98
    %p109 = scmp.eq.s32.totalorder %s16, 0
    %p110 = por %p108, %p109
    %p111 = scmp.ne.s32.totalorder %s97, %s98
    %p112 = scmp.eq.s32.totalorder %s17, 1
    %p113 = por %p111, %p112
    %p115 = scmp.ne.s32.totalorder %s98, %s114
    %p116 = scmp.eq.s32.totalorder %s17, 0
    %p117 = por %p115, %p116
    %s118 = ssub.s32 %s18, %s37
    %s119 = ssub.s32 %s20, %s29
    %s120 = sor.u32 %s118, %s119
    %s121 = ssub.s32 %s19, %s33
    %s122 = sor.u32 %s120, %s121
    %p123 = scmp.eq.s32.totalorder %s122, 0
    %s125 = sadd.s32 %s124, 1
    %s126 = scalar_select %p123, %s124, %s125
    %p129 = pneg %p123
    %p130 = scmp.eq.s32.totalorder %s11, 1
    %p131 = por %p129, %p130
    %p132 = scmp.ne.s32.totalorder %s124, %s127
    %p133 = scmp.eq.s32.totalorder %s11, 0
    %p134 = por %p132, %p133
    %p135 = scmp.ne.s32.totalorder %s124, %s127
    %p136 = scmp.eq.s32.totalorder %s16, 1
    %p137 = por %p135, %p136
    %p138 = scmp.ne.s32.totalorder %s127, %s128
    %p139 = scmp.eq.s32.totalorder %s16, 0
    %p140 = por %p138, %p139
    %p141 = scmp.ne.s32.totalorder %s127, %s128
    %p142 = scmp.eq.s32.totalorder %s17, 1
    %p143 = por %p141, %p142
    %p145 = scmp.ne.s32.totalorder %s128, %s144
    %p146 = scmp.eq.s32.totalorder %s17, 0
    %p147 = por %p145, %p146
    %s148 = ssub.s32 %s18, %s37
    %s149 = ssub.s32 %s20, %s29
    %s150 = sor.u32 %s148, %s149
    %s151 = ssub.s32 %s19, %s33
    %s152 = sor.u32 %s150, %s151
    %p153 = scmp.eq.s32.totalorder %s152, 0
    %s155 = sadd.s32 %s154, 1
    %s156 = scalar_select %p153, %s154, %s155
    %p159 = pneg %p153
    %p160 = scmp.eq.s32.totalorder %s11, 1
    %p161 = por %p159, %p160
    %p162 = scmp.ne.s32.totalorder %s154, %s157
    %p163 = scmp.eq.s32.totalorder %s11, 0
    %p164 = por %p162, %p163
    %p165 = scmp.ne.s32.totalorder %s154, %s157
    %p166 = scmp.eq.s32.totalorder %s16, 1
    %p167 = por %p165, %p166
    %p168 = scmp.ne.s32.totalorder %s157, %s158
    %p169 = scmp.eq.s32.totalorder %s16, 0
    %p170 = por %p168, %p169
    %p171 = scmp.ne.s32.totalorder %s157, %s158
    %p172 = scmp.eq.s32.totalorder %s17, 1
    %p173 = por %p171, %p172
    %p175 = scmp.ne.s32.totalorder %s158, %s174
    %p176 = scmp.eq.s32.totalorder %s17, 0
    %p177 = por %p175, %p176
    %p178 = scmp.le.s32.totalorder 1, %s11
    %p179 = scmp.lt.s32.totalorder %s11, 3
    %p180 = pnand %p178, %p179
    %p181 = pneg %p180
    // Predicated region
    $region9: #{slimmable_tdnn_forward.7} parent=5 // pred_check
      _
    $region10: #{slimmable_tdnn_forward.7} parent=5 // pred_check_branch
      %183 = sbr.rel (%p180) target = $region12
    $region11: #{slimmable_tdnn_forward.7} parent=5 // pred_region
      %s184 = ssub.s32 %s11, 1
      // Predicated region
      $region13: #{slimmable_tdnn_forward.7} parent=11 // pred_check
        %p185 = pneg %p84
      $region14: #{slimmable_tdnn_forward.7} parent=11 // pred_check_branch
        %187 = sbr.rel (%p185) target = $region16
      $region15: #{slimmable_tdnn_forward.7} parent=11 // pred_region
        %p188 = scmp.lt.s32.totalorder %s22, 0
        %s189 = scalar_select %p188, %s22, 0
        %s190 = smul.addr %s189, 4
        %s191 = scalar_lea.vmem %s1, %s190
      $region16: #{slimmable_tdnn_forward.7} parent=11 // pred_fallthru
        _
      // Predicated region
      $region17: #{slimmable_tdnn_forward.7} parent=11 // pred_check
        %p192 = pneg %p110
      $region18: #{slimmable_tdnn_forward.7} parent=11 // pred_check_branch
        %194 = sbr.rel (%p192) target = $region20
      $region19: #{slimmable_tdnn_forward.7} parent=11 // pred_region
        %p195 = scmp.lt.s32.totalorder %s22, 0
        %s196 = scalar_select %p195, %s22, 0
        %s197 = scalar_lea.vmem %s2, %s196
      $region20: #{slimmable_tdnn_forward.7} parent=11 // pred_fallthru
        _
    $region12: #{slimmable_tdnn_forward.7} parent=5 // pred_fallthru
      _
    %p198 = scmp.lt.s32.totalorder %s11, 2
    // Predicated region
    $region21: #{slimmable_tdnn_forward.7} parent=5 // pred_check
      %p199 = pneg %p198
    $region22: #{slimmable_tdnn_forward.7} parent=5 // pred_check_branch
      %201 = sbr.rel (%p199) target = $region24
    $region23: #{slimmable_tdnn_forward.7} parent=5 // pred_region
      // Predicated region
      $region25: #{slimmable_tdnn_forward.7} parent=23 // pred_check
        %p202 = pneg %p52
      $region26: #{slimmable_tdnn_forward.7} parent=23 // pred_check_branch
        %204 = sbr.rel (%p202) target = $region28
      $region27: #{slimmable_tdnn_forward.7} parent=23 // pred_region
        %s205 = smul.u32 4, %s20
        %p206 = scmp.lt.s32.totalorder %s18, 1
        %s207 = scalar_select %p206, %s18, 1
        %p208 = scmp.lt.s32.totalorder %s205, 3
        %s209 = scalar_select %p208, %s205, 3
        %s210 = smul.addr %s207, 12
        %s211 = sadd.s32 %s209, %s210
        %s212 = smul.addr %s211, 4
        %s213 = scalar_lea.vmem %s0, %s212
        %s214 = smul.u32 4, %s20
      $region28: #{slimmable_tdnn_forward.7} parent=23 // pred_fallthru
        _
    $region24: #{slimmable_tdnn_forward.7} parent=5 // pred_fallthru
      _
    %p215 = scmp.le.s32.totalorder 1, %s11
    %p216 = scmp.lt.s32.totalorder %s11, 3
    %p217 = pnand %p215, %p216
    %p218 = pneg %p217
    // Predicated region
    $region29: #{slimmable_tdnn_forward.7} parent=5 // pred_check
      _
    $region30: #{slimmable_tdnn_forward.7} parent=5 // pred_check_branch
      %220 = sbr.rel (%p217) target = $region32
    $region31: #{slimmable_tdnn_forward.7} parent=5 // pred_region
      %s221 = ssub.s32 %s11, 1
      %s222 = smul.u32 4, %s23
      %p223 = scmp.lt.s32.totalorder %s21, 1
      %s224 = scalar_select %p223, %s21, 1
      %p225 = scmp.lt.s32.totalorder %s222, 3
      %s226 = scalar_select %p225, %s222, 3
      %s227 = smul.addr %s224, 12
      %s228 = sadd.s32 %s226, %s227
      %s229 = smul.addr %s228, 4
      %s230 = scalar_lea.vmem %s0, %s229
      %p231 = pneg %p58
      %p232 = pneg %p55
      %p233 = scmp.lt.s32.totalorder %s22, 0
      %s234 = scalar_select %p233, %s22, 0
      %s235 = smul.addr %s234, 4
      %s236 = scalar_lea.vmem %s1, %s235
      %p237 = pneg %p84
      %p238 = pneg %p81
      %p239 = scmp.lt.s32.totalorder %s22, 0
      %s240 = scalar_select %p239, %s22, 0
      %s241 = scalar_lea.vmem %s2, %s240
      %p242 = pneg %p110
      %p243 = pneg %p107
      %p244 = pneg %p140
      %p245 = pneg %p137
      %s246 = smul.u32 4, %s23
      %p247 = scmp.lt.s32.totalorder %s21, 1
      %s248 = scalar_select %p247, %s21, 1
      %p249 = scmp.lt.s32.totalorder %s246, 3
      %s250 = scalar_select %p249, %s246, 3
      %p251 = scmp.lt.s32.totalorder %s22, 0
      %s252 = scalar_select %p251, %s22, 0
      %s253 = sadd.s32 %s252, %s250
      %s254 = smul.addr %s248, 4
      %s255 = sadd.s32 %s253, %s254
      %s256 = smul.addr %s255, 4
      %s257 = scalar_lea.vmem %s3, %s256
      %p258 = pneg %p170
      %p259 = pneg %p167
      %p260 = scmp.lt.s32.totalorder %s21, 1
      %s261 = scalar_select %p260, %s21, 1
      %p262 = scmp.lt.s32.totalorder %s23, 0
      %s263 = scalar_select %p262, %s23, 0
      %p264 = scmp.lt.s32.totalorder %s22, 0
      %s265 = scalar_select %p264, %s22, 0
      %s266 = sadd.s32 %s265, %s263
      %s267 = sadd.s32 %s266, %s261
      %s268 = smul.addr %s267, 8
      %s269 = scalar_lea.vmem %s4, %s268
      %s270 = smul.u32 4, %s23
      %p271 = scmp.lt.s32.totalorder %s21, 1
      %s272 = scalar_select %p271, %s21, 1
      %p273 = scmp.lt.s32.totalorder %s270, 3
      %s274 = scalar_select %p273, %s270, 3
      %s275 = smul.addr %s272, 12
      %s276 = sadd.s32 %s274, %s275
      %s277 = smul.addr %s276, 4
      %s278 = scalar_lea.vmem %s0, %s277
      %s279 = smul.u32 4, %s23
      %p280 = scmp.lt.s32.totalorder %s22, 0
      %s281 = scalar_select %p280, %s22, 0
      %s282 = smul.addr %s281, 4
      %s283 = scalar_lea.vmem %s1, %s282
      %p284 = scmp.lt.s32.totalorder %s22, 0
      %s285 = scalar_select %p284, %s22, 0
      %s286 = scalar_lea.vmem %s2, %s285
      %s287 = smul.u32 4, %s23
      %p288 = scmp.lt.s32.totalorder %s21, 1
      %s289 = scalar_select %p288, %s21, 1
      %p290 = scmp.lt.s32.totalorder %s287, 3
      %s291 = scalar_select %p290, %s287, 3
      %p292 = scmp.lt.s32.totalorder %s22, 0
      %s293 = scalar_select %p292, %s22, 0
      %s294 = sadd.s32 %s293, %s291
      %s295 = smul.addr %s289, 4
      %s296 = sadd.s32 %s294, %s295
      %s297 = smul.addr %s296, 4
      %s298 = scalar_lea.vmem %s3, %s297
      %s299 = smul.u32 4, %s23
      %p300 = scmp.lt.s32.totalorder %s21, 1
      %s301 = scalar_select %p300, %s21, 1
      %p302 = scmp.lt.s32.totalorder %s23, 0
      %s303 = scalar_select %p302, %s23, 0
      %p304 = scmp.lt.s32.totalorder %s22, 0
      %s305 = scalar_select %p304, %s22, 0
      %s306 = sadd.s32 %s305, %s303
      %s307 = sadd.s32 %s306, %s301
      %s308 = smul.addr %s307, 8
      %s309 = scalar_lea.vmem %s4, %s308
      %v311 = vld [vmem:[%s278] sm:$0xf]
      %v312 = vld [vmem:[%s278 + $0x4] sm:$0xf]
      %v313 = vld [vmem:[%s278 + $0x8] sm:$0xf]
      %v314 = vld [vmem:[%s278 + $0xc] sm:$0xf]
      %v315 = vld [vmem:[%s283] sm:$0xf]
      %v316 = vld [vmem:[%s283 + $0x4] sm:$0xf]
      %v317 = vld [vmem:[%s283 + $0x8] sm:$0xf]
      %v318 = vld [vmem:[%s283 + $0xc] sm:$0xf]
      %v319 = vld [vmem:[%s283 + $0x10] sm:$0xf]
      %v320 = vld [vmem:[%s283 + $0x14] sm:$0xf]
      %v321 = vld [vmem:[%s283 + $0x18] sm:$0xf]
      %v322 = vld [vmem:[%s283 + $0x1c] sm:$0xf]
      %v323 = vld [vmem:[%s283 + $0x20] sm:$0xf]
      %v324 = vld [vmem:[%s283 + $0x24] sm:$0xf]
      %v325 = vld [vmem:[%s283 + $0x28] sm:$0xf]
      %v326 = vld [vmem:[%s283 + $0x2c] sm:$0xf]
      %v327 = vld [vmem:[%s283 + $0x30] sm:$0xf]
      %v328 = vld [vmem:[%s283 + $0x34] sm:$0xf]
      %v329 = vld [vmem:[%s283 + $0x38] sm:$0xf]
      %v330 = vld [vmem:[%s283 + $0x3c] sm:$0xf]
      %s331 = scalar_lea.vmem %s278, 16
      %v332 = vld [vmem:[%s331] sm:$0xf]
      %v333 = vld [vmem:[%s331 + $0x4] sm:$0xf]
      %v334 = vld [vmem:[%s331 + $0x8] sm:$0xf]
      %v335 = vld [vmem:[%s331 + $0xc] sm:$0xf]
      %s336 = scalar_lea.vmem %s283, 64
      %v337 = vld [vmem:[%s336] sm:$0xf]
      %v338 = vld [vmem:[%s336 + $0x4] sm:$0xf]
      %v339 = vld [vmem:[%s336 + $0x8] sm:$0xf]
      %v340 = vld [vmem:[%s336 + $0xc] sm:$0xf]
      %v341 = vld [vmem:[%s336 + $0x10] sm:$0xf]
      %v342 = vld [vmem:[%s336 + $0x14] sm:$0xf]
      %v343 = vld [vmem:[%s336 + $0x18] sm:$0xf]
      %v344 = vld [vmem:[%s336 + $0x1c] sm:$0xf]
      %v345 = vld [vmem:[%s336 + $0x20] sm:$0xf]
      %v346 = vld [vmem:[%s336 + $0x24] sm:$0xf]
      %v347 = vld [vmem:[%s336 + $0x28] sm:$0xf]
      %v348 = vld [vmem:[%s336 + $0x2c] sm:$0xf]
      %v349 = vld [vmem:[%s336 + $0x30] sm:$0xf]
      %v350 = vld [vmem:[%s336 + $0x34] sm:$0xf]
      %v351 = vld [vmem:[%s336 + $0x38] sm:$0xf]
      %v352 = vld [vmem:[%s336 + $0x3c] sm:$0xf]
      %v357 = vunpack.c.l.b16 %v332
      %v358 = vunpack.c.l.b16 %v333
      %v359 = vunpack.c.l.b16 %v334
      %v360 = vunpack.c.l.b16 %v335
      %v361 = vpack.c.b16 %v358, %v357
      %v362 = vpack.c.b16 %v360, %v359
      %v381 = vunpack.c.l.b16 %v337
      %v382 = vunpack.c.l.b16 %v338
      %v383 = vunpack.c.l.b16 %v339
      %v384 = vunpack.c.l.b16 %v340
      %v385 = vunpack.c.l.b16 %v341
      %v386 = vunpack.c.l.b16 %v342
      %v387 = vunpack.c.l.b16 %v343
      %v388 = vunpack.c.l.b16 %v344
      %v389 = vunpack.c.l.b16 %v345
      %v390 = vunpack.c.l.b16 %v346
      %v391 = vunpack.c.l.b16 %v347
      %v392 = vunpack.c.l.b16 %v348
      %v393 = vunpack.c.l.b16 %v349
      %v394 = vunpack.c.l.b16 %v350
      %v395 = vunpack.c.l.b16 %v351
      %v396 = vunpack.c.l.b16 %v352
      %v397 = vpack.c.b16 %v382, %v381
      %v398 = vpack.c.b16 %v384, %v383
      %v399 = vpack.c.b16 %v386, %v385
      %v400 = vpack.c.b16 %v388, %v387
      %v401 = vpack.c.b16 %v390, %v389
      %v402 = vpack.c.b16 %v392, %v391
      %v403 = vpack.c.b16 %v394, %v393
      %v404 = vpack.c.b16 %v396, %v395
      %413 = vmatprep.subr.bf16.mxu0 0
      %414 = vmatpush1.bf16.msra.mxu0 %v404
      %415 = vmatprep.subr.bf16.mxu0 0
      %416 = vmatpush1.bf16.msra.mxu0 %v403
      %417 = vmatprep.subr.bf16.mxu0 0
      %418 = vmatpush1.bf16.msra.mxu0 %v402
      %419 = vmatprep.subr.bf16.mxu0 0
      %420 = vmatpush1.bf16.msra.mxu0 %v401
      %421 = vmatprep.subr.bf16.mxu0 0
      %422 = vmatpush1.bf16.msra.mxu0 %v400
      %423 = vmatprep.subr.bf16.mxu0 0
      %424 = vmatpush1.bf16.msra.mxu0 %v399
      %425 = vmatprep.subr.bf16.mxu0 0
      %426 = vmatpush1.bf16.msra.mxu0 %v398
      %427 = vmatprep.subr.bf16.mxu0 0
      %428 = vmatpush1.bf16.msra.mxu0 %v397
      %429 = vmatprep.subr.bf16.mxu0 0
      %430 = vmatpush2.bf16.msra.mxu0 0
      %431 = vmatprep.subr.bf16.mxu0 0
      %432 = vmatpush2.bf16.msra.mxu0 0
      %433 = vmatprep.subr.bf16.mxu0 0
      %434 = vmatpush2.bf16.msra.mxu0 0
      %435 = vmatprep.subr.bf16.mxu0 0
      %436 = vmatpush2.bf16.msra.mxu0 0
      %437 = vmatprep.subr.bf16.mxu0 0
      %438 = vmatpush2.bf16.msra.mxu0 0
      %439 = vmatprep.subr.bf16.mxu0 0
      %440 = vmatpush2.bf16.msra.mxu0 0
      %441 = vmatprep.subr.bf16.mxu0 0
      %442 = vmatpush2.bf16.msra.mxu0 0
      %443 = vmatprep.subr.bf16.mxu0 0
      %444 = vmatpush2.bf16.msra.mxu0 0
      %445 = vmatprep.mubr.bf16.mxu0 0
      %446 = vmatmul.mubr.bf16.gmra.mxu0 %v361
      %v447 = vpop.f32.mrf.mxu0
      %v448 = vadd.f32 0.0, %v447
      %v449 = vpop.f32.mrf.mxu0
      %v450 = vpop.f32.mrf.mxu0
      %v451 = vadd.f32 0.0, %v450
      %v452 = vpop.f32.mrf.mxu0
      %453 = vmatprep.mubr.bf16.mxu0 0
      %454 = vmatmul.mubr.bf16.gmra.mxu0 %v362
      %v455 = vpop.f32.mrf.mxu0
      %v456 = vadd.f32 0.0, %v455
      %v457 = vpop.f32.mrf.mxu0
      %v458 = vpop.f32.mrf.mxu0
      %v459 = vadd.f32 0.0, %v458
      %v460 = vpop.f32.mrf.mxu0
      %461 = vdwg.mxu0
      %v466 = vunpack.c.l.b16 %v311
      %v467 = vunpack.c.l.b16 %v312
      %v468 = vunpack.c.l.b16 %v313
      %v469 = vunpack.c.l.b16 %v314
      %v470 = vpack.c.b16 %v467, %v466
      %v471 = vpack.c.b16 %v469, %v468
      %v490 = vunpack.c.l.b16 %v315
      %v491 = vunpack.c.l.b16 %v316
      %v492 = vunpack.c.l.b16 %v317
      %v493 = vunpack.c.l.b16 %v318
      %v494 = vunpack.c.l.b16 %v319
      %v495 = vunpack.c.l.b16 %v320
      %v496 = vunpack.c.l.b16 %v321
      %v497 = vunpack.c.l.b16 %v322
      %v498 = vunpack.c.l.b16 %v323
      %v499 = vunpack.c.l.b16 %v324
      %v500 = vunpack.c.l.b16 %v325
      %v501 = vunpack.c.l.b16 %v326
      %v502 = vunpack.c.l.b16 %v327
      %v503 = vunpack.c.l.b16 %v328
      %v504 = vunpack.c.l.b16 %v329
      %v505 = vunpack.c.l.b16 %v330
      %v506 = vpack.c.b16 %v491, %v490
      %v507 = vpack.c.b16 %v493, %v492
      %v508 = vpack.c.b16 %v495, %v494
      %v509 = vpack.c.b16 %v497, %v496
      %v510 = vpack.c.b16 %v499, %v498
      %v511 = vpack.c.b16 %v501, %v500
      %v512 = vpack.c.b16 %v503, %v502
      %v513 = vpack.c.b16 %v505, %v504
      %522 = vmatprep.subr.bf16.mxu0 0
      %523 = vmatpush1.bf16.msra.mxu0 %v513
      %524 = vmatprep.subr.bf16.mxu0 0
      %525 = vmatpush1.bf16.msra.mxu0 %v512
      %526 = vmatprep.subr.bf16.mxu0 0
      %527 = vmatpush1.bf16.msra.mxu0 %v511
      %528 = vmatprep.subr.bf16.mxu0 0
      %529 = vmatpush1.bf16.msra.mxu0 %v510
      %530 = vmatprep.subr.bf16.mxu0 0
      %531 = vmatpush1.bf16.msra.mxu0 %v509
      %532 = vmatprep.subr.bf16.mxu0 0
      %533 = vmatpush1.bf16.msra.mxu0 %v508
      %534 = vmatprep.subr.bf16.mxu0 0
      %535 = vmatpush1.bf16.msra.mxu0 %v507
      %536 = vmatprep.subr.bf16.mxu0 0
      %537 = vmatpush1.bf16.msra.mxu0 %v506
      %538 = vmatprep.subr.bf16.mxu0 0
      %539 = vmatpush2.bf16.msra.mxu0 0
      %540 = vmatprep.subr.bf16.mxu0 0
      %541 = vmatpush2.bf16.msra.mxu0 0
      %542 = vmatprep.subr.bf16.mxu0 0
      %543 = vmatpush2.bf16.msra.mxu0 0
      %544 = vmatprep.subr.bf16.mxu0 0
      %545 = vmatpush2.bf16.msra.mxu0 0
      %546 = vmatprep.subr.bf16.mxu0 0
      %547 = vmatpush2.bf16.msra.mxu0 0
      %548 = vmatprep.subr.bf16.mxu0 0
      %549 = vmatpush2.bf16.msra.mxu0 0
      %550 = vmatprep.subr.bf16.mxu0 0
      %551 = vmatpush2.bf16.msra.mxu0 0
      %552 = vmatprep.subr.bf16.mxu0 0
      %553 = vmatpush2.bf16.msra.mxu0 0
      %554 = vmatprep.mubr.bf16.mxu0 0
      %555 = vmatmul.mubr.bf16.gmra.mxu0 %v470
      %v556 = vpop.f32.mrf.mxu0
      %v557 = vadd.f32 %v448, %v556
      %v558 = vpop.f32.mrf.mxu0
      %v559 = vpop.f32.mrf.mxu0
      %v560 = vadd.f32 %v451, %v559
      %v561 = vpop.f32.mrf.mxu0
      %562 = vmatprep.mubr.bf16.mxu0 0
      %563 = vmatmul.mubr.bf16.gmra.mxu0 %v471
      %v564 = vpop.f32.mrf.mxu0
      %v565 = vadd.f32 %v456, %v564
      %v566 = vpop.f32.mrf.mxu0
      %v567 = vpop.f32.mrf.mxu0
      %v568 = vadd.f32 %v459, %v567
      %v569 = vpop.f32.mrf.mxu0
      %570 = vdwg.mxu0
      %s571 = scalar_lea.vmem %s278, 32
      %v572 = vld [vmem:[%s571] sm:$0xf]
      %v573 = vld [vmem:[%s571 + $0x4] sm:$0xf]
      %v574 = vld [vmem:[%s571 + $0x8] sm:$0xf]
      %v575 = vld [vmem:[%s571 + $0xc] sm:$0xf]
      %s576 = scalar_lea.vmem %s283, 128
      %v577 = vld [vmem:[%s576] sm:$0xf]
      %v578 = vld [vmem:[%s576 + $0x4] sm:$0xf]
      %v579 = vld [vmem:[%s576 + $0x8] sm:$0xf]
      %v580 = vld [vmem:[%s576 + $0xc] sm:$0xf]
      %v581 = vld [vmem:[%s576 + $0x10] sm:$0xf]
      %v582 = vld [vmem:[%s576 + $0x14] sm:$0xf]
      %v583 = vld [vmem:[%s576 + $0x18] sm:$0xf]
      %v584 = vld [vmem:[%s576 + $0x1c] sm:$0xf]
      %v585 = vld [vmem:[%s576 + $0x20] sm:$0xf]
      %v586 = vld [vmem:[%s576 + $0x24] sm:$0xf]
      %v587 = vld [vmem:[%s576 + $0x28] sm:$0xf]
      %v588 = vld [vmem:[%s576 + $0x2c] sm:$0xf]
      %v589 = vld [vmem:[%s576 + $0x30] sm:$0xf]
      %v590 = vld [vmem:[%s576 + $0x34] sm:$0xf]
      %v591 = vld [vmem:[%s576 + $0x38] sm:$0xf]
      %v592 = vld [vmem:[%s576 + $0x3c] sm:$0xf]
      %v597 = vunpack.c.l.b16 %v572
      %v598 = vunpack.c.l.b16 %v573
      %v599 = vunpack.c.l.b16 %v574
      %v600 = vunpack.c.l.b16 %v575
      %v601 = vpack.c.b16 %v598, %v597
      %v602 = vpack.c.b16 %v600, %v599
      %v621 = vunpack.c.l.b16 %v577
      %v622 = vunpack.c.l.b16 %v578
      %v623 = vunpack.c.l.b16 %v579
      %v624 = vunpack.c.l.b16 %v580
      %v625 = vunpack.c.l.b16 %v581
      %v626 = vunpack.c.l.b16 %v582
      %v627 = vunpack.c.l.b16 %v583
      %v628 = vunpack.c.l.b16 %v584
      %v629 = vunpack.c.l.b16 %v585
      %v630 = vunpack.c.l.b16 %v586
      %v631 = vunpack.c.l.b16 %v587
      %v632 = vunpack.c.l.b16 %v588
      %v633 = vunpack.c.l.b16 %v589
      %v634 = vunpack.c.l.b16 %v590
      %v635 = vunpack.c.l.b16 %v591
      %v636 = vunpack.c.l.b16 %v592
      %v637 = vpack.c.b16 %v622, %v621
      %v638 = vpack.c.b16 %v624, %v623
      %v639 = vpack.c.b16 %v626, %v625
      %v640 = vpack.c.b16 %v628, %v627
      %v641 = vpack.c.b16 %v630, %v629
      %v642 = vpack.c.b16 %v632, %v631
      %v643 = vpack.c.b16 %v634, %v633
      %v644 = vpack.c.b16 %v636, %v635
      %653 = vmatprep.subr.bf16.mxu0 0
      %654 = vmatpush1.bf16.msra.mxu0 %v644
      %655 = vmatprep.subr.bf16.mxu0 0
      %656 = vmatpush1.bf16.msra.mxu0 %v643
      %657 = vmatprep.subr.bf16.mxu0 0
      %658 = vmatpush1.bf16.msra.mxu0 %v642
      %659 = vmatprep.subr.bf16.mxu0 0
      %660 = vmatpush1.bf16.msra.mxu0 %v641
      %661 = vmatprep.subr.bf16.mxu0 0
      %662 = vmatpush1.bf16.msra.mxu0 %v640
      %663 = vmatprep.subr.bf16.mxu0 0
      %664 = vmatpush1.bf16.msra.mxu0 %v639
      %665 = vmatprep.subr.bf16.mxu0 0
      %666 = vmatpush1.bf16.msra.mxu0 %v638
      %667 = vmatprep.subr.bf16.mxu0 0
      %668 = vmatpush1.bf16.msra.mxu0 %v637
      %669 = vmatprep.subr.bf16.mxu0 0
      %670 = vmatpush2.bf16.msra.mxu0 0
      %671 = vmatprep.subr.bf16.mxu0 0
      %672 = vmatpush2.bf16.msra.mxu0 0
      %673 = vmatprep.subr.bf16.mxu0 0
      %674 = vmatpush2.bf16.msra.mxu0 0
      %675 = vmatprep.subr.bf16.mxu0 0
      %676 = vmatpush2.bf16.msra.mxu0 0
      %677 = vmatprep.subr.bf16.mxu0 0
      %678 = vmatpush2.bf16.msra.mxu0 0
      %679 = vmatprep.subr.bf16.mxu0 0
      %680 = vmatpush2.bf16.msra.mxu0 0
      %681 = vmatprep.subr.bf16.mxu0 0
      %682 = vmatpush2.bf16.msra.mxu0 0
      %683 = vmatprep.subr.bf16.mxu0 0
      %684 = vmatpush2.bf16.msra.mxu0 0
      %685 = vmatprep.mubr.bf16.mxu0 0
      %686 = vmatmul.mubr.bf16.gmra.mxu0 %v601
      %v687 = vpop.f32.mrf.mxu0
      %v688 = vadd.f32 0.0, %v687
      %v689 = vpop.f32.mrf.mxu0
      %v690 = vpop.f32.mrf.mxu0
      %v691 = vadd.f32 0.0, %v690
      %v692 = vpop.f32.mrf.mxu0
      %693 = vmatprep.mubr.bf16.mxu0 0
      %694 = vmatmul.mubr.bf16.gmra.mxu0 %v602
      %v695 = vpop.f32.mrf.mxu0
      %v696 = vadd.f32 0.0, %v695
      %v697 = vpop.f32.mrf.mxu0
      %v698 = vpop.f32.mrf.mxu0
      %v699 = vadd.f32 0.0, %v698
      %v700 = vpop.f32.mrf.mxu0
      %701 = vdwg.mxu0
      %v702 = vadd.f32 %v557, %v688
      %v703 = vadd.f32 %v560, %v691
      %v704 = vadd.f32 %v565, %v696
      %v705 = vadd.f32 %v568, %v699
      %v706 = vld [vmem:[%s286] sm:$0x1]
      %v708 = vlaneseq
      %v709 = vshrl.u32 %v708, 7
      %v710 = vsub.s32 0, %v709
      %v711 = vrot.slane %v706, %v710
      %v713 = vadd.f32 %v702, %v711
      %v714 = vadd.f32 %v703, %v711
      %v715 = vadd.f32 %v704, %v711
      %v716 = vadd.f32 %v705, %v711
      %v717 = vmax.f32 %v713, 0.0
      %v718 = vmax.f32 %v714, 0.0
      %v719 = vmax.f32 %v715, 0.0
      %v720 = vmax.f32 %v716, 0.0
      %v721 = vpack.c.bf16 %v718, %v717
      %v722 = vpack.c.bf16 %v720, %v719
      %v725 = vunpack.c.l.b16 %v721
      %v726 = vunpack.c.h.b16 %v721
      %v727 = vunpack.c.l.b16 %v722
      %v728 = vunpack.c.h.b16 %v722
      %v729 = vpack.c.b16 %v725, %v725
      %v730 = vpack.c.b16 %v726, %v726
      %v731 = vpack.c.b16 %v727, %v727
      %v732 = vpack.c.b16 %v728, %v728
      %737 = vst [vmem:[%s298] sm:$0xf] %v729
      %738 = vst [vmem:[%s298 + $0x4] sm:$0xf] %v730
      %739 = vst [vmem:[%s298 + $0x8] sm:$0xf] %v731
      %740 = vst [vmem:[%s298 + $0xc] sm:$0xf] %v732
      %v741 = vlaneseq
      %v742 = vshrl.u32 %v741, 7
      %v743 = vlaneseq
      %v744 = vand.u32 %v743, 127
      %s745 = smul.u32 %s23, 32
      %v746 = vstv %s745
      %v747 = vadd.s32 %v744, %v746
      %vm748 = vcmp.lt.s32.totalorder %v747, 24
      %vm749 = vcmp.eq.s32.totalorder %v742, 0
      %vm750 = vmand %vm748, %vm749
      %v751 = vsel %vm750, 1.0, 0.0
      %vm752 = vcmp.eq.s32.totalorder %v742, 1
      %vm753 = vmand %vm748, %vm752
      %v754 = vsel %vm753, 1.0, 0.0
      %v755 = vmul.f32 %v717, %v717
      %v756 = vmul.f32 %v718, %v718
      %v757 = vmul.f32 %v719, %v719
      %v758 = vmul.f32 %v720, %v720
      %vm759 = vcmask 261120
      %v761 = vsel %vm759, %v754, 0
      %763 = vmatprep.subr.mxu0 0.0
      %764 = vmatpush1.msra.mxu0 0.0
      %765 = vmatprep.subr.mxu0 0.0
      %766 = vmatpush1.msra.mxu0 0.0
      %767 = vmatprep.subr.mxu0 0.0
      %768 = vmatpush1.msra.mxu0 0.0
      %769 = vmatprep.subr.mxu0 0.0
      %770 = vmatpush1.msra.mxu0 0.0
      %771 = vmatprep.subr.mxu0 0.0
      %772 = vmatpush1.msra.mxu0 0.0
      %773 = vmatprep.subr.mxu0 0.0
      %774 = vmatpush1.msra.mxu0 0.0
      %775 = vmatprep.subr.mxu0 0.0
      %776 = vmatpush1.msra.mxu0 0.0
      %777 = vmatprep.subr.mxu0 0.0
      %778 = vmatpush1.msra.mxu0 0.0
      %779 = vmatprep.subr.mxu0 0.0
      %780 = vmatpush1.msra.mxu0 0.0
      %781 = vmatprep.subr.mxu0 0.0
      %782 = vmatpush1.msra.mxu0 0.0
      %783 = vmatprep.subr.mxu0 0.0
      %784 = vmatpush1.msra.mxu0 0.0
      %785 = vmatprep.subr.mxu0 0.0
      %786 = vmatpush1.msra.mxu0 0.0
      %787 = vmatprep.subr.mxu0 0.0
      %788 = vmatpush1.msra.mxu0 %v758
      %789 = vmatprep.subr.mxu0 0.0
      %790 = vmatpush1.msra.mxu0 %v757
      %791 = vmatprep.subr.mxu0 0.0
      %792 = vmatpush1.msra.mxu0 %v756
      %793 = vmatprep.subr.mxu0 0.0
      %794 = vmatpush1.msra.mxu0 %v755
      %795 = vmatprep.subr.mxu0 0.0
      %796 = vmatpush2.msra.mxu0 0.0
      %797 = vmatprep.subr.mxu0 0.0
      %798 = vmatpush2.msra.mxu0 0.0
      %799 = vmatprep.subr.mxu0 0.0
      %800 = vmatpush2.msra.mxu0 0.0
      %801 = vmatprep.subr.mxu0 0.0
      %802 = vmatpush2.msra.mxu0 0.0
      %803 = vmatprep.subr.mxu0 0.0
      %804 = vmatpush2.msra.mxu0 0.0
      %805 = vmatprep.subr.mxu0 0.0
      %806 = vmatpush2.msra.mxu0 0.0
      %807 = vmatprep.subr.mxu0 0.0
      %808 = vmatpush2.msra.mxu0 0.0
      %809 = vmatprep.subr.mxu0 0.0
      %810 = vmatpush2.msra.mxu0 0.0
      %811 = vmatprep.subr.mxu0 0.0
      %812 = vmatpush2.msra.mxu0 0.0
      %813 = vmatprep.subr.mxu0 0.0
      %814 = vmatpush2.msra.mxu0 0.0
      %815 = vmatprep.subr.mxu0 0.0
      %816 = vmatpush2.msra.mxu0 0.0
      %817 = vmatprep.subr.mxu0 0.0
      %818 = vmatpush2.msra.mxu0 0.0
      %819 = vmatprep.subr.mxu0 0.0
      %820 = vmatpush2.msra.mxu0 0.0
      %821 = vmatprep.subr.mxu0 0.0
      %822 = vmatpush2.msra.mxu0 0.0
      %823 = vmatprep.subr.mxu0 0.0
      %824 = vmatpush2.msra.mxu0 0.0
      %825 = vmatprep.subr.mxu0 0.0
      %826 = vmatpush2.msra.mxu0 0.0
      %827 = vmatprep.mubr.f32.mxu0 0.0
      %828 = vmatmul.mubr.f32.gmra.mxu0 %v761
      %v829 = vpop.f32.mrf.mxu0
      %v830 = vadd.f32 0.0, %v829
      %v831 = vpop.f32.mrf.mxu0
      %832 = vdwg.mxu0
      %v834 = vsel %vm759, %v751, 0
      %836 = vmatprep.subr.mxu0 0.0
      %837 = vmatpush1.msra.mxu0 0.0
      %838 = vmatprep.subr.mxu0 0.0
      %839 = vmatpush1.msra.mxu0 0.0
      %840 = vmatprep.subr.mxu0 0.0
      %841 = vmatpush1.msra.mxu0 0.0
      %842 = vmatprep.subr.mxu0 0.0
      %843 = vmatpush1.msra.mxu0 0.0
      %844 = vmatprep.subr.mxu0 0.0
      %845 = vmatpush1.msra.mxu0 0.0
      %846 = vmatprep.subr.mxu0 0.0
      %847 = vmatpush1.msra.mxu0 0.0
      %848 = vmatprep.subr.mxu0 0.0
      %849 = vmatpush1.msra.mxu0 0.0
      %850 = vmatprep.subr.mxu0 0.0
      %851 = vmatpush1.msra.mxu0 0.0
      %852 = vmatprep.subr.mxu0 0.0
      %853 = vmatpush1.msra.mxu0 0.0
      %854 = vmatprep.subr.mxu0 0.0
      %855 = vmatpush1.msra.mxu0 0.0
      %856 = vmatprep.subr.mxu0 0.0
      %857 = vmatpush1.msra.mxu0 0.0
      %858 = vmatprep.subr.mxu0 0.0
      %859 = vmatpush1.msra.mxu0 0.0
      %860 = vmatprep.subr.mxu0 0.0
      %861 = vmatpush1.msra.mxu0 %v720
      %862 = vmatprep.subr.mxu0 0.0
      %863 = vmatpush1.msra.mxu0 %v719
      %864 = vmatprep.subr.mxu0 0.0
      %865 = vmatpush1.msra.mxu0 %v718
      %866 = vmatprep.subr.mxu0 0.0
      %867 = vmatpush1.msra.mxu0 %v717
      %868 = vmatprep.subr.mxu0 0.0
      %869 = vmatpush2.msra.mxu0 0.0
      %870 = vmatprep.subr.mxu0 0.0
      %871 = vmatpush2.msra.mxu0 0.0
      %872 = vmatprep.subr.mxu0 0.0
      %873 = vmatpush2.msra.mxu0 0.0
      %874 = vmatprep.subr.mxu0 0.0
      %875 = vmatpush2.msra.mxu0 0.0
      %876 = vmatprep.subr.mxu0 0.0
      %877 = vmatpush2.msra.mxu0 0.0
      %878 = vmatprep.subr.mxu0 0.0
      %879 = vmatpush2.msra.mxu0 0.0
      %880 = vmatprep.subr.mxu0 0.0
      %881 = vmatpush2.msra.mxu0 0.0
      %882 = vmatprep.subr.mxu0 0.0
      %883 = vmatpush2.msra.mxu0 0.0
      %884 = vmatprep.subr.mxu0 0.0
      %885 = vmatpush2.msra.mxu0 0.0
      %886 = vmatprep.subr.mxu0 0.0
      %887 = vmatpush2.msra.mxu0 0.0
      %888 = vmatprep.subr.mxu0 0.0
      %889 = vmatpush2.msra.mxu0 0.0
      %890 = vmatprep.subr.mxu0 0.0
      %891 = vmatpush2.msra.mxu0 0.0
      %892 = vmatprep.subr.mxu0 0.0
      %893 = vmatpush2.msra.mxu0 0.0
      %894 = vmatprep.subr.mxu0 0.0
      %895 = vmatpush2.msra.mxu0 0.0
      %896 = vmatprep.subr.mxu0 0.0
      %897 = vmatpush2.msra.mxu0 0.0
      %898 = vmatprep.subr.mxu0 0.0
      %899 = vmatpush2.msra.mxu0 0.0
      %900 = vmatprep.mubr.f32.mxu0 0.0
      %901 = vmatmul.mubr.f32.gmra.mxu0 %v834
      %v902 = vpop.f32.mrf.mxu0
      %v903 = vadd.f32 %v830, %v902
      %v904 = vpop.f32.mrf.mxu0
      %905 = vdwg.mxu0
      %906 = vst [vmem:[%s309] sm:$0xff] %v903
      %s907 = smul.u32 4, %s23
      %p908 = scmp.lt.s32.totalorder %s21, 1
      %s909 = scalar_select %p908, %s21, 1
      %p910 = scmp.lt.s32.totalorder %s907, 3
      %s911 = scalar_select %p910, %s907, 3
      %p912 = scmp.lt.s32.totalorder %s22, 0
      %s913 = scalar_select %p912, %s22, 0
      %s914 = sadd.s32 %s913, %s911
      %s915 = smul.addr %s909, 4
      %s916 = sadd.s32 %s914, %s915
      %s917 = smul.addr %s916, 4
      %s918 = scalar_lea.vmem %s3, %s917
      %p919 = scmp.lt.s32.totalorder %s21, 1
      %s920 = scalar_select %p919, %s21, 1
      %p921 = scmp.lt.s32.totalorder %s23, 0
      %s922 = scalar_select %p921, %s23, 0
      %p923 = scmp.lt.s32.totalorder %s22, 0
      %s924 = scalar_select %p923, %s22, 0
      %s925 = sadd.s32 %s924, %s922
      %s926 = sadd.s32 %s925, %s920
      %s927 = smul.addr %s926, 8
      %s928 = scalar_lea.vmem %s4, %s927
      // Predicated region
      $region33: #{slimmable_tdnn_forward.7} parent=31 // pred_check
        %p929 = pneg %p137
      $region34: #{slimmable_tdnn_forward.7} parent=31 // pred_check_branch
        %931 = sbr.rel (%p929) target = $region36
      $region35: #{slimmable_tdnn_forward.7} parent=31 // pred_region
        %s932 = smul.u32 4, %s23
      $region36: #{slimmable_tdnn_forward.7} parent=31 // pred_fallthru
        _
      // Predicated region
      $region37: #{slimmable_tdnn_forward.7} parent=31 // pred_check
        %p933 = pneg %p167
      $region38: #{slimmable_tdnn_forward.7} parent=31 // pred_check_branch
        %935 = sbr.rel (%p933) target = $region40
      $region39: #{slimmable_tdnn_forward.7} parent=31 // pred_region
        _
      $region40: #{slimmable_tdnn_forward.7} parent=31 // pred_fallthru
        _
    $region32: #{slimmable_tdnn_forward.7} parent=5 // pred_fallthru
      _
    %p936 = scmp.le.s32.totalorder 2, %s11
    // Predicated region
    $region41: #{slimmable_tdnn_forward.7} parent=5 // pred_check
      %p937 = pneg %p936
    $region42: #{slimmable_tdnn_forward.7} parent=5 // pred_check_branch
      %939 = sbr.rel (%p937) target = $region44
    $region43: #{slimmable_tdnn_forward.7} parent=5 // pred_region
      %s940 = ssub.s32 %s11, 2
      // Predicated region
      $region45: #{slimmable_tdnn_forward.7} parent=43 // pred_check
        %p941 = pneg %p143
      $region46: #{slimmable_tdnn_forward.7} parent=43 // pred_check_branch
        %943 = sbr.rel (%p941) target = $region48
      $region47: #{slimmable_tdnn_forward.7} parent=43 // pred_region
        %s944 = smul.u32 4, %s26
        %p945 = scmp.lt.s32.totalorder %s24, 1
        %s946 = scalar_select %p945, %s24, 1
        %p947 = scmp.lt.s32.totalorder %s944, 3
        %s948 = scalar_select %p947, %s944, 3
        %p949 = scmp.lt.s32.totalorder %s25, 0
        %s950 = scalar_select %p949, %s25, 0
        %s951 = sadd.s32 %s950, %s948
        %s952 = smul.addr %s946, 4
        %s953 = sadd.s32 %s951, %s952
        %s954 = smul.addr %s953, 4
        %s955 = scalar_lea.vmem %s3, %s954
      $region48: #{slimmable_tdnn_forward.7} parent=43 // pred_fallthru
        _
      // Predicated region
      $region49: #{slimmable_tdnn_forward.7} parent=43 // pred_check
        %p956 = pneg %p173
      $region50: #{slimmable_tdnn_forward.7} parent=43 // pred_check_branch
        %958 = sbr.rel (%p956) target = $region52
      $region51: #{slimmable_tdnn_forward.7} parent=43 // pred_region
        %p959 = scmp.lt.s32.totalorder %s24, 1
        %s960 = scalar_select %p959, %s24, 1
        %p961 = scmp.lt.s32.totalorder %s26, 0
        %s962 = scalar_select %p961, %s26, 0
        %p963 = scmp.lt.s32.totalorder %s25, 0
        %s964 = scalar_select %p963, %s25, 0
        %s965 = sadd.s32 %s964, %s962
        %s966 = sadd.s32 %s965, %s960
        %s967 = smul.addr %s966, 8
        %s968 = scalar_lea.vmem %s4, %s967
      $region52: #{slimmable_tdnn_forward.7} parent=43 // pred_fallthru
        _
    $region44: #{slimmable_tdnn_forward.7} parent=5 // pred_fallthru
      _
  $region6: #{slimmable_tdnn_forward.7} parent=0 // loop_footer
    %s15 = sadd.s32 1, %s11
  $region7: #{slimmable_tdnn_forward.7} parent=0 // loop_footer_branch
    %10 = sbr.rel target = $region3
  $region8: #{slimmable_tdnn_forward.7} parent=0 // loop_exit
    _

// kernel: slimmable_tdnn_forward.6
$region0: #{slimmable_tdnn_forward.6}
  #allocation0 [shape = 'u32[]', space=smem, size = 0x4, offset = 0x4, fixed_abs, tag = 'smem constant byte address 0x4 - core index']
  #allocation1 [shape = 'u32[144,128]{1,0:T(1,128)}', space=vmem, size = 0x12000, scoped, tag = 'internal scratch']
  %s0 = inlined_call_operand.vmem [shape: bf16[2,5,32,128], index: 0, kind: input, shape index: {}]
  %s1 = inlined_call_operand.vmem [shape: bf16[5,128,128], index: 1, kind: input, shape index: {}]
  %s2 = inlined_call_operand.vmem [shape: f32[1,128], index: 2, kind: input, shape index: {}]
  %s3 = inlined_call_operand.vmem [shape: bf16[2,32,128], index: 3, kind: output, shape index: {0}]
  %s4 = inlined_call_operand.vmem [shape: f32[2,1,8,128], index: 4, kind: output, shape index: {1}]
  %5 = xla_tuple %s3, %s4
  %s6 = sld [smem:[#allocation0]]
  $region53: #{slimmable_tdnn_forward.6} parent=0
    _
  %s8 = ssub.s32 1, %s6
  %s9 = scalar_select 0, %s8, %s6
  loop: start=0, step=1, limit=4
  $region2: #{slimmable_tdnn_forward.6} parent=0 // loop_pre_header
    _
  $region3: #{slimmable_tdnn_forward.6} parent=0 // loop_header
    %s11 = sphi 0, %s15
    %p12 = scmp.ge.s32.totalorder %s11, 4
    %s18 = sphi 0, %s37
    %s19 = sphi 0, %s33
    %s20 = sphi 0, %s29
    %s21 = sphi 0, %s18
    %s22 = sphi 0, %s19
    %s23 = sphi 0, %s20
    %s24 = sphi 0, %s21
    %s25 = sphi 0, %s22
    %s26 = sphi 0, %s23
    %s42 = sphi 0, %s44
    %s45 = sphi 0, %s42
    %s46 = sphi 0, %s45
    %s62 = sphi 0, %s46
    %s68 = sphi 0, %s70
    %s71 = sphi 0, %s68
    %s72 = sphi 0, %s71
    %s88 = sphi 0, %s72
    %s94 = sphi 0, %s96
    %s97 = sphi 0, %s94
    %s98 = sphi 0, %s97
    %s114 = sphi 0, %s98
    %s124 = sphi 0, %s126
    %s127 = sphi 0, %s124
    %s128 = sphi 0, %s127
    %s144 = sphi 0, %s128
    %s154 = sphi 0, %s156
    %s157 = sphi 0, %s154
    %s158 = sphi 0, %s157
    %s174 = sphi 0, %s158
  $region4: #{slimmable_tdnn_forward.6} parent=0 // loop_header_branch
    %14 = sbr.rel (%p12) target = $region8
  $region5: #{slimmable_tdnn_forward.6} parent=0 // loop_body
    %s16 = ssub.s32 %s11, 1
    %s17 = ssub.s32 %s11, 2
    %s27 = sadd.s32 1, %s20
    %p28 = scmp.ge.s32.totalorder %s27, 1
    %s29 = scalar_select %p28, 0, %s27
    %s30 = sadd.s32 1, %s19
    %s31 = scalar_select %p28, %s30, %s19
    %p32 = scmp.ge.s32.totalorder %s31, 1
    %s33 = scalar_select %p32, 0, %s31
    %s34 = sadd.s32 1, %s18
    %s35 = scalar_select %p32, %s34, %s18
    %p36 = scmp.ge.s32.totalorder %s35, 2
    %s37 = scalar_select %p36, 0, %s35
    %s38 = ssub.s32 %s18, %s37
    %s39 = ssub.s32 %s20, %s29
    %s40 = sor.u32 %s38, %s39
    %p41 = scmp.eq.s32.totalorder %s40, 0
    %s43 = sadd.s32 %s42, 1
    %s44 = scalar_select %p41, %s42, %s43
    %p47 = pneg %p41
    %p48 = scmp.eq.s32.totalorder %s11, 1
    %p49 = por %p47, %p48
    %p50 = scmp.ne.s32.totalorder %s42, %s45
    %p51 = scmp.eq.s32.totalorder %s11, 0
    %p52 = por %p50, %p51
    %p53 = scmp.ne.s32.totalorder %s42, %s45
    %p54 = scmp.eq.s32.totalorder %s16, 1
    %p55 = por %p53, %p54
    %p56 = scmp.ne.s32.totalorder %s45, %s46
    %p57 = scmp.eq.s32.totalorder %s16, 0
    %p58 = por %p56, %p57
    %p59 = scmp.ne.s32.totalorder %s45, %s46
    %p60 = scmp.eq.s32.totalorder %s17, 1
    %p61 = por %p59, %p60
    %p63 = scmp.ne.s32.totalorder %s46, %s62
    %p64 = scmp.eq.s32.totalorder %s17, 0
    %p65 = por %p63, %p64
    %s66 = ssub.s32 %s19, %s33
    %p67 = scmp.eq.s32.totalorder %s66, 0
    %s69 = sadd.s32 %s68, 1
    %s70 = scalar_select %p67, %s68, %s69
    %p73 = pneg %p67
    %p74 = scmp.eq.s32.totalorder %s11, 1
    %p75 = por %p73, %p74
    %p76 = scmp.ne.s32.totalorder %s68, %s71
    %p77 = scmp.eq.s32.totalorder %s11, 0
    %p78 = por %p76, %p77
    %p79 = scmp.ne.s32.totalorder %s68, %s71
    %p80 = scmp.eq.s32.totalorder %s16, 1
    %p81 = por %p79, %p80
    %p82 = scmp.ne.s32.totalorder %s71, %s72
    %p83 = scmp.eq.s32.totalorder %s16, 0
    %p84 = por %p82, %p83
    %p85 = scmp.ne.s32.totalorder %s71, %s72
    %p86 = scmp.eq.s32.totalorder %s17, 1
    %p87 = por %p85, %p86
    %p89 = scmp.ne.s32.totalorder %s72, %s88
    %p90 = scmp.eq.s32.totalorder %s17, 0
    %p91 = por %p89, %p90
    %s92 = ssub.s32 %s19, %s33
    %p93 = scmp.eq.s32.totalorder %s92, 0
    %s95 = sadd.s32 %s94, 1
    %s96 = scalar_select %p93, %s94, %s95
    %p99 = pneg %p93
    %p100 = scmp.eq.s32.totalorder %s11, 1
    %p101 = por %p99, %p100
    %p102 = scmp.ne.s32.totalorder %s94, %s97
    %p103 = scmp.eq.s32.totalorder %s11, 0
    %p104 = por %p102, %p103
    %p105 = scmp.ne.s32.totalorder %s94, %s97
    %p106 = scmp.eq.s32.totalorder %s16, 1
    %p107 = por %p105, %p106
    %p108 = scmp.ne.s32.totalorder %s97, %s98
    %p109 = scmp.eq.s32.totalorder %s16, 0
    %p110 = por %p108, %p109
    %p111 = scmp.ne.s32.totalorder %s97, %s98
    %p112 = scmp.eq.s32.totalorder %s17, 1
    %p113 = por %p111, %p112
    %p115 = scmp.ne.s32.totalorder %s98, %s114
    %p116 = scmp.eq.s32.totalorder %s17, 0
    %p117 = por %p115, %p116
    %s118 = ssub.s32 %s18, %s37
    %s119 = ssub.s32 %s20, %s29
    %s120 = sor.u32 %s118, %s119
    %s121 = ssub.s32 %s19, %s33
    %s122 = sor.u32 %s120, %s121
    %p123 = scmp.eq.s32.totalorder %s122, 0
    %s125 = sadd.s32 %s124, 1
    %s126 = scalar_select %p123, %s124, %s125
    %p129 = pneg %p123
    %p130 = scmp.eq.s32.totalorder %s11, 1
    %p131 = por %p129, %p130
    %p132 = scmp.ne.s32.totalorder %s124, %s127
    %p133 = scmp.eq.s32.totalorder %s11, 0
    %p134 = por %p132, %p133
    %p135 = scmp.ne.s32.totalorder %s124, %s127
    %p136 = scmp.eq.s32.totalorder %s16, 1
    %p137 = por %p135, %p136
    %p138 = scmp.ne.s32.totalorder %s127, %s128
    %p139 = scmp.eq.s32.totalorder %s16, 0
    %p140 = por %p138, %p139
    %p141 = scmp.ne.s32.totalorder %s127, %s128
    %p142 = scmp.eq.s32.totalorder %s17, 1
    %p143 = por %p141, %p142
    %p145 = scmp.ne.s32.totalorder %s128, %s144
    %p146 = scmp.eq.s32.totalorder %s17, 0
    %p147 = por %p145, %p146
    %s148 = ssub.s32 %s18, %s37
    %s149 = ssub.s32 %s20, %s29
    %s150 = sor.u32 %s148, %s149
    %s151 = ssub.s32 %s19, %s33
    %s152 = sor.u32 %s150, %s151
    %p153 = scmp.eq.s32.totalorder %s152, 0
    %s155 = sadd.s32 %s154, 1
    %s156 = scalar_select %p153, %s154, %s155
    %p159 = pneg %p153
    %p160 = scmp.eq.s32.totalorder %s11, 1
    %p161 = por %p159, %p160
    %p162 = scmp.ne.s32.totalorder %s154, %s157
    %p163 = scmp.eq.s32.totalorder %s11, 0
    %p164 = por %p162, %p163
    %p165 = scmp.ne.s32.totalorder %s154, %s157
    %p166 = scmp.eq.s32.totalorder %s16, 1
    %p167 = por %p165, %p166
    %p168 = scmp.ne.s32.totalorder %s157, %s158
    %p169 = scmp.eq.s32.totalorder %s16, 0
    %p170 = por %p168, %p169
    %p171 = scmp.ne.s32.totalorder %s157, %s158
    %p172 = scmp.eq.s32.totalorder %s17, 1
    %p173 = por %p171, %p172
    %p175 = scmp.ne.s32.totalorder %s158, %s174
    %p176 = scmp.eq.s32.totalorder %s17, 0
    %p177 = por %p175, %p176
    %p178 = scmp.le.s32.totalorder 1, %s11
    %p179 = scmp.lt.s32.totalorder %s11, 3
    %p180 = pnand %p178, %p179
    %p181 = pneg %p180
    // Predicated region
    $region9: #{slimmable_tdnn_forward.6} parent=5 // pred_check
      _
    $region10: #{slimmable_tdnn_forward.6} parent=5 // pred_check_branch
      %183 = sbr.rel (%p180) target = $region12
    $region11: #{slimmable_tdnn_forward.6} parent=5 // pred_region
      %s184 = ssub.s32 %s11, 1
      // Predicated region
      $region13: #{slimmable_tdnn_forward.6} parent=11 // pred_check
        %p185 = pneg %p84
      $region14: #{slimmable_tdnn_forward.6} parent=11 // pred_check_branch
        %187 = sbr.rel (%p185) target = $region16
      $region15: #{slimmable_tdnn_forward.6} parent=11 // pred_region
        %p188 = scmp.lt.s32.totalorder %s22, 0
        %s189 = scalar_select %p188, %s22, 0
        %s190 = smul.addr %s189, 4
        %s191 = scalar_lea.vmem %s1, %s190
      $region16: #{slimmable_tdnn_forward.6} parent=11 // pred_fallthru
        _
      // Predicated region
      $region17: #{slimmable_tdnn_forward.6} parent=11 // pred_check
        %p192 = pneg %p110
      $region18: #{slimmable_tdnn_forward.6} parent=11 // pred_check_branch
        %194 = sbr.rel (%p192) target = $region20
      $region19: #{slimmable_tdnn_forward.6} parent=11 // pred_region
        %p195 = scmp.lt.s32.totalorder %s22, 0
        %s196 = scalar_select %p195, %s22, 0
        %s197 = scalar_lea.vmem %s2, %s196
      $region20: #{slimmable_tdnn_forward.6} parent=11 // pred_fallthru
        _
    $region12: #{slimmable_tdnn_forward.6} parent=5 // pred_fallthru
      _
    %p198 = scmp.lt.s32.totalorder %s11, 2
    // Predicated region
    $region21: #{slimmable_tdnn_forward.6} parent=5 // pred_check
      %p199 = pneg %p198
    $region22: #{slimmable_tdnn_forward.6} parent=5 // pred_check_branch
      %201 = sbr.rel (%p199) target = $region24
    $region23: #{slimmable_tdnn_forward.6} parent=5 // pred_region
      // Predicated region
      $region25: #{slimmable_tdnn_forward.6} parent=23 // pred_check
        %p202 = pneg %p52
      $region26: #{slimmable_tdnn_forward.6} parent=23 // pred_check_branch
        %204 = sbr.rel (%p202) target = $region28
      $region27: #{slimmable_tdnn_forward.6} parent=23 // pred_region
        %s205 = smul.u32 4, %s20
        %p206 = scmp.lt.s32.totalorder %s18, 1
        %s207 = scalar_select %p206, %s18, 1
        %p208 = scmp.lt.s32.totalorder %s205, 3
        %s209 = scalar_select %p208, %s205, 3
        %s210 = smul.addr %s207, 20
        %s211 = sadd.s32 %s209, %s210
        %s212 = smul.addr %s211, 4
        %s213 = scalar_lea.vmem %s0, %s212
        %s214 = smul.u32 4, %s20
      $region28: #{slimmable_tdnn_forward.6} parent=23 // pred_fallthru
        _
    $region24: #{slimmable_tdnn_forward.6} parent=5 // pred_fallthru
      _
    %p215 = scmp.le.s32.totalorder 1, %s11
    %p216 = scmp.lt.s32.totalorder %s11, 3
    %p217 = pnand %p215, %p216
    %p218 = pneg %p217
    // Predicated region
    $region29: #{slimmable_tdnn_forward.6} parent=5 // pred_check
      _
    $region30: #{slimmable_tdnn_forward.6} parent=5 // pred_check_branch
      %220 = sbr.rel (%p217) target = $region32
    $region31: #{slimmable_tdnn_forward.6} parent=5 // pred_region
      %s221 = ssub.s32 %s11, 1
      %s222 = smul.u32 4, %s23
      %p223 = scmp.lt.s32.totalorder %s21, 1
      %s224 = scalar_select %p223, %s21, 1
      %p225 = scmp.lt.s32.totalorder %s222, 3
      %s226 = scalar_select %p225, %s222, 3
      %s227 = smul.addr %s224, 20
      %s228 = sadd.s32 %s226, %s227
      %s229 = smul.addr %s228, 4
      %s230 = scalar_lea.vmem %s0, %s229
      %p231 = pneg %p58
      %p232 = pneg %p55
      %p233 = scmp.lt.s32.totalorder %s22, 0
      %s234 = scalar_select %p233, %s22, 0
      %s235 = smul.addr %s234, 4
      %s236 = scalar_lea.vmem %s1, %s235
      %p237 = pneg %p84
      %p238 = pneg %p81
      %p239 = scmp.lt.s32.totalorder %s22, 0
      %s240 = scalar_select %p239, %s22, 0
      %s241 = scalar_lea.vmem %s2, %s240
      %p242 = pneg %p110
      %p243 = pneg %p107
      %p244 = pneg %p140
      %p245 = pneg %p137
      %s246 = smul.u32 4, %s23
      %p247 = scmp.lt.s32.totalorder %s21, 1
      %s248 = scalar_select %p247, %s21, 1
      %p249 = scmp.lt.s32.totalorder %s246, 3
      %s250 = scalar_select %p249, %s246, 3
      %p251 = scmp.lt.s32.totalorder %s22, 0
      %s252 = scalar_select %p251, %s22, 0
      %s253 = sadd.s32 %s252, %s250
      %s254 = smul.addr %s248, 4
      %s255 = sadd.s32 %s253, %s254
      %s256 = smul.addr %s255, 4
      %s257 = scalar_lea.vmem %s3, %s256
      %p258 = pneg %p170
      %p259 = pneg %p167
      %p260 = scmp.lt.s32.totalorder %s21, 1
      %s261 = scalar_select %p260, %s21, 1
      %p262 = scmp.lt.s32.totalorder %s23, 0
      %s263 = scalar_select %p262, %s23, 0
      %p264 = scmp.lt.s32.totalorder %s22, 0
      %s265 = scalar_select %p264, %s22, 0
      %s266 = sadd.s32 %s265, %s263
      %s267 = sadd.s32 %s266, %s261
      %s268 = smul.addr %s267, 8
      %s269 = scalar_lea.vmem %s4, %s268
      %s270 = smul.u32 4, %s23
      %p271 = scmp.lt.s32.totalorder %s21, 1
      %s272 = scalar_select %p271, %s21, 1
      %p273 = scmp.lt.s32.totalorder %s270, 3
      %s274 = scalar_select %p273, %s270, 3
      %s275 = smul.addr %s272, 20
      %s276 = sadd.s32 %s274, %s275
      %s277 = smul.addr %s276, 4
      %s278 = scalar_lea.vmem %s0, %s277
      %s279 = smul.u32 4, %s23
      %p280 = scmp.lt.s32.totalorder %s22, 0
      %s281 = scalar_select %p280, %s22, 0
      %s282 = smul.addr %s281, 4
      %s283 = scalar_lea.vmem %s1, %s282
      %p284 = scmp.lt.s32.totalorder %s22, 0
      %s285 = scalar_select %p284, %s22, 0
      %s286 = scalar_lea.vmem %s2, %s285
      %s287 = smul.u32 4, %s23
      %p288 = scmp.lt.s32.totalorder %s21, 1
      %s289 = scalar_select %p288, %s21, 1
      %p290 = scmp.lt.s32.totalorder %s287, 3
      %s291 = scalar_select %p290, %s287, 3
      %p292 = scmp.lt.s32.totalorder %s22, 0
      %s293 = scalar_select %p292, %s22, 0
      %s294 = sadd.s32 %s293, %s291
      %s295 = smul.addr %s289, 4
      %s296 = sadd.s32 %s294, %s295
      %s297 = smul.addr %s296, 4
      %s298 = scalar_lea.vmem %s3, %s297
      %s299 = smul.u32 4, %s23
      %p300 = scmp.lt.s32.totalorder %s21, 1
      %s301 = scalar_select %p300, %s21, 1
      %p302 = scmp.lt.s32.totalorder %s23, 0
      %s303 = scalar_select %p302, %s23, 0
      %p304 = scmp.lt.s32.totalorder %s22, 0
      %s305 = scalar_select %p304, %s22, 0
      %s306 = sadd.s32 %s305, %s303
      %s307 = sadd.s32 %s306, %s301
      %s308 = smul.addr %s307, 8
      %s309 = scalar_lea.vmem %s4, %s308
      %v311 = vld [vmem:[%s278] sm:$0xf]
      %v312 = vld [vmem:[%s278 + $0x4] sm:$0xf]
      %v313 = vld [vmem:[%s278 + $0x8] sm:$0xf]
      %v314 = vld [vmem:[%s278 + $0xc] sm:$0xf]
      %v315 = vld [vmem:[%s283] sm:$0xf]
      %v316 = vld [vmem:[%s283 + $0x4] sm:$0xf]
      %v317 = vld [vmem:[%s283 + $0x8] sm:$0xf]
      %v318 = vld [vmem:[%s283 + $0xc] sm:$0xf]
      %v319 = vld [vmem:[%s283 + $0x10] sm:$0xf]
      %v320 = vld [vmem:[%s283 + $0x14] sm:$0xf]
      %v321 = vld [vmem:[%s283 + $0x18] sm:$0xf]
      %v322 = vld [vmem:[%s283 + $0x1c] sm:$0xf]
      %v323 = vld [vmem:[%s283 + $0x20] sm:$0xf]
      %v324 = vld [vmem:[%s283 + $0x24] sm:$0xf]
      %v325 = vld [vmem:[%s283 + $0x28] sm:$0xf]
      %v326 = vld [vmem:[%s283 + $0x2c] sm:$0xf]
      %v327 = vld [vmem:[%s283 + $0x30] sm:$0xf]
      %v328 = vld [vmem:[%s283 + $0x34] sm:$0xf]
      %v329 = vld [vmem:[%s283 + $0x38] sm:$0xf]
      %v330 = vld [vmem:[%s283 + $0x3c] sm:$0xf]
      %s331 = scalar_lea.vmem %s278, 16
      %v332 = vld [vmem:[%s331] sm:$0xf]
      %v333 = vld [vmem:[%s331 + $0x4] sm:$0xf]
      %v334 = vld [vmem:[%s331 + $0x8] sm:$0xf]
      %v335 = vld [vmem:[%s331 + $0xc] sm:$0xf]
      %s336 = scalar_lea.vmem %s283, 64
      %v337 = vld [vmem:[%s336] sm:$0xf]
      %v338 = vld [vmem:[%s336 + $0x4] sm:$0xf]
      %v339 = vld [vmem:[%s336 + $0x8] sm:$0xf]
      %v340 = vld [vmem:[%s336 + $0xc] sm:$0xf]
      %v341 = vld [vmem:[%s336 + $0x10] sm:$0xf]
      %v342 = vld [vmem:[%s336 + $0x14] sm:$0xf]
      %v343 = vld [vmem:[%s336 + $0x18] sm:$0xf]
      %v344 = vld [vmem:[%s336 + $0x1c] sm:$0xf]
      %v345 = vld [vmem:[%s336 + $0x20] sm:$0xf]
      %v346 = vld [vmem:[%s336 + $0x24] sm:$0xf]
      %v347 = vld [vmem:[%s336 + $0x28] sm:$0xf]
      %v348 = vld [vmem:[%s336 + $0x2c] sm:$0xf]
      %v349 = vld [vmem:[%s336 + $0x30] sm:$0xf]
      %v350 = vld [vmem:[%s336 + $0x34] sm:$0xf]
      %v351 = vld [vmem:[%s336 + $0x38] sm:$0xf]
      %v352 = vld [vmem:[%s336 + $0x3c] sm:$0xf]
      %v357 = vunpack.c.l.b16 %v332
      %v358 = vunpack.c.l.b16 %v333
      %v359 = vunpack.c.l.b16 %v334
      %v360 = vunpack.c.l.b16 %v335
      %v361 = vpack.c.b16 %v358, %v357
      %v362 = vpack.c.b16 %v360, %v359
      %v381 = vunpack.c.l.b16 %v337
      %v382 = vunpack.c.l.b16 %v338
      %v383 = vunpack.c.l.b16 %v339
      %v384 = vunpack.c.l.b16 %v340
      %v385 = vunpack.c.l.b16 %v341
      %v386 = vunpack.c.l.b16 %v342
      %v387 = vunpack.c.l.b16 %v343
      %v388 = vunpack.c.l.b16 %v344
      %v389 = vunpack.c.l.b16 %v345
      %v390 = vunpack.c.l.b16 %v346
      %v391 = vunpack.c.l.b16 %v347
      %v392 = vunpack.c.l.b16 %v348
      %v393 = vunpack.c.l.b16 %v349
      %v394 = vunpack.c.l.b16 %v350
      %v395 = vunpack.c.l.b16 %v351
      %v396 = vunpack.c.l.b16 %v352
      %v397 = vpack.c.b16 %v382, %v381
      %v398 = vpack.c.b16 %v384, %v383
      %v399 = vpack.c.b16 %v386, %v385
      %v400 = vpack.c.b16 %v388, %v387
      %v401 = vpack.c.b16 %v390, %v389
      %v402 = vpack.c.b16 %v392, %v391
      %v403 = vpack.c.b16 %v394, %v393
      %v404 = vpack.c.b16 %v396, %v395
      %413 = vmatprep.subr.bf16.mxu0 0
      %414 = vmatpush1.bf16.msra.mxu0 %v404
      %415 = vmatprep.subr.bf16.mxu0 0
      %416 = vmatpush1.bf16.msra.mxu0 %v403
      %417 = vmatprep.subr.bf16.mxu0 0
      %418 = vmatpush1.bf16.msra.mxu0 %v402
      %419 = vmatprep.subr.bf16.mxu0 0
      %420 = vmatpush1.bf16.msra.mxu0 %v401
      %421 = vmatprep.subr.bf16.mxu0 0
      %422 = vmatpush1.bf16.msra.mxu0 %v400
      %423 = vmatprep.subr.bf16.mxu0 0
      %424 = vmatpush1.bf16.msra.mxu0 %v399
      %425 = vmatprep.subr.bf16.mxu0 0
      %426 = vmatpush1.bf16.msra.mxu0 %v398
      %427 = vmatprep.subr.bf16.mxu0 0
      %428 = vmatpush1.bf16.msra.mxu0 %v397
      %429 = vmatprep.subr.bf16.mxu0 0
      %430 = vmatpush2.bf16.msra.mxu0 0
      %431 = vmatprep.subr.bf16.mxu0 0
      %432 = vmatpush2.bf16.msra.mxu0 0
      %433 = vmatprep.subr.bf16.mxu0 0
      %434 = vmatpush2.bf16.msra.mxu0 0
      %435 = vmatprep.subr.bf16.mxu0 0
      %436 = vmatpush2.bf16.msra.mxu0 0
      %437 = vmatprep.subr.bf16.mxu0 0
      %438 = vmatpush2.bf16.msra.mxu0 0
      %439 = vmatprep.subr.bf16.mxu0 0
      %440 = vmatpush2.bf16.msra.mxu0 0
      %441 = vmatprep.subr.bf16.mxu0 0
      %442 = vmatpush2.bf16.msra.mxu0 0
      %443 = vmatprep.subr.bf16.mxu0 0
      %444 = vmatpush2.bf16.msra.mxu0 0
      %445 = vmatprep.mubr.bf16.mxu0 0
      %446 = vmatmul.mubr.bf16.gmra.mxu0 %v361
      %v447 = vpop.f32.mrf.mxu0
      %v448 = vadd.f32 0.0, %v447
      %v449 = vpop.f32.mrf.mxu0
      %v450 = vpop.f32.mrf.mxu0
      %v451 = vadd.f32 0.0, %v450
      %v452 = vpop.f32.mrf.mxu0
      %453 = vmatprep.mubr.bf16.mxu0 0
      %454 = vmatmul.mubr.bf16.gmra.mxu0 %v362
      %v455 = vpop.f32.mrf.mxu0
      %v456 = vadd.f32 0.0, %v455
      %v457 = vpop.f32.mrf.mxu0
      %v458 = vpop.f32.mrf.mxu0
      %v459 = vadd.f32 0.0, %v458
      %v460 = vpop.f32.mrf.mxu0
      %461 = vdwg.mxu0
      %v466 = vunpack.c.l.b16 %v311
      %v467 = vunpack.c.l.b16 %v312
      %v468 = vunpack.c.l.b16 %v313
      %v469 = vunpack.c.l.b16 %v314
      %v470 = vpack.c.b16 %v467, %v466
      %v471 = vpack.c.b16 %v469, %v468
      %v490 = vunpack.c.l.b16 %v315
      %v491 = vunpack.c.l.b16 %v316
      %v492 = vunpack.c.l.b16 %v317
      %v493 = vunpack.c.l.b16 %v318
      %v494 = vunpack.c.l.b16 %v319
      %v495 = vunpack.c.l.b16 %v320
      %v496 = vunpack.c.l.b16 %v321
      %v497 = vunpack.c.l.b16 %v322
      %v498 = vunpack.c.l.b16 %v323
      %v499 = vunpack.c.l.b16 %v324
      %v500 = vunpack.c.l.b16 %v325
      %v501 = vunpack.c.l.b16 %v326
      %v502 = vunpack.c.l.b16 %v327
      %v503 = vunpack.c.l.b16 %v328
      %v504 = vunpack.c.l.b16 %v329
      %v505 = vunpack.c.l.b16 %v330
      %v506 = vpack.c.b16 %v491, %v490
      %v507 = vpack.c.b16 %v493, %v492
      %v508 = vpack.c.b16 %v495, %v494
      %v509 = vpack.c.b16 %v497, %v496
      %v510 = vpack.c.b16 %v499, %v498
      %v511 = vpack.c.b16 %v501, %v500
      %v512 = vpack.c.b16 %v503, %v502
      %v513 = vpack.c.b16 %v505, %v504
      %522 = vmatprep.subr.bf16.mxu0 0
      %523 = vmatpush1.bf16.msra.mxu0 %v513
      %524 = vmatprep.subr.bf16.mxu0 0
      %525 = vmatpush1.bf16.msra.mxu0 %v512
      %526 = vmatprep.subr.bf16.mxu0 0
      %527 = vmatpush1.bf16.msra.mxu0 %v511
      %528 = vmatprep.subr.bf16.mxu0 0
      %529 = vmatpush1.bf16.msra.mxu0 %v510
      %530 = vmatprep.subr.bf16.mxu0 0
      %531 = vmatpush1.bf16.msra.mxu0 %v509
      %532 = vmatprep.subr.bf16.mxu0 0
      %533 = vmatpush1.bf16.msra.mxu0 %v508
      %534 = vmatprep.subr.bf16.mxu0 0
      %535 = vmatpush1.bf16.msra.mxu0 %v507
      %536 = vmatprep.subr.bf16.mxu0 0
      %537 = vmatpush1.bf16.msra.mxu0 %v506
      %538 = vmatprep.subr.bf16.mxu0 0
      %539 = vmatpush2.bf16.msra.mxu0 0
      %540 = vmatprep.subr.bf16.mxu0 0
      %541 = vmatpush2.bf16.msra.mxu0 0
      %542 = vmatprep.subr.bf16.mxu0 0
      %543 = vmatpush2.bf16.msra.mxu0 0
      %544 = vmatprep.subr.bf16.mxu0 0
      %545 = vmatpush2.bf16.msra.mxu0 0
      %546 = vmatprep.subr.bf16.mxu0 0
      %547 = vmatpush2.bf16.msra.mxu0 0
      %548 = vmatprep.subr.bf16.mxu0 0
      %549 = vmatpush2.bf16.msra.mxu0 0
      %550 = vmatprep.subr.bf16.mxu0 0
      %551 = vmatpush2.bf16.msra.mxu0 0
      %552 = vmatprep.subr.bf16.mxu0 0
      %553 = vmatpush2.bf16.msra.mxu0 0
      %554 = vmatprep.mubr.bf16.mxu0 0
      %555 = vmatmul.mubr.bf16.gmra.mxu0 %v470
      %v556 = vpop.f32.mrf.mxu0
      %v557 = vadd.f32 %v448, %v556
      %v558 = vpop.f32.mrf.mxu0
      %v559 = vpop.f32.mrf.mxu0
      %v560 = vadd.f32 %v451, %v559
      %v561 = vpop.f32.mrf.mxu0
      %562 = vmatprep.mubr.bf16.mxu0 0
      %563 = vmatmul.mubr.bf16.gmra.mxu0 %v471
      %v564 = vpop.f32.mrf.mxu0
      %v565 = vadd.f32 %v456, %v564
      %v566 = vpop.f32.mrf.mxu0
      %v567 = vpop.f32.mrf.mxu0
      %v568 = vadd.f32 %v459, %v567
      %v569 = vpop.f32.mrf.mxu0
      %570 = vdwg.mxu0
      %s571 = scalar_lea.vmem %s278, 32
      %v572 = vld [vmem:[%s571] sm:$0xf]
      %v573 = vld [vmem:[%s571 + $0x4] sm:$0xf]
      %v574 = vld [vmem:[%s571 + $0x8] sm:$0xf]
      %v575 = vld [vmem:[%s571 + $0xc] sm:$0xf]
      %s576 = scalar_lea.vmem %s283, 128
      %v577 = vld [vmem:[%s576] sm:$0xf]
      %v578 = vld [vmem:[%s576 + $0x4] sm:$0xf]
      %v579 = vld [vmem:[%s576 + $0x8] sm:$0xf]
      %v580 = vld [vmem:[%s576 + $0xc] sm:$0xf]
      %v581 = vld [vmem:[%s576 + $0x10] sm:$0xf]
      %v582 = vld [vmem:[%s576 + $0x14] sm:$0xf]
      %v583 = vld [vmem:[%s576 + $0x18] sm:$0xf]
      %v584 = vld [vmem:[%s576 + $0x1c] sm:$0xf]
      %v585 = vld [vmem:[%s576 + $0x20] sm:$0xf]
      %v586 = vld [vmem:[%s576 + $0x24] sm:$0xf]
      %v587 = vld [vmem:[%s576 + $0x28] sm:$0xf]
      %v588 = vld [vmem:[%s576 + $0x2c] sm:$0xf]
      %v589 = vld [vmem:[%s576 + $0x30] sm:$0xf]
      %v590 = vld [vmem:[%s576 + $0x34] sm:$0xf]
      %v591 = vld [vmem:[%s576 + $0x38] sm:$0xf]
      %v592 = vld [vmem:[%s576 + $0x3c] sm:$0xf]
      %v597 = vunpack.c.l.b16 %v572
      %v598 = vunpack.c.l.b16 %v573
      %v599 = vunpack.c.l.b16 %v574
      %v600 = vunpack.c.l.b16 %v575
      %v601 = vpack.c.b16 %v598, %v597
      %v602 = vpack.c.b16 %v600, %v599
      %v621 = vunpack.c.l.b16 %v577
      %v622 = vunpack.c.l.b16 %v578
      %v623 = vunpack.c.l.b16 %v579
      %v624 = vunpack.c.l.b16 %v580
      %v625 = vunpack.c.l.b16 %v581
      %v626 = vunpack.c.l.b16 %v582
      %v627 = vunpack.c.l.b16 %v583
      %v628 = vunpack.c.l.b16 %v584
      %v629 = vunpack.c.l.b16 %v585
      %v630 = vunpack.c.l.b16 %v586
      %v631 = vunpack.c.l.b16 %v587
      %v632 = vunpack.c.l.b16 %v588
      %v633 = vunpack.c.l.b16 %v589
      %v634 = vunpack.c.l.b16 %v590
      %v635 = vunpack.c.l.b16 %v591
      %v636 = vunpack.c.l.b16 %v592
      %v637 = vpack.c.b16 %v622, %v621
      %v638 = vpack.c.b16 %v624, %v623
      %v639 = vpack.c.b16 %v626, %v625
      %v640 = vpack.c.b16 %v628, %v627
      %v641 = vpack.c.b16 %v630, %v629
      %v642 = vpack.c.b16 %v632, %v631
      %v643 = vpack.c.b16 %v634, %v633
      %v644 = vpack.c.b16 %v636, %v635
      %653 = vmatprep.subr.bf16.mxu0 0
      %654 = vmatpush1.bf16.msra.mxu0 %v644
      %655 = vmatprep.subr.bf16.mxu0 0
      %656 = vmatpush1.bf16.msra.mxu0 %v643
      %657 = vmatprep.subr.bf16.mxu0 0
      %658 = vmatpush1.bf16.msra.mxu0 %v642
      %659 = vmatprep.subr.bf16.mxu0 0
      %660 = vmatpush1.bf16.msra.mxu0 %v641
      %661 = vmatprep.subr.bf16.mxu0 0
      %662 = vmatpush1.bf16.msra.mxu0 %v640
      %663 = vmatprep.subr.bf16.mxu0 0
      %664 = vmatpush1.bf16.msra.mxu0 %v639
      %665 = vmatprep.subr.bf16.mxu0 0
      %666 = vmatpush1.bf16.msra.mxu0 %v638
      %667 = vmatprep.subr.bf16.mxu0 0
      %668 = vmatpush1.bf16.msra.mxu0 %v637
      %669 = vmatprep.subr.bf16.mxu0 0
      %670 = vmatpush2.bf16.msra.mxu0 0
      %671 = vmatprep.subr.bf16.mxu0 0
      %672 = vmatpush2.bf16.msra.mxu0 0
      %673 = vmatprep.subr.bf16.mxu0 0
      %674 = vmatpush2.bf16.msra.mxu0 0
      %675 = vmatprep.subr.bf16.mxu0 0
      %676 = vmatpush2.bf16.msra.mxu0 0
      %677 = vmatprep.subr.bf16.mxu0 0
      %678 = vmatpush2.bf16.msra.mxu0 0
      %679 = vmatprep.subr.bf16.mxu0 0
      %680 = vmatpush2.bf16.msra.mxu0 0
      %681 = vmatprep.subr.bf16.mxu0 0
      %682 = vmatpush2.bf16.msra.mxu0 0
      %683 = vmatprep.subr.bf16.mxu0 0
      %684 = vmatpush2.bf16.msra.mxu0 0
      %685 = vmatprep.mubr.bf16.mxu0 0
      %686 = vmatmul.mubr.bf16.gmra.mxu0 %v601
      %v687 = vpop.f32.mrf.mxu0
      %v688 = vadd.f32 0.0, %v687
      %v689 = vpop.f32.mrf.mxu0
      %v690 = vpop.f32.mrf.mxu0
      %v691 = vadd.f32 0.0, %v690
      %v692 = vpop.f32.mrf.mxu0
      %693 = vmatprep.mubr.bf16.mxu0 0
      %694 = vmatmul.mubr.bf16.gmra.mxu0 %v602
      %v695 = vpop.f32.mrf.mxu0
      %v696 = vadd.f32 0.0, %v695
      %v697 = vpop.f32.mrf.mxu0
      %v698 = vpop.f32.mrf.mxu0
      %v699 = vadd.f32 0.0, %v698
      %v700 = vpop.f32.mrf.mxu0
      %701 = vdwg.mxu0
      %v702 = vadd.f32 %v557, %v688
      %v703 = vadd.f32 %v560, %v691
      %v704 = vadd.f32 %v565, %v696
      %v705 = vadd.f32 %v568, %v699
      %s706 = scalar_lea.vmem %s278, 48
      %v707 = vld [vmem:[%s706] sm:$0xf]
      %v708 = vld [vmem:[%s706 + $0x4] sm:$0xf]
      %v709 = vld [vmem:[%s706 + $0x8] sm:$0xf]
      %v710 = vld [vmem:[%s706 + $0xc] sm:$0xf]
      %s711 = scalar_lea.vmem %s283, 192
      %v712 = vld [vmem:[%s711] sm:$0xf]
      %v713 = vld [vmem:[%s711 + $0x4] sm:$0xf]
      %v714 = vld [vmem:[%s711 + $0x8] sm:$0xf]
      %v715 = vld [vmem:[%s711 + $0xc] sm:$0xf]
      %v716 = vld [vmem:[%s711 + $0x10] sm:$0xf]
      %v717 = vld [vmem:[%s711 + $0x14] sm:$0xf]
      %v718 = vld [vmem:[%s711 + $0x18] sm:$0xf]
      %v719 = vld [vmem:[%s711 + $0x1c] sm:$0xf]
      %v720 = vld [vmem:[%s711 + $0x20] sm:$0xf]
      %v721 = vld [vmem:[%s711 + $0x24] sm:$0xf]
      %v722 = vld [vmem:[%s711 + $0x28] sm:$0xf]
      %v723 = vld [vmem:[%s711 + $0x2c] sm:$0xf]
      %v724 = vld [vmem:[%s711 + $0x30] sm:$0xf]
      %v725 = vld [vmem:[%s711 + $0x34] sm:$0xf]
      %v726 = vld [vmem:[%s711 + $0x38] sm:$0xf]
      %v727 = vld [vmem:[%s711 + $0x3c] sm:$0xf]
      %v732 = vunpack.c.l.b16 %v707
      %v733 = vunpack.c.l.b16 %v708
      %v734 = vunpack.c.l.b16 %v709
      %v735 = vunpack.c.l.b16 %v710
      %v736 = vpack.c.b16 %v733, %v732
      %v737 = vpack.c.b16 %v735, %v734
      %v756 = vunpack.c.l.b16 %v712
      %v757 = vunpack.c.l.b16 %v713
      %v758 = vunpack.c.l.b16 %v714
      %v759 = vunpack.c.l.b16 %v715
      %v760 = vunpack.c.l.b16 %v716
      %v761 = vunpack.c.l.b16 %v717
      %v762 = vunpack.c.l.b16 %v718
      %v763 = vunpack.c.l.b16 %v719
      %v764 = vunpack.c.l.b16 %v720
      %v765 = vunpack.c.l.b16 %v721
      %v766 = vunpack.c.l.b16 %v722
      %v767 = vunpack.c.l.b16 %v723
      %v768 = vunpack.c.l.b16 %v724
      %v769 = vunpack.c.l.b16 %v725
      %v770 = vunpack.c.l.b16 %v726
      %v771 = vunpack.c.l.b16 %v727
      %v772 = vpack.c.b16 %v757, %v756
      %v773 = vpack.c.b16 %v759, %v758
      %v774 = vpack.c.b16 %v761, %v760
      %v775 = vpack.c.b16 %v763, %v762
      %v776 = vpack.c.b16 %v765, %v764
      %v777 = vpack.c.b16 %v767, %v766
      %v778 = vpack.c.b16 %v769, %v768
      %v779 = vpack.c.b16 %v771, %v770
      %788 = vmatprep.subr.bf16.mxu0 0
      %789 = vmatpush1.bf16.msra.mxu0 %v779
      %790 = vmatprep.subr.bf16.mxu0 0
      %791 = vmatpush1.bf16.msra.mxu0 %v778
      %792 = vmatprep.subr.bf16.mxu0 0
      %793 = vmatpush1.bf16.msra.mxu0 %v777
      %794 = vmatprep.subr.bf16.mxu0 0
      %795 = vmatpush1.bf16.msra.mxu0 %v776
      %796 = vmatprep.subr.bf16.mxu0 0
      %797 = vmatpush1.bf16.msra.mxu0 %v775
      %798 = vmatprep.subr.bf16.mxu0 0
      %799 = vmatpush1.bf16.msra.mxu0 %v774
      %800 = vmatprep.subr.bf16.mxu0 0
      %801 = vmatpush1.bf16.msra.mxu0 %v773
      %802 = vmatprep.subr.bf16.mxu0 0
      %803 = vmatpush1.bf16.msra.mxu0 %v772
      %804 = vmatprep.subr.bf16.mxu0 0
      %805 = vmatpush2.bf16.msra.mxu0 0
      %806 = vmatprep.subr.bf16.mxu0 0
      %807 = vmatpush2.bf16.msra.mxu0 0
      %808 = vmatprep.subr.bf16.mxu0 0
      %809 = vmatpush2.bf16.msra.mxu0 0
      %810 = vmatprep.subr.bf16.mxu0 0
      %811 = vmatpush2.bf16.msra.mxu0 0
      %812 = vmatprep.subr.bf16.mxu0 0
      %813 = vmatpush2.bf16.msra.mxu0 0
      %814 = vmatprep.subr.bf16.mxu0 0
      %815 = vmatpush2.bf16.msra.mxu0 0
      %816 = vmatprep.subr.bf16.mxu0 0
      %817 = vmatpush2.bf16.msra.mxu0 0
      %818 = vmatprep.subr.bf16.mxu0 0
      %819 = vmatpush2.bf16.msra.mxu0 0
      %820 = vmatprep.mubr.bf16.mxu0 0
      %821 = vmatmul.mubr.bf16.gmra.mxu0 %v736
      %v822 = vpop.f32.mrf.mxu0
      %v823 = vadd.f32 0.0, %v822
      %v824 = vpop.f32.mrf.mxu0
      %v825 = vpop.f32.mrf.mxu0
      %v826 = vadd.f32 0.0, %v825
      %v827 = vpop.f32.mrf.mxu0
      %828 = vmatprep.mubr.bf16.mxu0 0
      %829 = vmatmul.mubr.bf16.gmra.mxu0 %v737
      %v830 = vpop.f32.mrf.mxu0
      %v831 = vadd.f32 0.0, %v830
      %v832 = vpop.f32.mrf.mxu0
      %v833 = vpop.f32.mrf.mxu0
      %v834 = vadd.f32 0.0, %v833
      %v835 = vpop.f32.mrf.mxu0
      %836 = vdwg.mxu0
      %v837 = vadd.f32 %v702, %v823
      %v838 = vadd.f32 %v703, %v826
      %v839 = vadd.f32 %v704, %v831
      %v840 = vadd.f32 %v705, %v834
      %s841 = scalar_lea.vmem %s278, 64
      %v842 = vld [vmem:[%s841] sm:$0xf]
      %v843 = vld [vmem:[%s841 + $0x4] sm:$0xf]
      %v844 = vld [vmem:[%s841 + $0x8] sm:$0xf]
      %v845 = vld [vmem:[%s841 + $0xc] sm:$0xf]
      %s846 = scalar_lea.vmem %s283, 256
      %v847 = vld [vmem:[%s846] sm:$0xf]
      %v848 = vld [vmem:[%s846 + $0x4] sm:$0xf]
      %v849 = vld [vmem:[%s846 + $0x8] sm:$0xf]
      %v850 = vld [vmem:[%s846 + $0xc] sm:$0xf]
      %v851 = vld [vmem:[%s846 + $0x10] sm:$0xf]
      %v852 = vld [vmem:[%s846 + $0x14] sm:$0xf]
      %v853 = vld [vmem:[%s846 + $0x18] sm:$0xf]
      %v854 = vld [vmem:[%s846 + $0x1c] sm:$0xf]
      %v855 = vld [vmem:[%s846 + $0x20] sm:$0xf]
      %v856 = vld [vmem:[%s846 + $0x24] sm:$0xf]
      %v857 = vld [vmem:[%s846 + $0x28] sm:$0xf]
      %v858 = vld [vmem:[%s846 + $0x2c] sm:$0xf]
      %v859 = vld [vmem:[%s846 + $0x30] sm:$0xf]
      %v860 = vld [vmem:[%s846 + $0x34] sm:$0xf]
      %v861 = vld [vmem:[%s846 + $0x38] sm:$0xf]
      %v862 = vld [vmem:[%s846 + $0x3c] sm:$0xf]
      %v867 = vunpack.c.l.b16 %v842
      %v868 = vunpack.c.l.b16 %v843
      %v869 = vunpack.c.l.b16 %v844
      %v870 = vunpack.c.l.b16 %v845
      %v871 = vpack.c.b16 %v868, %v867
      %v872 = vpack.c.b16 %v870, %v869
      %v891 = vunpack.c.l.b16 %v847
      %v892 = vunpack.c.l.b16 %v848
      %v893 = vunpack.c.l.b16 %v849
      %v894 = vunpack.c.l.b16 %v850
      %v895 = vunpack.c.l.b16 %v851
      %v896 = vunpack.c.l.b16 %v852
      %v897 = vunpack.c.l.b16 %v853
      %v898 = vunpack.c.l.b16 %v854
      %v899 = vunpack.c.l.b16 %v855
      %v900 = vunpack.c.l.b16 %v856
      %v901 = vunpack.c.l.b16 %v857
      %v902 = vunpack.c.l.b16 %v858
      %v903 = vunpack.c.l.b16 %v859
      %v904 = vunpack.c.l.b16 %v860
      %v905 = vunpack.c.l.b16 %v861
      %v906 = vunpack.c.l.b16 %v862
      %v907 = vpack.c.b16 %v892, %v891
      %v908 = vpack.c.b16 %v894, %v893
      %v909 = vpack.c.b16 %v896, %v895
      %v910 = vpack.c.b16 %v898, %v897
      %v911 = vpack.c.b16 %v900, %v899
      %v912 = vpack.c.b16 %v902, %v901
      %v913 = vpack.c.b16 %v904, %v903
      %v914 = vpack.c.b16 %v906, %v905
      %923 = vmatprep.subr.bf16.mxu0 0
      %924 = vmatpush1.bf16.msra.mxu0 %v914
      %925 = vmatprep.subr.bf16.mxu0 0
      %926 = vmatpush1.bf16.msra.mxu0 %v913
      %927 = vmatprep.subr.bf16.mxu0 0
      %928 = vmatpush1.bf16.msra.mxu0 %v912
      %929 = vmatprep.subr.bf16.mxu0 0
      %930 = vmatpush1.bf16.msra.mxu0 %v911
      %931 = vmatprep.subr.bf16.mxu0 0
      %932 = vmatpush1.bf16.msra.mxu0 %v910
      %933 = vmatprep.subr.bf16.mxu0 0
      %934 = vmatpush1.bf16.msra.mxu0 %v909
      %935 = vmatprep.subr.bf16.mxu0 0
      %936 = vmatpush1.bf16.msra.mxu0 %v908
      %937 = vmatprep.subr.bf16.mxu0 0
      %938 = vmatpush1.bf16.msra.mxu0 %v907
      %939 = vmatprep.subr.bf16.mxu0 0
      %940 = vmatpush2.bf16.msra.mxu0 0
      %941 = vmatprep.subr.bf16.mxu0 0
      %942 = vmatpush2.bf16.msra.mxu0 0
      %943 = vmatprep.subr.bf16.mxu0 0
      %944 = vmatpush2.bf16.msra.mxu0 0
      %945 = vmatprep.subr.bf16.mxu0 0
      %946 = vmatpush2.bf16.msra.mxu0 0
      %947 = vmatprep.subr.bf16.mxu0 0
      %948 = vmatpush2.bf16.msra.mxu0 0
      %949 = vmatprep.subr.bf16.mxu0 0
      %950 = vmatpush2.bf16.msra.mxu0 0
      %951 = vmatprep.subr.bf16.mxu0 0
      %952 = vmatpush2.bf16.msra.mxu0 0
      %953 = vmatprep.subr.bf16.mxu0 0
      %954 = vmatpush2.bf16.msra.mxu0 0
      %955 = vmatprep.mubr.bf16.mxu0 0
      %956 = vmatmul.mubr.bf16.gmra.mxu0 %v871
      %v957 = vpop.f32.mrf.mxu0
      %v958 = vadd.f32 0.0, %v957
      %v959 = vpop.f32.mrf.mxu0
      %v960 = vpop.f32.mrf.mxu0
      %v961 = vadd.f32 0.0, %v960
      %v962 = vpop.f32.mrf.mxu0
      %963 = vmatprep.mubr.bf16.mxu0 0
      %964 = vmatmul.mubr.bf16.gmra.mxu0 %v872
      %v965 = vpop.f32.mrf.mxu0
      %v966 = vadd.f32 0.0, %v965
      %v967 = vpop.f32.mrf.mxu0
      %v968 = vpop.f32.mrf.mxu0
      %v969 = vadd.f32 0.0, %v968
      %v970 = vpop.f32.mrf.mxu0
      %971 = vdwg.mxu0
      %v972 = vadd.f32 %v837, %v958
      %v973 = vadd.f32 %v838, %v961
      %v974 = vadd.f32 %v839, %v966
      %v975 = vadd.f32 %v840, %v969
      %v976 = vld [vmem:[%s286] sm:$0x1]
      %v978 = vlaneseq
      %v979 = vshrl.u32 %v978, 7
      %v980 = vsub.s32 0, %v979
      %v981 = vrot.slane %v976, %v980
      %v983 = vadd.f32 %v972, %v981
      %v984 = vadd.f32 %v973, %v981
      %v985 = vadd.f32 %v974, %v981
      %v986 = vadd.f32 %v975, %v981
      %v987 = vmax.f32 %v983, 0.0
      %v988 = vmax.f32 %v984, 0.0
      %v989 = vmax.f32 %v985, 0.0
      %v990 = vmax.f32 %v986, 0.0
      %v991 = vpack.c.bf16 %v988, %v987
      %v992 = vpack.c.bf16 %v990, %v989
      %v995 = vunpack.c.l.b16 %v991
      %v996 = vunpack.c.h.b16 %v991
      %v997 = vunpack.c.l.b16 %v992
      %v998 = vunpack.c.h.b16 %v992
      %v999 = vpack.c.b16 %v995, %v995
      %v1000 = vpack.c.b16 %v996, %v996
      %v1001 = vpack.c.b16 %v997, %v997
      %v1002 = vpack.c.b16 %v998, %v998
      %1007 = vst [vmem:[%s298] sm:$0xf] %v999
      %1008 = vst [vmem:[%s298 + $0x4] sm:$0xf] %v1000
      %1009 = vst [vmem:[%s298 + $0x8] sm:$0xf] %v1001
      %1010 = vst [vmem:[%s298 + $0xc] sm:$0xf] %v1002
      %v1011 = vlaneseq
      %v1012 = vshrl.u32 %v1011, 7
      %v1013 = vlaneseq
      %v1014 = vand.u32 %v1013, 127
      %s1015 = smul.u32 %s23, 32
      %v1016 = vstv %s1015
      %v1017 = vadd.s32 %v1014, %v1016
      %vm1018 = vcmp.lt.s32.totalorder %v1017, 28
      %vm1019 = vcmp.eq.s32.totalorder %v1012, 0
      %vm1020 = vmand %vm1018, %vm1019
      %v1021 = vsel %vm1020, 1.0, 0.0
      %vm1022 = vcmp.eq.s32.totalorder %v1012, 1
      %vm1023 = vmand %vm1018, %vm1022
      %v1024 = vsel %vm1023, 1.0, 0.0
      %v1025 = vmul.f32 %v987, %v987
      %v1026 = vmul.f32 %v988, %v988
      %v1027 = vmul.f32 %v989, %v989
      %v1028 = vmul.f32 %v990, %v990
      %vm1029 = vcmask 261120
      %v1031 = vsel %vm1029, %v1024, 0
      %1033 = vmatprep.subr.mxu0 0.0
      %1034 = vmatpush1.msra.mxu0 0.0
      %1035 = vmatprep.subr.mxu0 0.0
      %1036 = vmatpush1.msra.mxu0 0.0
      %1037 = vmatprep.subr.mxu0 0.0
      %1038 = vmatpush1.msra.mxu0 0.0
      %1039 = vmatprep.subr.mxu0 0.0
      %1040 = vmatpush1.msra.mxu0 0.0
      %1041 = vmatprep.subr.mxu0 0.0
      %1042 = vmatpush1.msra.mxu0 0.0
      %1043 = vmatprep.subr.mxu0 0.0
      %1044 = vmatpush1.msra.mxu0 0.0
      %1045 = vmatprep.subr.mxu0 0.0
      %1046 = vmatpush1.msra.mxu0 0.0
      %1047 = vmatprep.subr.mxu0 0.0
      %1048 = vmatpush1.msra.mxu0 0.0
      %1049 = vmatprep.subr.mxu0 0.0
      %1050 = vmatpush1.msra.mxu0 0.0
      %1051 = vmatprep.subr.mxu0 0.0
      %1052 = vmatpush1.msra.mxu0 0.0
      %1053 = vmatprep.subr.mxu0 0.0
      %1054 = vmatpush1.msra.mxu0 0.0
      %1055 = vmatprep.subr.mxu0 0.0
      %1056 = vmatpush1.msra.mxu0 0.0
      %1057 = vmatprep.subr.mxu0 0.0
      %1058 = vmatpush1.msra.mxu0 %v1028
      %1059 = vmatprep.subr.mxu0 0.0
      %1060 = vmatpush1.msra.mxu0 %v1027
      %1061 = vmatprep.subr.mxu0 0.0
      %1062 = vmatpush1.msra.mxu0 %v1026
      %1063 = vmatprep.subr.mxu0 0.0
      %1064 = vmatpush1.msra.mxu0 %v1025
      %1065 = vmatprep.subr.mxu0 0.0
      %1066 = vmatpush2.msra.mxu0 0.0
      %1067 = vmatprep.subr.mxu0 0.0
      %1068 = vmatpush2.msra.mxu0 0.0
      %1069 = vmatprep.subr.mxu0 0.0
      %1070 = vmatpush2.msra.mxu0 0.0
      %1071 = vmatprep.subr.mxu0 0.0
      %1072 = vmatpush2.msra.mxu0 0.0
      %1073 = vmatprep.subr.mxu0 0.0
      %1074 = vmatpush2.msra.mxu0 0.0
      %1075 = vmatprep.subr.mxu0 0.0
      %1076 = vmatpush2.msra.mxu0 0.0
      %1077 = vmatprep.subr.mxu0 0.0
      %1078 = vmatpush2.msra.mxu0 0.0
      %1079 = vmatprep.subr.mxu0 0.0
      %1080 = vmatpush2.msra.mxu0 0.0
      %1081 = vmatprep.subr.mxu0 0.0
      %1082 = vmatpush2.msra.mxu0 0.0
      %1083 = vmatprep.subr.mxu0 0.0
      %1084 = vmatpush2.msra.mxu0 0.0
      %1085 = vmatprep.subr.mxu0 0.0
      %1086 = vmatpush2.msra.mxu0 0.0
      %1087 = vmatprep.subr.mxu0 0.0
      %1088 = vmatpush2.msra.mxu0 0.0
      %1089 = vmatprep.subr.mxu0 0.0
      %1090 = vmatpush2.msra.mxu0 0.0
      %1091 = vmatprep.subr.mxu0 0.0
      %1092 = vmatpush2.msra.mxu0 0.0
      %1093 = vmatprep.subr.mxu0 0.0
      %1094 = vmatpush2.msra.mxu0 0.0
      %1095 = vmatprep.subr.mxu0 0.0
      %1096 = vmatpush2.msra.mxu0 0.0
      %1097 = vmatprep.mubr.f32.mxu0 0.0
      %1098 = vmatmul.mubr.f32.gmra.mxu0 %v1031
      %v1099 = vpop.f32.mrf.mxu0
      %v1100 = vadd.f32 0.0, %v1099
      %v1101 = vpop.f32.mrf.mxu0
      %1102 = vdwg.mxu0
      %v1104 = vsel %vm1029, %v1021, 0
      %1106 = vmatprep.subr.mxu0 0.0
      %1107 = vmatpush1.msra.mxu0 0.0
      %1108 = vmatprep.subr.mxu0 0.0
      %1109 = vmatpush1.msra.mxu0 0.0
      %1110 = vmatprep.subr.mxu0 0.0
      %1111 = vmatpush1.msra.mxu0 0.0
      %1112 = vmatprep.subr.mxu0 0.0
      %1113 = vmatpush1.msra.mxu0 0.0
      %1114 = vmatprep.subr.mxu0 0.0
      %1115 = vmatpush1.msra.mxu0 0.0
      %1116 = vmatprep.subr.mxu0 0.0
      %1117 = vmatpush1.msra.mxu0 0.0
      %1118 = vmatprep.subr.mxu0 0.0
      %1119 = vmatpush1.msra.mxu0 0.0
      %1120 = vmatprep.subr.mxu0 0.0
      %1121 = vmatpush1.msra.mxu0 0.0
      %1122 = vmatprep.subr.mxu0 0.0
      %1123 = vmatpush1.msra.mxu0 0.0
      %1124 = vmatprep.subr.mxu0 0.0
      %1125 = vmatpush1.msra.mxu0 0.0
      %1126 = vmatprep.subr.mxu0 0.0
      %1127 = vmatpush1.msra.mxu0 0.0
      %1128 = vmatprep.subr.mxu0 0.0
      %1129 = vmatpush1.msra.mxu0 0.0
      %1130 = vmatprep.subr.mxu0 0.0
      %1131 = vmatpush1.msra.mxu0 %v990
      %1132 = vmatprep.subr.mxu0 0.0
      %1133 = vmatpush1.msra.mxu0 %v989
      %1134 = vmatprep.subr.mxu0 0.0
      %1135 = vmatpush1.msra.mxu0 %v988
      %1136 = vmatprep.subr.mxu0 0.0
      %1137 = vmatpush1.msra.mxu0 %v987
      %1138 = vmatprep.subr.mxu0 0.0
      %1139 = vmatpush2.msra.mxu0 0.0
      %1140 = vmatprep.subr.mxu0 0.0
      %1141 = vmatpush2.msra.mxu0 0.0
      %1142 = vmatprep.subr.mxu0 0.0
      %1143 = vmatpush2.msra.mxu0 0.0
      %1144 = vmatprep.subr.mxu0 0.0
      %1145 = vmatpush2.msra.mxu0 0.0
      %1146 = vmatprep.subr.mxu0 0.0
      %1147 = vmatpush2.msra.mxu0 0.0
      %1148 = vmatprep.subr.mxu0 0.0
      %1149 = vmatpush2.msra.mxu0 0.0
      %1150 = vmatprep.subr.mxu0 0.0
      %1151 = vmatpush2.msra.mxu0 0.0
      %1152 = vmatprep.subr.mxu0 0.0
      %1153 = vmatpush2.msra.mxu0 0.0
      %1154 = vmatprep.subr.mxu0 0.0
      %1155 = vmatpush2.msra.mxu0 0.0
      %1156 = vmatprep.subr.mxu0 0.0
      %1157 = vmatpush2.msra.mxu0 0.0
      %1158 = vmatprep.subr.mxu0 0.0
      %1159 = vmatpush2.msra.mxu0 0.0
      %1160 = vmatprep.subr.mxu0 0.0
      %1161 = vmatpush2.msra.mxu0 0.0
      %1162 = vmatprep.subr.mxu0 0.0
      %1163 = vmatpush2.msra.mxu0 0.0
      %1164 = vmatprep.subr.mxu0 0.0
      %1165 = vmatpush2.msra.mxu0 0.0
      %1166 = vmatprep.subr.mxu0 0.0
      %1167 = vmatpush2.msra.mxu0 0.0
      %1168 = vmatprep.subr.mxu0 0.0
      %1169 = vmatpush2.msra.mxu0 0.0
      %1170 = vmatprep.mubr.f32.mxu0 0.0
      %1171 = vmatmul.mubr.f32.gmra.mxu0 %v1104
      %v1172 = vpop.f32.mrf.mxu0
      %v1173 = vadd.f32 %v1100, %v1172
      %v1174 = vpop.f32.mrf.mxu0
      %1175 = vdwg.mxu0
      %1176 = vst [vmem:[%s309] sm:$0xff] %v1173
      %s1177 = smul.u32 4, %s23
      %p1178 = scmp.lt.s32.totalorder %s21, 1
      %s1179 = scalar_select %p1178, %s21, 1
      %p1180 = scmp.lt.s32.totalorder %s1177, 3
      %s1181 = scalar_select %p1180, %s1177, 3
      %p1182 = scmp.lt.s32.totalorder %s22, 0
      %s1183 = scalar_select %p1182, %s22, 0
      %s1184 = sadd.s32 %s1183, %s1181
      %s1185 = smul.addr %s1179, 4
      %s1186 = sadd.s32 %s1184, %s1185
      %s1187 = smul.addr %s1186, 4
      %s1188 = scalar_lea.vmem %s3, %s1187
      %p1189 = scmp.lt.s32.totalorder %s21, 1
      %s1190 = scalar_select %p1189, %s21, 1
      %p1191 = scmp.lt.s32.totalorder %s23, 0
      %s1192 = scalar_select %p1191, %s23, 0
      %p1193 = scmp.lt.s32.totalorder %s22, 0
      %s1194 = scalar_select %p1193, %s22, 0
      %s1195 = sadd.s32 %s1194, %s1192
      %s1196 = sadd.s32 %s1195, %s1190
      %s1197 = smul.addr %s1196, 8
      %s1198 = scalar_lea.vmem %s4, %s1197
      // Predicated region
      $region33: #{slimmable_tdnn_forward.6} parent=31 // pred_check
        %p1199 = pneg %p137
      $region34: #{slimmable_tdnn_forward.6} parent=31 // pred_check_branch
        %1201 = sbr.rel (%p1199) target = $region36
      $region35: #{slimmable_tdnn_forward.6} parent=31 // pred_region
        %s1202 = smul.u32 4, %s23
      $region36: #{slimmable_tdnn_forward.6} parent=31 // pred_fallthru
        _
      // Predicated region
      $region37: #{slimmable_tdnn_forward.6} parent=31 // pred_check
        %p1203 = pneg %p167
      $region38: #{slimmable_tdnn_forward.6} parent=31 // pred_check_branch
        %1205 = sbr.rel (%p1203) target = $region40
      $region39: #{slimmable_tdnn_forward.6} parent=31 // pred_region
        _
      $region40: #{slimmable_tdnn_forward.6} parent=31 // pred_fallthru
        _
    $region32: #{slimmable_tdnn_forward.6} parent=5 // pred_fallthru
      _
    %p1206 = scmp.le.s32.totalorder 2, %s11
    // Predicated region
    $region41: #{slimmable_tdnn_forward.6} parent=5 // pred_check
      %p1207 = pneg %p1206
    $region42: #{slimmable_tdnn_forward.6} parent=5 // pred_check_branch
      %1209 = sbr.rel (%p1207) target = $region44
    $region43: #{slimmable_tdnn_forward.6} parent=5 // pred_region
      %s1210 = ssub.s32 %s11, 2
      // Predicated region
      $region45: #{slimmable_tdnn_forward.6} parent=43 // pred_check
        %p1211 = pneg %p143
      $region46: #{slimmable_tdnn_forward.6} parent=43 // pred_check_branch
        %1213 = sbr.rel (%p1211) target = $region48
      $region47: #{slimmable_tdnn_forward.6} parent=43 // pred_region
        %s1214 = smul.u32 4, %s26
        %p1215 = scmp.lt.s32.totalorder %s24, 1
        %s1216 = scalar_select %p1215, %s24, 1
        %p1217 = scmp.lt.s32.totalorder %s1214, 3
        %s1218 = scalar_select %p1217, %s1214, 3
        %p1219 = scmp.lt.s32.totalorder %s25, 0
        %s1220 = scalar_select %p1219, %s25, 0
        %s1221 = sadd.s32 %s1220, %s1218
        %s1222 = smul.addr %s1216, 4
        %s1223 = sadd.s32 %s1221, %s1222
        %s1224 = smul.addr %s1223, 4
        %s1225 = scalar_lea.vmem %s3, %s1224
      $region48: #{slimmable_tdnn_forward.6} parent=43 // pred_fallthru
        _
      // Predicated region
      $region49: #{slimmable_tdnn_forward.6} parent=43 // pred_check
        %p1226 = pneg %p173
      $region50: #{slimmable_tdnn_forward.6} parent=43 // pred_check_branch
        %1228 = sbr.rel (%p1226) target = $region52
      $region51: #{slimmable_tdnn_forward.6} parent=43 // pred_region
        %p1229 = scmp.lt.s32.totalorder %s24, 1
        %s1230 = scalar_select %p1229, %s24, 1
        %p1231 = scmp.lt.s32.totalorder %s26, 0
        %s1232 = scalar_select %p1231, %s26, 0
        %p1233 = scmp.lt.s32.totalorder %s25, 0
        %s1234 = scalar_select %p1233, %s25, 0
        %s1235 = sadd.s32 %s1234, %s1232
        %s1236 = sadd.s32 %s1235, %s1230
        %s1237 = smul.addr %s1236, 8
        %s1238 = scalar_lea.vmem %s4, %s1237
      $region52: #{slimmable_tdnn_forward.6} parent=43 // pred_fallthru
        _
    $region44: #{slimmable_tdnn_forward.6} parent=5 // pred_fallthru
      _
  $region6: #{slimmable_tdnn_forward.6} parent=0 // loop_footer
    %s15 = sadd.s32 1, %s11
  $region7: #{slimmable_tdnn_forward.6} parent=0 // loop_footer_branch
    %10 = sbr.rel target = $region3
  $region8: #{slimmable_tdnn_forward.6} parent=0 // loop_exit
    _

// kernel: slimmable_tdnn_forward.9
$region0: #{slimmable_tdnn_forward.9}
  #allocation0 [shape = 'u32[]', space=smem, size = 0x4, offset = 0x4, fixed_abs, tag = 'smem constant byte address 0x4 - core index']
  #allocation1 [shape = 'u32[144,128]{1,0:T(1,128)}', space=vmem, size = 0x12000, scoped, tag = 'internal scratch']
  %s0 = inlined_call_operand.vmem [shape: bf16[2,1,32,128], index: 0, kind: input, shape index: {}]
  %s1 = inlined_call_operand.vmem [shape: bf16[1,128,128], index: 1, kind: input, shape index: {}]
  %s2 = inlined_call_operand.vmem [shape: f32[1,128], index: 2, kind: input, shape index: {}]
  %s3 = inlined_call_operand.vmem [shape: bf16[2,32,128], index: 3, kind: output, shape index: {0}]
  %s4 = inlined_call_operand.vmem [shape: f32[2,1,8,128], index: 4, kind: output, shape index: {1}]
  %5 = xla_tuple %s3, %s4
  %s6 = sld [smem:[#allocation0]]
  $region53: #{slimmable_tdnn_forward.9} parent=0
    _
  %s8 = ssub.s32 1, %s6
  %s9 = scalar_select 0, %s8, %s6
  loop: start=0, step=1, limit=4
  $region2: #{slimmable_tdnn_forward.9} parent=0 // loop_pre_header
    _
  $region3: #{slimmable_tdnn_forward.9} parent=0 // loop_header
    %s11 = sphi 0, %s15
    %p12 = scmp.ge.s32.totalorder %s11, 4
    %s18 = sphi 0, %s37
    %s19 = sphi 0, %s33
    %s20 = sphi 0, %s29
    %s21 = sphi 0, %s18
    %s22 = sphi 0, %s19
    %s23 = sphi 0, %s20
    %s24 = sphi 0, %s21
    %s25 = sphi 0, %s22
    %s26 = sphi 0, %s23
    %s42 = sphi 0, %s44
    %s45 = sphi 0, %s42
    %s46 = sphi 0, %s45
    %s62 = sphi 0, %s46
    %s68 = sphi 0, %s70
    %s71 = sphi 0, %s68
    %s72 = sphi 0, %s71
    %s88 = sphi 0, %s72
    %s94 = sphi 0, %s96
    %s97 = sphi 0, %s94
    %s98 = sphi 0, %s97
    %s114 = sphi 0, %s98
    %s124 = sphi 0, %s126
    %s127 = sphi 0, %s124
    %s128 = sphi 0, %s127
    %s144 = sphi 0, %s128
    %s154 = sphi 0, %s156
    %s157 = sphi 0, %s154
    %s158 = sphi 0, %s157
    %s174 = sphi 0, %s158
  $region4: #{slimmable_tdnn_forward.9} parent=0 // loop_header_branch
    %14 = sbr.rel (%p12) target = $region8
  $region5: #{slimmable_tdnn_forward.9} parent=0 // loop_body
    %s16 = ssub.s32 %s11, 1
    %s17 = ssub.s32 %s11, 2
    %s27 = sadd.s32 1, %s20
    %p28 = scmp.ge.s32.totalorder %s27, 1
    %s29 = scalar_select %p28, 0, %s27
    %s30 = sadd.s32 1, %s19
    %s31 = scalar_select %p28, %s30, %s19
    %p32 = scmp.ge.s32.totalorder %s31, 1
    %s33 = scalar_select %p32, 0, %s31
    %s34 = sadd.s32 1, %s18
    %s35 = scalar_select %p32, %s34, %s18
    %p36 = scmp.ge.s32.totalorder %s35, 2
    %s37 = scalar_select %p36, 0, %s35
    %s38 = ssub.s32 %s18, %s37
    %s39 = ssub.s32 %s20, %s29
    %s40 = sor.u32 %s38, %s39
    %p41 = scmp.eq.s32.totalorder %s40, 0
    %s43 = sadd.s32 %s42, 1
    %s44 = scalar_select %p41, %s42, %s43
    %p47 = pneg %p41
    %p48 = scmp.eq.s32.totalorder %s11, 1
    %p49 = por %p47, %p48
    %p50 = scmp.ne.s32.totalorder %s42, %s45
    %p51 = scmp.eq.s32.totalorder %s11, 0
    %p52 = por %p50, %p51
    %p53 = scmp.ne.s32.totalorder %s42, %s45
    %p54 = scmp.eq.s32.totalorder %s16, 1
    %p55 = por %p53, %p54
    %p56 = scmp.ne.s32.totalorder %s45, %s46
    %p57 = scmp.eq.s32.totalorder %s16, 0
    %p58 = por %p56, %p57
    %p59 = scmp.ne.s32.totalorder %s45, %s46
    %p60 = scmp.eq.s32.totalorder %s17, 1
    %p61 = por %p59, %p60
    %p63 = scmp.ne.s32.totalorder %s46, %s62
    %p64 = scmp.eq.s32.totalorder %s17, 0
    %p65 = por %p63, %p64
    %s66 = ssub.s32 %s19, %s33
    %p67 = scmp.eq.s32.totalorder %s66, 0
    %s69 = sadd.s32 %s68, 1
    %s70 = scalar_select %p67, %s68, %s69
    %p73 = pneg %p67
    %p74 = scmp.eq.s32.totalorder %s11, 1
    %p75 = por %p73, %p74
    %p76 = scmp.ne.s32.totalorder %s68, %s71
    %p77 = scmp.eq.s32.totalorder %s11, 0
    %p78 = por %p76, %p77
    %p79 = scmp.ne.s32.totalorder %s68, %s71
    %p80 = scmp.eq.s32.totalorder %s16, 1
    %p81 = por %p79, %p80
    %p82 = scmp.ne.s32.totalorder %s71, %s72
    %p83 = scmp.eq.s32.totalorder %s16, 0
    %p84 = por %p82, %p83
    %p85 = scmp.ne.s32.totalorder %s71, %s72
    %p86 = scmp.eq.s32.totalorder %s17, 1
    %p87 = por %p85, %p86
    %p89 = scmp.ne.s32.totalorder %s72, %s88
    %p90 = scmp.eq.s32.totalorder %s17, 0
    %p91 = por %p89, %p90
    %s92 = ssub.s32 %s19, %s33
    %p93 = scmp.eq.s32.totalorder %s92, 0
    %s95 = sadd.s32 %s94, 1
    %s96 = scalar_select %p93, %s94, %s95
    %p99 = pneg %p93
    %p100 = scmp.eq.s32.totalorder %s11, 1
    %p101 = por %p99, %p100
    %p102 = scmp.ne.s32.totalorder %s94, %s97
    %p103 = scmp.eq.s32.totalorder %s11, 0
    %p104 = por %p102, %p103
    %p105 = scmp.ne.s32.totalorder %s94, %s97
    %p106 = scmp.eq.s32.totalorder %s16, 1
    %p107 = por %p105, %p106
    %p108 = scmp.ne.s32.totalorder %s97, %s98
    %p109 = scmp.eq.s32.totalorder %s16, 0
    %p110 = por %p108, %p109
    %p111 = scmp.ne.s32.totalorder %s97, %s98
    %p112 = scmp.eq.s32.totalorder %s17, 1
    %p113 = por %p111, %p112
    %p115 = scmp.ne.s32.totalorder %s98, %s114
    %p116 = scmp.eq.s32.totalorder %s17, 0
    %p117 = por %p115, %p116
    %s118 = ssub.s32 %s18, %s37
    %s119 = ssub.s32 %s20, %s29
    %s120 = sor.u32 %s118, %s119
    %s121 = ssub.s32 %s19, %s33
    %s122 = sor.u32 %s120, %s121
    %p123 = scmp.eq.s32.totalorder %s122, 0
    %s125 = sadd.s32 %s124, 1
    %s126 = scalar_select %p123, %s124, %s125
    %p129 = pneg %p123
    %p130 = scmp.eq.s32.totalorder %s11, 1
    %p131 = por %p129, %p130
    %p132 = scmp.ne.s32.totalorder %s124, %s127
    %p133 = scmp.eq.s32.totalorder %s11, 0
    %p134 = por %p132, %p133
    %p135 = scmp.ne.s32.totalorder %s124, %s127
    %p136 = scmp.eq.s32.totalorder %s16, 1
    %p137 = por %p135, %p136
    %p138 = scmp.ne.s32.totalorder %s127, %s128
    %p139 = scmp.eq.s32.totalorder %s16, 0
    %p140 = por %p138, %p139
    %p141 = scmp.ne.s32.totalorder %s127, %s128
    %p142 = scmp.eq.s32.totalorder %s17, 1
    %p143 = por %p141, %p142
    %p145 = scmp.ne.s32.totalorder %s128, %s144
    %p146 = scmp.eq.s32.totalorder %s17, 0
    %p147 = por %p145, %p146
    %s148 = ssub.s32 %s18, %s37
    %s149 = ssub.s32 %s20, %s29
    %s150 = sor.u32 %s148, %s149
    %s151 = ssub.s32 %s19, %s33
    %s152 = sor.u32 %s150, %s151
    %p153 = scmp.eq.s32.totalorder %s152, 0
    %s155 = sadd.s32 %s154, 1
    %s156 = scalar_select %p153, %s154, %s155
    %p159 = pneg %p153
    %p160 = scmp.eq.s32.totalorder %s11, 1
    %p161 = por %p159, %p160
    %p162 = scmp.ne.s32.totalorder %s154, %s157
    %p163 = scmp.eq.s32.totalorder %s11, 0
    %p164 = por %p162, %p163
    %p165 = scmp.ne.s32.totalorder %s154, %s157
    %p166 = scmp.eq.s32.totalorder %s16, 1
    %p167 = por %p165, %p166
    %p168 = scmp.ne.s32.totalorder %s157, %s158
    %p169 = scmp.eq.s32.totalorder %s16, 0
    %p170 = por %p168, %p169
    %p171 = scmp.ne.s32.totalorder %s157, %s158
    %p172 = scmp.eq.s32.totalorder %s17, 1
    %p173 = por %p171, %p172
    %p175 = scmp.ne.s32.totalorder %s158, %s174
    %p176 = scmp.eq.s32.totalorder %s17, 0
    %p177 = por %p175, %p176
    %p178 = scmp.le.s32.totalorder 1, %s11
    %p179 = scmp.lt.s32.totalorder %s11, 3
    %p180 = pnand %p178, %p179
    %p181 = pneg %p180
    // Predicated region
    $region9: #{slimmable_tdnn_forward.9} parent=5 // pred_check
      _
    $region10: #{slimmable_tdnn_forward.9} parent=5 // pred_check_branch
      %183 = sbr.rel (%p180) target = $region12
    $region11: #{slimmable_tdnn_forward.9} parent=5 // pred_region
      %s184 = ssub.s32 %s11, 1
      // Predicated region
      $region13: #{slimmable_tdnn_forward.9} parent=11 // pred_check
        %p185 = pneg %p84
      $region14: #{slimmable_tdnn_forward.9} parent=11 // pred_check_branch
        %187 = sbr.rel (%p185) target = $region16
      $region15: #{slimmable_tdnn_forward.9} parent=11 // pred_region
        %p188 = scmp.lt.s32.totalorder %s22, 0
        %s189 = scalar_select %p188, %s22, 0
        %s190 = smul.addr %s189, 4
        %s191 = scalar_lea.vmem %s1, %s190
      $region16: #{slimmable_tdnn_forward.9} parent=11 // pred_fallthru
        _
      // Predicated region
      $region17: #{slimmable_tdnn_forward.9} parent=11 // pred_check
        %p192 = pneg %p110
      $region18: #{slimmable_tdnn_forward.9} parent=11 // pred_check_branch
        %194 = sbr.rel (%p192) target = $region20
      $region19: #{slimmable_tdnn_forward.9} parent=11 // pred_region
        %p195 = scmp.lt.s32.totalorder %s22, 0
        %s196 = scalar_select %p195, %s22, 0
        %s197 = scalar_lea.vmem %s2, %s196
      $region20: #{slimmable_tdnn_forward.9} parent=11 // pred_fallthru
        _
    $region12: #{slimmable_tdnn_forward.9} parent=5 // pred_fallthru
      _
    %p198 = scmp.lt.s32.totalorder %s11, 2
    // Predicated region
    $region21: #{slimmable_tdnn_forward.9} parent=5 // pred_check
      %p199 = pneg %p198
    $region22: #{slimmable_tdnn_forward.9} parent=5 // pred_check_branch
      %201 = sbr.rel (%p199) target = $region24
    $region23: #{slimmable_tdnn_forward.9} parent=5 // pred_region
      // Predicated region
      $region25: #{slimmable_tdnn_forward.9} parent=23 // pred_check
        %p202 = pneg %p52
      $region26: #{slimmable_tdnn_forward.9} parent=23 // pred_check_branch
        %204 = sbr.rel (%p202) target = $region28
      $region27: #{slimmable_tdnn_forward.9} parent=23 // pred_region
        %s205 = smul.u32 4, %s20
        %p206 = scmp.lt.s32.totalorder %s18, 1
        %s207 = scalar_select %p206, %s18, 1
        %p208 = scmp.lt.s32.totalorder %s205, 3
        %s209 = scalar_select %p208, %s205, 3
        %s210 = smul.addr %s207, 4
        %s211 = sadd.s32 %s209, %s210
        %s212 = smul.addr %s211, 4
        %s213 = scalar_lea.vmem %s0, %s212
        %s214 = smul.u32 4, %s20
      $region28: #{slimmable_tdnn_forward.9} parent=23 // pred_fallthru
        _
    $region24: #{slimmable_tdnn_forward.9} parent=5 // pred_fallthru
      _
    %p215 = scmp.le.s32.totalorder 1, %s11
    %p216 = scmp.lt.s32.totalorder %s11, 3
    %p217 = pnand %p215, %p216
    %p218 = pneg %p217
    // Predicated region
    $region29: #{slimmable_tdnn_forward.9} parent=5 // pred_check
      _
    $region30: #{slimmable_tdnn_forward.9} parent=5 // pred_check_branch
      %220 = sbr.rel (%p217) target = $region32
    $region31: #{slimmable_tdnn_forward.9} parent=5 // pred_region
      %s221 = ssub.s32 %s11, 1
      %s222 = smul.u32 4, %s23
      %p223 = scmp.lt.s32.totalorder %s21, 1
      %s224 = scalar_select %p223, %s21, 1
      %p225 = scmp.lt.s32.totalorder %s222, 3
      %s226 = scalar_select %p225, %s222, 3
      %s227 = smul.addr %s224, 4
      %s228 = sadd.s32 %s226, %s227
      %s229 = smul.addr %s228, 4
      %s230 = scalar_lea.vmem %s0, %s229
      %p231 = pneg %p58
      %p232 = pneg %p55
      %p233 = scmp.lt.s32.totalorder %s22, 0
      %s234 = scalar_select %p233, %s22, 0
      %s235 = smul.addr %s234, 4
      %s236 = scalar_lea.vmem %s1, %s235
      %p237 = pneg %p84
      %p238 = pneg %p81
      %p239 = scmp.lt.s32.totalorder %s22, 0
      %s240 = scalar_select %p239, %s22, 0
      %s241 = scalar_lea.vmem %s2, %s240
      %p242 = pneg %p110
      %p243 = pneg %p107
      %p244 = pneg %p140
      %p245 = pneg %p137
      %s246 = smul.u32 4, %s23
      %p247 = scmp.lt.s32.totalorder %s21, 1
      %s248 = scalar_select %p247, %s21, 1
      %p249 = scmp.lt.s32.totalorder %s246, 3
      %s250 = scalar_select %p249, %s246, 3
      %p251 = scmp.lt.s32.totalorder %s22, 0
      %s252 = scalar_select %p251, %s22, 0
      %s253 = sadd.s32 %s252, %s250
      %s254 = smul.addr %s248, 4
      %s255 = sadd.s32 %s253, %s254
      %s256 = smul.addr %s255, 4
      %s257 = scalar_lea.vmem %s3, %s256
      %p258 = pneg %p170
      %p259 = pneg %p167
      %p260 = scmp.lt.s32.totalorder %s21, 1
      %s261 = scalar_select %p260, %s21, 1
      %p262 = scmp.lt.s32.totalorder %s23, 0
      %s263 = scalar_select %p262, %s23, 0
      %p264 = scmp.lt.s32.totalorder %s22, 0
      %s265 = scalar_select %p264, %s22, 0
      %s266 = sadd.s32 %s265, %s263
      %s267 = sadd.s32 %s266, %s261
      %s268 = smul.addr %s267, 8
      %s269 = scalar_lea.vmem %s4, %s268
      %s270 = smul.u32 4, %s23
      %p271 = scmp.lt.s32.totalorder %s21, 1
      %s272 = scalar_select %p271, %s21, 1
      %p273 = scmp.lt.s32.totalorder %s270, 3
      %s274 = scalar_select %p273, %s270, 3
      %s275 = smul.addr %s272, 4
      %s276 = sadd.s32 %s274, %s275
      %s277 = smul.addr %s276, 4
      %s278 = scalar_lea.vmem %s0, %s277
      %s279 = smul.u32 4, %s23
      %p280 = scmp.lt.s32.totalorder %s22, 0
      %s281 = scalar_select %p280, %s22, 0
      %s282 = smul.addr %s281, 4
      %s283 = scalar_lea.vmem %s1, %s282
      %p284 = scmp.lt.s32.totalorder %s22, 0
      %s285 = scalar_select %p284, %s22, 0
      %s286 = scalar_lea.vmem %s2, %s285
      %s287 = smul.u32 4, %s23
      %p288 = scmp.lt.s32.totalorder %s21, 1
      %s289 = scalar_select %p288, %s21, 1
      %p290 = scmp.lt.s32.totalorder %s287, 3
      %s291 = scalar_select %p290, %s287, 3
      %p292 = scmp.lt.s32.totalorder %s22, 0
      %s293 = scalar_select %p292, %s22, 0
      %s294 = sadd.s32 %s293, %s291
      %s295 = smul.addr %s289, 4
      %s296 = sadd.s32 %s294, %s295
      %s297 = smul.addr %s296, 4
      %s298 = scalar_lea.vmem %s3, %s297
      %s299 = smul.u32 4, %s23
      %p300 = scmp.lt.s32.totalorder %s21, 1
      %s301 = scalar_select %p300, %s21, 1
      %p302 = scmp.lt.s32.totalorder %s23, 0
      %s303 = scalar_select %p302, %s23, 0
      %p304 = scmp.lt.s32.totalorder %s22, 0
      %s305 = scalar_select %p304, %s22, 0
      %s306 = sadd.s32 %s305, %s303
      %s307 = sadd.s32 %s306, %s301
      %s308 = smul.addr %s307, 8
      %s309 = scalar_lea.vmem %s4, %s308
      %v311 = vld [vmem:[%s278] sm:$0xf]
      %v312 = vld [vmem:[%s278 + $0x4] sm:$0xf]
      %v313 = vld [vmem:[%s278 + $0x8] sm:$0xf]
      %v314 = vld [vmem:[%s278 + $0xc] sm:$0xf]
      %v315 = vld [vmem:[%s283] sm:$0xf]
      %v316 = vld [vmem:[%s283 + $0x4] sm:$0xf]
      %v317 = vld [vmem:[%s283 + $0x8] sm:$0xf]
      %v318 = vld [vmem:[%s283 + $0xc] sm:$0xf]
      %v319 = vld [vmem:[%s283 + $0x10] sm:$0xf]
      %v320 = vld [vmem:[%s283 + $0x14] sm:$0xf]
      %v321 = vld [vmem:[%s283 + $0x18] sm:$0xf]
      %v322 = vld [vmem:[%s283 + $0x1c] sm:$0xf]
      %v323 = vld [vmem:[%s283 + $0x20] sm:$0xf]
      %v324 = vld [vmem:[%s283 + $0x24] sm:$0xf]
      %v325 = vld [vmem:[%s283 + $0x28] sm:$0xf]
      %v326 = vld [vmem:[%s283 + $0x2c] sm:$0xf]
      %v327 = vld [vmem:[%s283 + $0x30] sm:$0xf]
      %v328 = vld [vmem:[%s283 + $0x34] sm:$0xf]
      %v329 = vld [vmem:[%s283 + $0x38] sm:$0xf]
      %v330 = vld [vmem:[%s283 + $0x3c] sm:$0xf]
      %v331 = vld [vmem:[%s286] sm:$0x1]
      %v333 = vlaneseq
      %v334 = vshrl.u32 %v333, 7
      %v335 = vsub.s32 0, %v334
      %v336 = vrot.slane %v331, %v335
      %v342 = vunpack.c.l.b16 %v311
      %v343 = vunpack.c.l.b16 %v312
      %v344 = vunpack.c.l.b16 %v313
      %v345 = vunpack.c.l.b16 %v314
      %v346 = vpack.c.b16 %v343, %v342
      %v347 = vpack.c.b16 %v345, %v344
      %v366 = vunpack.c.l.b16 %v315
      %v367 = vunpack.c.l.b16 %v316
      %v368 = vunpack.c.l.b16 %v317
      %v369 = vunpack.c.l.b16 %v318
      %v370 = vunpack.c.l.b16 %v319
      %v371 = vunpack.c.l.b16 %v320
      %v372 = vunpack.c.l.b16 %v321
      %v373 = vunpack.c.l.b16 %v322
      %v374 = vunpack.c.l.b16 %v323
      %v375 = vunpack.c.l.b16 %v324
      %v376 = vunpack.c.l.b16 %v325
      %v377 = vunpack.c.l.b16 %v326
      %v378 = vunpack.c.l.b16 %v327
      %v379 = vunpack.c.l.b16 %v328
      %v380 = vunpack.c.l.b16 %v329
      %v381 = vunpack.c.l.b16 %v330
      %v382 = vpack.c.b16 %v367, %v366
      %v383 = vpack.c.b16 %v369, %v368
      %v384 = vpack.c.b16 %v371, %v370
      %v385 = vpack.c.b16 %v373, %v372
      %v386 = vpack.c.b16 %v375, %v374
      %v387 = vpack.c.b16 %v377, %v376
      %v388 = vpack.c.b16 %v379, %v378
      %v389 = vpack.c.b16 %v381, %v380
      %398 = vmatprep.subr.bf16.mxu0 0
      %399 = vmatpush1.bf16.msra.mxu0 %v389
      %400 = vmatprep.subr.bf16.mxu0 0
      %401 = vmatpush1.bf16.msra.mxu0 %v388
      %402 = vmatprep.subr.bf16.mxu0 0
      %403 = vmatpush1.bf16.msra.mxu0 %v387
      %404 = vmatprep.subr.bf16.mxu0 0
      %405 = vmatpush1.bf16.msra.mxu0 %v386
      %406 = vmatprep.subr.bf16.mxu0 0
      %407 = vmatpush1.bf16.msra.mxu0 %v385
      %408 = vmatprep.subr.bf16.mxu0 0
      %409 = vmatpush1.bf16.msra.mxu0 %v384
      %410 = vmatprep.subr.bf16.mxu0 0
      %411 = vmatpush1.bf16.msra.mxu0 %v383
      %412 = vmatprep.subr.bf16.mxu0 0
      %413 = vmatpush1.bf16.msra.mxu0 %v382
      %414 = vmatprep.subr.bf16.mxu0 0
      %415 = vmatpush2.bf16.msra.mxu0 0
      %416 = vmatprep.subr.bf16.mxu0 0
      %417 = vmatpush2.bf16.msra.mxu0 0
      %418 = vmatprep.subr.bf16.mxu0 0
      %419 = vmatpush2.bf16.msra.mxu0 0
      %420 = vmatprep.subr.bf16.mxu0 0
      %421 = vmatpush2.bf16.msra.mxu0 0
      %422 = vmatprep.subr.bf16.mxu0 0
      %423 = vmatpush2.bf16.msra.mxu0 0
      %424 = vmatprep.subr.bf16.mxu0 0
      %425 = vmatpush2.bf16.msra.mxu0 0
      %426 = vmatprep.subr.bf16.mxu0 0
      %427 = vmatpush2.bf16.msra.mxu0 0
      %428 = vmatprep.subr.bf16.mxu0 0
      %429 = vmatpush2.bf16.msra.mxu0 0
      %430 = vmatprep.mubr.bf16.mxu0 0
      %431 = vmatmul.mubr.bf16.gmra.mxu0 %v346
      %v432 = vpop.f32.mrf.mxu0
      %v433 = vadd.f32 %v336, %v432
      %v434 = vpop.f32.mrf.mxu0
      %v435 = vpop.f32.mrf.mxu0
      %v436 = vadd.f32 %v336, %v435
      %v437 = vpop.f32.mrf.mxu0
      %438 = vmatprep.mubr.bf16.mxu0 0
      %439 = vmatmul.mubr.bf16.gmra.mxu0 %v347
      %v440 = vpop.f32.mrf.mxu0
      %v441 = vadd.f32 %v336, %v440
      %v442 = vpop.f32.mrf.mxu0
      %v443 = vpop.f32.mrf.mxu0
      %v444 = vadd.f32 %v336, %v443
      %v445 = vpop.f32.mrf.mxu0
      %446 = vdwg.mxu0
      %v447 = vmax.f32 %v433, 0.0
      %v448 = vmax.f32 %v436, 0.0
      %v449 = vmax.f32 %v441, 0.0
      %v450 = vmax.f32 %v444, 0.0
      %v451 = vpack.c.bf16 %v448, %v447
      %v452 = vpack.c.bf16 %v450, %v449
      %v455 = vunpack.c.l.b16 %v451
      %v456 = vunpack.c.h.b16 %v451
      %v457 = vunpack.c.l.b16 %v452
      %v458 = vunpack.c.h.b16 %v452
      %v459 = vpack.c.b16 %v455, %v455
      %v460 = vpack.c.b16 %v456, %v456
      %v461 = vpack.c.b16 %v457, %v457
      %v462 = vpack.c.b16 %v458, %v458
      %467 = vst [vmem:[%s298] sm:$0xf] %v459
      %468 = vst [vmem:[%s298 + $0x4] sm:$0xf] %v460
      %469 = vst [vmem:[%s298 + $0x8] sm:$0xf] %v461
      %470 = vst [vmem:[%s298 + $0xc] sm:$0xf] %v462
      %v471 = vlaneseq
      %v472 = vshrl.u32 %v471, 7
      %v473 = vlaneseq
      %v474 = vand.u32 %v473, 127
      %s475 = smul.u32 %s23, 32
      %v476 = vstv %s475
      %v477 = vadd.s32 %v474, %v476
      %vm478 = vcmp.lt.s32.totalorder %v477, 18
      %vm479 = vcmp.eq.s32.totalorder %v472, 0
      %vm480 = vmand %vm478, %vm479
      %v481 = vsel %vm480, 1.0, 0.0
      %vm482 = vcmp.eq.s32.totalorder %v472, 1
      %vm483 = vmand %vm478, %vm482
      %v484 = vsel %vm483, 1.0, 0.0
      %v485 = vmul.f32 %v447, %v447
      %v486 = vmul.f32 %v448, %v448
      %v487 = vmul.f32 %v449, %v449
      %v488 = vmul.f32 %v450, %v450
      %vm489 = vcmask 261120
      %v491 = vsel %vm489, %v484, 0
      %493 = vmatprep.subr.mxu0 0.0
      %494 = vmatpush1.msra.mxu0 0.0
      %495 = vmatprep.subr.mxu0 0.0
      %496 = vmatpush1.msra.mxu0 0.0
      %497 = vmatprep.subr.mxu0 0.0
      %498 = vmatpush1.msra.mxu0 0.0
      %499 = vmatprep.subr.mxu0 0.0
      %500 = vmatpush1.msra.mxu0 0.0
      %501 = vmatprep.subr.mxu0 0.0
      %502 = vmatpush1.msra.mxu0 0.0
      %503 = vmatprep.subr.mxu0 0.0
      %504 = vmatpush1.msra.mxu0 0.0
      %505 = vmatprep.subr.mxu0 0.0
      %506 = vmatpush1.msra.mxu0 0.0
      %507 = vmatprep.subr.mxu0 0.0
      %508 = vmatpush1.msra.mxu0 0.0
      %509 = vmatprep.subr.mxu0 0.0
      %510 = vmatpush1.msra.mxu0 0.0
      %511 = vmatprep.subr.mxu0 0.0
      %512 = vmatpush1.msra.mxu0 0.0
      %513 = vmatprep.subr.mxu0 0.0
      %514 = vmatpush1.msra.mxu0 0.0
      %515 = vmatprep.subr.mxu0 0.0
      %516 = vmatpush1.msra.mxu0 0.0
      %517 = vmatprep.subr.mxu0 0.0
      %518 = vmatpush1.msra.mxu0 %v488
      %519 = vmatprep.subr.mxu0 0.0
      %520 = vmatpush1.msra.mxu0 %v487
      %521 = vmatprep.subr.mxu0 0.0
      %522 = vmatpush1.msra.mxu0 %v486
      %523 = vmatprep.subr.mxu0 0.0
      %524 = vmatpush1.msra.mxu0 %v485
      %525 = vmatprep.subr.mxu0 0.0
      %526 = vmatpush2.msra.mxu0 0.0
      %527 = vmatprep.subr.mxu0 0.0
      %528 = vmatpush2.msra.mxu0 0.0
      %529 = vmatprep.subr.mxu0 0.0
      %530 = vmatpush2.msra.mxu0 0.0
      %531 = vmatprep.subr.mxu0 0.0
      %532 = vmatpush2.msra.mxu0 0.0
      %533 = vmatprep.subr.mxu0 0.0
      %534 = vmatpush2.msra.mxu0 0.0
      %535 = vmatprep.subr.mxu0 0.0
      %536 = vmatpush2.msra.mxu0 0.0
      %537 = vmatprep.subr.mxu0 0.0
      %538 = vmatpush2.msra.mxu0 0.0
      %539 = vmatprep.subr.mxu0 0.0
      %540 = vmatpush2.msra.mxu0 0.0
      %541 = vmatprep.subr.mxu0 0.0
      %542 = vmatpush2.msra.mxu0 0.0
      %543 = vmatprep.subr.mxu0 0.0
      %544 = vmatpush2.msra.mxu0 0.0
      %545 = vmatprep.subr.mxu0 0.0
      %546 = vmatpush2.msra.mxu0 0.0
      %547 = vmatprep.subr.mxu0 0.0
      %548 = vmatpush2.msra.mxu0 0.0
      %549 = vmatprep.subr.mxu0 0.0
      %550 = vmatpush2.msra.mxu0 0.0
      %551 = vmatprep.subr.mxu0 0.0
      %552 = vmatpush2.msra.mxu0 0.0
      %553 = vmatprep.subr.mxu0 0.0
      %554 = vmatpush2.msra.mxu0 0.0
      %555 = vmatprep.subr.mxu0 0.0
      %556 = vmatpush2.msra.mxu0 0.0
      %557 = vmatprep.mubr.f32.mxu0 0.0
      %558 = vmatmul.mubr.f32.gmra.mxu0 %v491
      %v559 = vpop.f32.mrf.mxu0
      %v560 = vadd.f32 0.0, %v559
      %v561 = vpop.f32.mrf.mxu0
      %562 = vdwg.mxu0
      %v564 = vsel %vm489, %v481, 0
      %566 = vmatprep.subr.mxu0 0.0
      %567 = vmatpush1.msra.mxu0 0.0
      %568 = vmatprep.subr.mxu0 0.0
      %569 = vmatpush1.msra.mxu0 0.0
      %570 = vmatprep.subr.mxu0 0.0
      %571 = vmatpush1.msra.mxu0 0.0
      %572 = vmatprep.subr.mxu0 0.0
      %573 = vmatpush1.msra.mxu0 0.0
      %574 = vmatprep.subr.mxu0 0.0
      %575 = vmatpush1.msra.mxu0 0.0
      %576 = vmatprep.subr.mxu0 0.0
      %577 = vmatpush1.msra.mxu0 0.0
      %578 = vmatprep.subr.mxu0 0.0
      %579 = vmatpush1.msra.mxu0 0.0
      %580 = vmatprep.subr.mxu0 0.0
      %581 = vmatpush1.msra.mxu0 0.0
      %582 = vmatprep.subr.mxu0 0.0
      %583 = vmatpush1.msra.mxu0 0.0
      %584 = vmatprep.subr.mxu0 0.0
      %585 = vmatpush1.msra.mxu0 0.0
      %586 = vmatprep.subr.mxu0 0.0
      %587 = vmatpush1.msra.mxu0 0.0
      %588 = vmatprep.subr.mxu0 0.0
      %589 = vmatpush1.msra.mxu0 0.0
      %590 = vmatprep.subr.mxu0 0.0
      %591 = vmatpush1.msra.mxu0 %v450
      %592 = vmatprep.subr.mxu0 0.0
      %593 = vmatpush1.msra.mxu0 %v449
      %594 = vmatprep.subr.mxu0 0.0
      %595 = vmatpush1.msra.mxu0 %v448
      %596 = vmatprep.subr.mxu0 0.0
      %597 = vmatpush1.msra.mxu0 %v447
      %598 = vmatprep.subr.mxu0 0.0
      %599 = vmatpush2.msra.mxu0 0.0
      %600 = vmatprep.subr.mxu0 0.0
      %601 = vmatpush2.msra.mxu0 0.0
      %602 = vmatprep.subr.mxu0 0.0
      %603 = vmatpush2.msra.mxu0 0.0
      %604 = vmatprep.subr.mxu0 0.0
      %605 = vmatpush2.msra.mxu0 0.0
      %606 = vmatprep.subr.mxu0 0.0
      %607 = vmatpush2.msra.mxu0 0.0
      %608 = vmatprep.subr.mxu0 0.0
      %609 = vmatpush2.msra.mxu0 0.0
      %610 = vmatprep.subr.mxu0 0.0
      %611 = vmatpush2.msra.mxu0 0.0
      %612 = vmatprep.subr.mxu0 0.0
      %613 = vmatpush2.msra.mxu0 0.0
      %614 = vmatprep.subr.mxu0 0.0
      %615 = vmatpush2.msra.mxu0 0.0
      %616 = vmatprep.subr.mxu0 0.0
      %617 = vmatpush2.msra.mxu0 0.0
      %618 = vmatprep.subr.mxu0 0.0
      %619 = vmatpush2.msra.mxu0 0.0
      %620 = vmatprep.subr.mxu0 0.0
      %621 = vmatpush2.msra.mxu0 0.0
      %622 = vmatprep.subr.mxu0 0.0
      %623 = vmatpush2.msra.mxu0 0.0
      %624 = vmatprep.subr.mxu0 0.0
      %625 = vmatpush2.msra.mxu0 0.0
      %626 = vmatprep.subr.mxu0 0.0
      %627 = vmatpush2.msra.mxu0 0.0
      %628 = vmatprep.subr.mxu0 0.0
      %629 = vmatpush2.msra.mxu0 0.0
      %630 = vmatprep.mubr.f32.mxu0 0.0
      %631 = vmatmul.mubr.f32.gmra.mxu0 %v564
      %v632 = vpop.f32.mrf.mxu0
      %v633 = vadd.f32 %v560, %v632
      %v634 = vpop.f32.mrf.mxu0
      %635 = vdwg.mxu0
      %636 = vst [vmem:[%s309] sm:$0xff] %v633
      %s637 = smul.u32 4, %s23
      %p638 = scmp.lt.s32.totalorder %s21, 1
      %s639 = scalar_select %p638, %s21, 1
      %p640 = scmp.lt.s32.totalorder %s637, 3
      %s641 = scalar_select %p640, %s637, 3
      %p642 = scmp.lt.s32.totalorder %s22, 0
      %s643 = scalar_select %p642, %s22, 0
      %s644 = sadd.s32 %s643, %s641
      %s645 = smul.addr %s639, 4
      %s646 = sadd.s32 %s644, %s645
      %s647 = smul.addr %s646, 4
      %s648 = scalar_lea.vmem %s3, %s647
      %p649 = scmp.lt.s32.totalorder %s21, 1
      %s650 = scalar_select %p649, %s21, 1
      %p651 = scmp.lt.s32.totalorder %s23, 0
      %s652 = scalar_select %p651, %s23, 0
      %p653 = scmp.lt.s32.totalorder %s22, 0
      %s654 = scalar_select %p653, %s22, 0
      %s655 = sadd.s32 %s654, %s652
      %s656 = sadd.s32 %s655, %s650
      %s657 = smul.addr %s656, 8
      %s658 = scalar_lea.vmem %s4, %s657
      // Predicated region
      $region33: #{slimmable_tdnn_forward.9} parent=31 // pred_check
        %p659 = pneg %p137
      $region34: #{slimmable_tdnn_forward.9} parent=31 // pred_check_branch
        %661 = sbr.rel (%p659) target = $region36
      $region35: #{slimmable_tdnn_forward.9} parent=31 // pred_region
        %s662 = smul.u32 4, %s23
      $region36: #{slimmable_tdnn_forward.9} parent=31 // pred_fallthru
        _
      // Predicated region
      $region37: #{slimmable_tdnn_forward.9} parent=31 // pred_check
        %p663 = pneg %p167
      $region38: #{slimmable_tdnn_forward.9} parent=31 // pred_check_branch
        %665 = sbr.rel (%p663) target = $region40
      $region39: #{slimmable_tdnn_forward.9} parent=31 // pred_region
        _
      $region40: #{slimmable_tdnn_forward.9} parent=31 // pred_fallthru
        _
    $region32: #{slimmable_tdnn_forward.9} parent=5 // pred_fallthru
      _
    %p666 = scmp.le.s32.totalorder 2, %s11
    // Predicated region
    $region41: #{slimmable_tdnn_forward.9} parent=5 // pred_check
      %p667 = pneg %p666
    $region42: #{slimmable_tdnn_forward.9} parent=5 // pred_check_branch
      %669 = sbr.rel (%p667) target = $region44
    $region43: #{slimmable_tdnn_forward.9} parent=5 // pred_region
      %s670 = ssub.s32 %s11, 2
      // Predicated region
      $region45: #{slimmable_tdnn_forward.9} parent=43 // pred_check
        %p671 = pneg %p143
      $region46: #{slimmable_tdnn_forward.9} parent=43 // pred_check_branch
        %673 = sbr.rel (%p671) target = $region48
      $region47: #{slimmable_tdnn_forward.9} parent=43 // pred_region
        %s674 = smul.u32 4, %s26
        %p675 = scmp.lt.s32.totalorder %s24, 1
        %s676 = scalar_select %p675, %s24, 1
        %p677 = scmp.lt.s32.totalorder %s674, 3
        %s678 = scalar_select %p677, %s674, 3
        %p679 = scmp.lt.s32.totalorder %s25, 0
        %s680 = scalar_select %p679, %s25, 0
        %s681 = sadd.s32 %s680, %s678
        %s682 = smul.addr %s676, 4
        %s683 = sadd.s32 %s681, %s682
        %s684 = smul.addr %s683, 4
        %s685 = scalar_lea.vmem %s3, %s684
      $region48: #{slimmable_tdnn_forward.9} parent=43 // pred_fallthru
        _
      // Predicated region
      $region49: #{slimmable_tdnn_forward.9} parent=43 // pred_check
        %p686 = pneg %p173
      $region50: #{slimmable_tdnn_forward.9} parent=43 // pred_check_branch
        %688 = sbr.rel (%p686) target = $region52
      $region51: #{slimmable_tdnn_forward.9} parent=43 // pred_region
        %p689 = scmp.lt.s32.totalorder %s24, 1
        %s690 = scalar_select %p689, %s24, 1
        %p691 = scmp.lt.s32.totalorder %s26, 0
        %s692 = scalar_select %p691, %s26, 0
        %p693 = scmp.lt.s32.totalorder %s25, 0
        %s694 = scalar_select %p693, %s25, 0
        %s695 = sadd.s32 %s694, %s692
        %s696 = sadd.s32 %s695, %s690
        %s697 = smul.addr %s696, 8
        %s698 = scalar_lea.vmem %s4, %s697
      $region52: #{slimmable_tdnn_forward.9} parent=43 // pred_fallthru
        _
    $region44: #{slimmable_tdnn_forward.9} parent=5 // pred_fallthru
      _
  $region6: #{slimmable_tdnn_forward.9} parent=0 // loop_footer
    %s15 = sadd.s32 1, %s11
  $region7: #{slimmable_tdnn_forward.9} parent=0 // loop_footer_branch
    %10 = sbr.rel target = $region3
  $region8: #{slimmable_tdnn_forward.9} parent=0 // loop_exit
    _

// kernel: slimmable_tdnn_forward.11
$region0: #{slimmable_tdnn_forward.11}
  #allocation0 [shape = 'u32[]', space=smem, size = 0x4, offset = 0x4, fixed_abs, tag = 'smem constant byte address 0x4 - core index']
  #allocation1 [shape = 'u32[144,128]{1,0:T(1,128)}', space=vmem, size = 0x12000, scoped, tag = 'internal scratch']
  %s0 = inlined_call_operand.vmem [shape: bf16[2,32,128], index: 0, kind: input, shape index: {}]
  %s1 = inlined_call_operand.vmem [shape: f32[1,128], index: 1, kind: input, shape index: {}]
  %s2 = inlined_call_operand.vmem [shape: f32[1,128], index: 2, kind: input, shape index: {}]
  %s3 = inlined_call_operand.vmem [shape: bf16[2,32,128], index: 3, kind: output, shape index: {}]
  %s4 = sld [smem:[#allocation0]]
  $region45: #{slimmable_tdnn_forward.11} parent=0
    _
  %s6 = ssub.s32 1, %s4
  %s7 = scalar_select 0, %s6, %s4
  loop: start=0, step=1, limit=4
  $region2: #{slimmable_tdnn_forward.11} parent=0 // loop_pre_header
    _
  $region3: #{slimmable_tdnn_forward.11} parent=0 // loop_header
    %s9 = sphi 0, %s13
    %p10 = scmp.ge.s32.totalorder %s9, 4
    %s16 = sphi 0, %s28
    %s17 = sphi 0, %s24
    %s18 = sphi 0, %s16
    %s19 = sphi 0, %s17
    %s20 = sphi 0, %s18
    %s21 = sphi 0, %s19
    %s33 = sphi 0, %s35
    %s36 = sphi 0, %s33
    %s37 = sphi 0, %s36
    %s53 = sphi 0, %s37
    %s57 = sphi 0, %s57
    %s59 = sphi 0, %s57
    %s60 = sphi 0, %s59
    %s74 = sphi 0, %s60
    %s78 = sphi 0, %s78
    %s80 = sphi 0, %s78
    %s81 = sphi 0, %s80
    %s95 = sphi 0, %s81
    %s103 = sphi 0, %s105
    %s106 = sphi 0, %s103
    %s107 = sphi 0, %s106
    %s123 = sphi 0, %s107
  $region4: #{slimmable_tdnn_forward.11} parent=0 // loop_header_branch
    %12 = sbr.rel (%p10) target = $region8
  $region5: #{slimmable_tdnn_forward.11} parent=0 // loop_body
    %s14 = ssub.s32 %s9, 1
    %s15 = ssub.s32 %s9, 2
    %s22 = sadd.s32 1, %s17
    %p23 = scmp.ge.s32.totalorder %s22, 1
    %s24 = scalar_select %p23, 0, %s22
    %s25 = sadd.s32 1, %s16
    %s26 = scalar_select %p23, %s25, %s16
    %p27 = scmp.ge.s32.totalorder %s26, 2
    %s28 = scalar_select %p27, 0, %s26
    %s29 = ssub.s32 %s16, %s28
    %s30 = ssub.s32 %s17, %s24
    %s31 = sor.u32 %s29, %s30
    %p32 = scmp.eq.s32.totalorder %s31, 0
    %s34 = sadd.s32 %s33, 1
    %s35 = scalar_select %p32, %s33, %s34
    %p38 = pneg %p32
    %p39 = scmp.eq.s32.totalorder %s9, 1
    %p40 = por %p38, %p39
    %p41 = scmp.ne.s32.totalorder %s33, %s36
    %p42 = scmp.eq.s32.totalorder %s9, 0
    %p43 = por %p41, %p42
    %p44 = scmp.ne.s32.totalorder %s33, %s36
    %p45 = scmp.eq.s32.totalorder %s14, 1
    %p46 = por %p44, %p45
    %p47 = scmp.ne.s32.totalorder %s36, %s37
    %p48 = scmp.eq.s32.totalorder %s14, 0
    %p49 = por %p47, %p48
    %p50 = scmp.ne.s32.totalorder %s36, %s37
    %p51 = scmp.eq.s32.totalorder %s15, 1
    %p52 = por %p50, %p51
    %p54 = scmp.ne.s32.totalorder %s37, %s53
    %p55 = scmp.eq.s32.totalorder %s15, 0
    %p56 = por %p54, %p55
    %s58 = sadd.s32 %s57, 1
    %p61 = scmp.eq.s32.totalorder %s9, 1
    %p62 = scmp.ne.s32.totalorder %s57, %s59
    %p63 = scmp.eq.s32.totalorder %s9, 0
    %p64 = por %p62, %p63
    %p65 = scmp.ne.s32.totalorder %s57, %s59
    %p66 = scmp.eq.s32.totalorder %s14, 1
    %p67 = por %p65, %p66
    %p68 = scmp.ne.s32.totalorder %s59, %s60
    %p69 = scmp.eq.s32.totalorder %s14, 0
    %p70 = por %p68, %p69
    %p71 = scmp.ne.s32.totalorder %s59, %s60
    %p72 = scmp.eq.s32.totalorder %s15, 1
    %p73 = por %p71, %p72
    %p75 = scmp.ne.s32.totalorder %s60, %s74
    %p76 = scmp.eq.s32.totalorder %s15, 0
    %p77 = por %p75, %p76
    %s79 = sadd.s32 %s78, 1
    %p82 = scmp.eq.s32.totalorder %s9, 1
    %p83 = scmp.ne.s32.totalorder %s78, %s80
    %p84 = scmp.eq.s32.totalorder %s9, 0
    %p85 = por %p83, %p84
    %p86 = scmp.ne.s32.totalorder %s78, %s80
    %p87 = scmp.eq.s32.totalorder %s14, 1
    %p88 = por %p86, %p87
    %p89 = scmp.ne.s32.totalorder %s80, %s81
    %p90 = scmp.eq.s32.totalorder %s14, 0
    %p91 = por %p89, %p90
    %p92 = scmp.ne.s32.totalorder %s80, %s81
    %p93 = scmp.eq.s32.totalorder %s15, 1
    %p94 = por %p92, %p93
    %p96 = scmp.ne.s32.totalorder %s81, %s95
    %p97 = scmp.eq.s32.totalorder %s15, 0
    %p98 = por %p96, %p97
    %s99 = ssub.s32 %s16, %s28
    %s100 = ssub.s32 %s17, %s24
    %s101 = sor.u32 %s99, %s100
    %p102 = scmp.eq.s32.totalorder %s101, 0
    %s104 = sadd.s32 %s103, 1
    %s105 = scalar_select %p102, %s103, %s104
    %p108 = pneg %p102
    %p109 = scmp.eq.s32.totalorder %s9, 1
    %p110 = por %p108, %p109
    %p111 = scmp.ne.s32.totalorder %s103, %s106
    %p112 = scmp.eq.s32.totalorder %s9, 0
    %p113 = por %p111, %p112
    %p114 = scmp.ne.s32.totalorder %s103, %s106
    %p115 = scmp.eq.s32.totalorder %s14, 1
    %p116 = por %p114, %p115
    %p117 = scmp.ne.s32.totalorder %s106, %s107
    %p118 = scmp.eq.s32.totalorder %s14, 0
    %p119 = por %p117, %p118
    %p120 = scmp.ne.s32.totalorder %s106, %s107
    %p121 = scmp.eq.s32.totalorder %s15, 1
    %p122 = por %p120, %p121
    %p124 = scmp.ne.s32.totalorder %s107, %s123
    %p125 = scmp.eq.s32.totalorder %s15, 0
    %p126 = por %p124, %p125
    %p127 = scmp.le.s32.totalorder 1, %s9
    %p128 = scmp.lt.s32.totalorder %s9, 3
    %p129 = pnand %p127, %p128
    %p130 = pneg %p129
    // Predicated region
    $region9: #{slimmable_tdnn_forward.11} parent=5 // pred_check
      _
    $region10: #{slimmable_tdnn_forward.11} parent=5 // pred_check_branch
      %132 = sbr.rel (%p129) target = $region12
    $region11: #{slimmable_tdnn_forward.11} parent=5 // pred_region
      %s133 = ssub.s32 %s9, 1
      // Predicated region
      $region13: #{slimmable_tdnn_forward.11} parent=11 // pred_check
        %p134 = pneg %p70
      $region14: #{slimmable_tdnn_forward.11} parent=11 // pred_check_branch
        %136 = sbr.rel (%p134) target = $region16
      $region15: #{slimmable_tdnn_forward.11} parent=11 // pred_region
        _
      $region16: #{slimmable_tdnn_forward.11} parent=11 // pred_fallthru
        _
      // Predicated region
      $region17: #{slimmable_tdnn_forward.11} parent=11 // pred_check
        %p137 = pneg %p91
      $region18: #{slimmable_tdnn_forward.11} parent=11 // pred_check_branch
        %139 = sbr.rel (%p137) target = $region20
      $region19: #{slimmable_tdnn_forward.11} parent=11 // pred_region
        _
      $region20: #{slimmable_tdnn_forward.11} parent=11 // pred_fallthru
        _
    $region12: #{slimmable_tdnn_forward.11} parent=5 // pred_fallthru
      _
    %p140 = scmp.lt.s32.totalorder %s9, 2
    // Predicated region
    $region21: #{slimmable_tdnn_forward.11} parent=5 // pred_check
      %p141 = pneg %p140
    $region22: #{slimmable_tdnn_forward.11} parent=5 // pred_check_branch
      %143 = sbr.rel (%p141) target = $region24
    $region23: #{slimmable_tdnn_forward.11} parent=5 // pred_region
      // Predicated region
      $region25: #{slimmable_tdnn_forward.11} parent=23 // pred_check
        %p144 = pneg %p43
      $region26: #{slimmable_tdnn_forward.11} parent=23 // pred_check_branch
        %146 = sbr.rel (%p144) target = $region28
      $region27: #{slimmable_tdnn_forward.11} parent=23 // pred_region
        %s147 = smul.u32 4, %s17
        %p148 = scmp.lt.s32.totalorder %s16, 1
        %s149 = scalar_select %p148, %s16, 1
        %p150 = scmp.lt.s32.totalorder %s147, 3
        %s151 = scalar_select %p150, %s147, 3
        %s152 = smul.addr %s149, 4
        %s153 = sadd.s32 %s151, %s152
        %s154 = smul.addr %s153, 4
        %s155 = scalar_lea.vmem %s0, %s154
        %s156 = smul.u32 4, %s17
      $region28: #{slimmable_tdnn_forward.11} parent=23 // pred_fallthru
        _
    $region24: #{slimmable_tdnn_forward.11} parent=5 // pred_fallthru
      _
    %p157 = scmp.le.s32.totalorder 1, %s9
    %p158 = scmp.lt.s32.totalorder %s9, 3
    %p159 = pnand %p157, %p158
    %p160 = pneg %p159
    // Predicated region
    $region29: #{slimmable_tdnn_forward.11} parent=5 // pred_check
      _
    $region30: #{slimmable_tdnn_forward.11} parent=5 // pred_check_branch
      %162 = sbr.rel (%p159) target = $region32
    $region31: #{slimmable_tdnn_forward.11} parent=5 // pred_region
      %s163 = ssub.s32 %s9, 1
      %s164 = smul.u32 4, %s19
      %p165 = scmp.lt.s32.totalorder %s18, 1
      %s166 = scalar_select %p165, %s18, 1
      %p167 = scmp.lt.s32.totalorder %s164, 3
      %s168 = scalar_select %p167, %s164, 3
      %s169 = smul.addr %s166, 4
      %s170 = sadd.s32 %s168, %s169
      %s171 = smul.addr %s170, 4
      %s172 = scalar_lea.vmem %s0, %s171
      %p173 = pneg %p49
      %p174 = pneg %p46
      %p175 = pneg %p70
      %p176 = pneg %p67
      %p177 = pneg %p91
      %p178 = pneg %p88
      %p179 = pneg %p119
      %p180 = pneg %p116
      %s181 = smul.u32 4, %s19
      %p182 = scmp.lt.s32.totalorder %s18, 1
      %s183 = scalar_select %p182, %s18, 1
      %p184 = scmp.lt.s32.totalorder %s181, 3
      %s185 = scalar_select %p184, %s181, 3
      %s186 = smul.addr %s183, 4
      %s187 = sadd.s32 %s185, %s186
      %s188 = smul.addr %s187, 4
      %s189 = scalar_lea.vmem %s3, %s188
      %s190 = smul.u32 4, %s19
      %p191 = scmp.lt.s32.totalorder %s18, 1
      %s192 = scalar_select %p191, %s18, 1
      %p193 = scmp.lt.s32.totalorder %s190, 3
      %s194 = scalar_select %p193, %s190, 3
      %s195 = smul.addr %s192, 4
      %s196 = sadd.s32 %s194, %s195
      %s197 = smul.addr %s196, 4
      %s198 = scalar_lea.vmem %s0, %s197
      %s199 = smul.u32 4, %s19
      %s200 = smul.u32 4, %s19
      %p201 = scmp.lt.s32.totalorder %s18, 1
      %s202 = scalar_select %p201, %s18, 1
      %p203 = scmp.lt.s32.totalorder %s200, 3
      %s204 = scalar_select %p203, %s200, 3
      %s205 = smul.addr %s202, 4
      %s206 = sadd.s32 %s204, %s205
      %s207 = smul.addr %s206, 4
      %s208 = scalar_lea.vmem %s3, %s207
      %s209 = smul.u32 4, %s19
      %v210 = vld [vmem:[%s198] sm:$0xf]
      %v211 = vld [vmem:[%s198 + $0x4] sm:$0xf]
      %v212 = vld [vmem:[%s198 + $0x8] sm:$0xf]
      %v213 = vld [vmem:[%s198 + $0xc] sm:$0xf]
      %v214 = vunpack.c.l.bf16 %v210
      %v215 = vunpack.c.l.bf16 %v211
      %v216 = vunpack.c.l.bf16 %v212
      %v217 = vunpack.c.l.bf16 %v213
      %v218 = vld [vmem:[%s1] sm:$0x1]
      %v220 = vlaneseq
      %v221 = vshrl.u32 %v220, 7
      %v222 = vsub.s32 0, %v221
      %v223 = vrot.slane %v218, %v222
      %v225 = vmul.f32 %v214, %v223
      %v226 = vmul.f32 %v215, %v223
      %v227 = vmul.f32 %v216, %v223
      %v228 = vmul.f32 %v217, %v223
      %v229 = vld [vmem:[%s2] sm:$0x1]
      %v231 = vlaneseq
      %v232 = vshrl.u32 %v231, 7
      %v233 = vsub.s32 0, %v232
      %v234 = vrot.slane %v229, %v233
      %v236 = vadd.f32 %v225, %v234
      %v237 = vadd.f32 %v226, %v234
      %v238 = vadd.f32 %v227, %v234
      %v239 = vadd.f32 %v228, %v234
      %v240 = vpack.c.bf16 %v237, %v236
      %v241 = vpack.c.bf16 %v239, %v238
      %v244 = vunpack.c.l.b16 %v240
      %v245 = vunpack.c.h.b16 %v240
      %v246 = vunpack.c.l.b16 %v241
      %v247 = vunpack.c.h.b16 %v241
      %v248 = vpack.c.b16 %v244, %v244
      %v249 = vpack.c.b16 %v245, %v245
      %v250 = vpack.c.b16 %v246, %v246
      %v251 = vpack.c.b16 %v247, %v247
      %256 = vst [vmem:[%s208] sm:$0xf] %v248
      %257 = vst [vmem:[%s208 + $0x4] sm:$0xf] %v249
      %258 = vst [vmem:[%s208 + $0x8] sm:$0xf] %v250
      %259 = vst [vmem:[%s208 + $0xc] sm:$0xf] %v251
      %s260 = smul.u32 4, %s19
      %p261 = scmp.lt.s32.totalorder %s18, 1
      %s262 = scalar_select %p261, %s18, 1
      %p263 = scmp.lt.s32.totalorder %s260, 3
      %s264 = scalar_select %p263, %s260, 3
      %s265 = smul.addr %s262, 4
      %s266 = sadd.s32 %s264, %s265
      %s267 = smul.addr %s266, 4
      %s268 = scalar_lea.vmem %s3, %s267
      // Predicated region
      $region33: #{slimmable_tdnn_forward.11} parent=31 // pred_check
        %p269 = pneg %p116
      $region34: #{slimmable_tdnn_forward.11} parent=31 // pred_check_branch
        %271 = sbr.rel (%p269) target = $region36
      $region35: #{slimmable_tdnn_forward.11} parent=31 // pred_region
        %s272 = smul.u32 4, %s19
      $region36: #{slimmable_tdnn_forward.11} parent=31 // pred_fallthru
        _
    $region32: #{slimmable_tdnn_forward.11} parent=5 // pred_fallthru
      _
    %p273 = scmp.le.s32.totalorder 2, %s9
    // Predicated region
    $region37: #{slimmable_tdnn_forward.11} parent=5 // pred_check
      %p274 = pneg %p273
    $region38: #{slimmable_tdnn_forward.11} parent=5 // pred_check_branch
      %276 = sbr.rel (%p274) target = $region40
    $region39: #{slimmable_tdnn_forward.11} parent=5 // pred_region
      %s277 = ssub.s32 %s9, 2
      // Predicated region
      $region41: #{slimmable_tdnn_forward.11} parent=39 // pred_check
        %p278 = pneg %p122
      $region42: #{slimmable_tdnn_forward.11} parent=39 // pred_check_branch
        %280 = sbr.rel (%p278) target = $region44
      $region43: #{slimmable_tdnn_forward.11} parent=39 // pred_region
        %s281 = smul.u32 4, %s21
        %p282 = scmp.lt.s32.totalorder %s20, 1
        %s283 = scalar_select %p282, %s20, 1
        %p284 = scmp.lt.s32.totalorder %s281, 3
        %s285 = scalar_select %p284, %s281, 3
        %s286 = smul.addr %s283, 4
        %s287 = sadd.s32 %s285, %s286
        %s288 = smul.addr %s287, 4
        %s289 = scalar_lea.vmem %s3, %s288
      $region44: #{slimmable_tdnn_forward.11} parent=39 // pred_fallthru
        _
    $region40: #{slimmable_tdnn_forward.11} parent=5 // pred_fallthru
      _
  $region6: #{slimmable_tdnn_forward.11} parent=0 // loop_footer
    %s13 = sadd.s32 1, %s9
  $region7: #{slimmable_tdnn_forward.11} parent=0 // loop_footer_branch
    %8 = sbr.rel target = $region3
  $region8: #{slimmable_tdnn_forward.11} parent=0 // loop_exit
    _

</llo_original>
